<compile_context>
chip_gen: v7x
topology: tpu7x:2x2x1
jax: 0.10.0
libtpu: 0.0.40
codegen_flags: <defaults>
</compile_context>

<pallas_src>
import functools

import jax
import jax.numpy as jnp
from jax.experimental import pallas as pl
from jax.experimental.pallas import tpu as pltpu


LN_EPS = 1e-5  # PyTorch nn.LayerNorm default


def _layernorm_relu(h, gamma, beta):
    """Fused LayerNorm (two-pass biased variance, PyTorch semantics) + ReLU."""
    mu = jnp.mean(h, axis=-1, keepdims=True)
    d = h - mu
    var = jnp.mean(d * d, axis=-1, keepdims=True)
    inv = jax.lax.rsqrt(var + LN_EPS)          # EUP slot
    return jnp.maximum(d * inv * gamma + beta, 0.0)


def mlp_kernel(x_ref, w1_ref, w2_ref, w3_ref, vec_ref, o_ref,
               *, hid: int, out_pad: int, final_sigmoid: bool):
    # Unpack the single (8, vec_pad) f32 vector slab (static, zero-cost slices).
    vec = vec_ref[...]
    b1, g1, be1 = vec[0:1, :hid], vec[1:2, :hid], vec[2:3, :hid]
    b2, g2, be2 = vec[3:4, :hid], vec[4:5, :hid], vec[5:6, :hid]
    b3 = vec[6:7, :out_pad]

    # Layer 1: Linear (bf16 MXU inputs, f32 accumulate) -> LayerNorm -> ReLU.
    h = jnp.dot(x_ref[...], w1_ref[...],
                preferred_element_type=jnp.float32) + b1
    h = _layernorm_relu(h, g1, be1)

    # Layer 2: Linear -> LayerNorm -> ReLU.
    h = jnp.dot(h.astype(jnp.bfloat16), w2_ref[...],
                preferred_element_type=jnp.float32) + b2
    h = _layernorm_relu(h, g2, be2)

    # Final layer: Linear (output padded to 128 lanes) (-> Sigmoid).
    h = jnp.dot(h.astype(jnp.bfloat16), w3_ref[...],
                preferred_element_type=jnp.float32) + b3
    if final_sigmoid:
        # Padded columns get sigmoid(0)=0.5; the wrapper slices them off.
        h = jax.nn.sigmoid(h)

    # Lane-dense, unmasked store of the full (tile_b, out_pad) tile.
    o_ref[...] = h.astype(o_ref.dtype)


def _tensorcores_per_chip() -> int:
    """v7x is the only targeted generation with 2 TensorCores per chip."""
    try:
        kind = jax.devices()[0].device_kind.lower()
    except Exception:
        return 1
    return 2 if ("v7" in kind or "7x" in kind) else 1


def prepare_params(params):
    """One-time (per parameter set) preparation: bf16 weights, w3 padded to a
    multiple of 128 output lanes, and all (1, D) vectors packed into one
    (8, vec_pad) f32 slab. Do NOT call this per forward."""
    in_dim, hid = params["w1"].shape
    out_dim = params["w3"].shape[1]
    out_pad = pl.cdiv(out_dim, 128) * 128
    vec_pad = max(pl.cdiv(hid, 128) * 128, out_pad)

    w3 = params["w3"]
    if out_pad != out_dim:
        w3 = jnp.pad(w3, ((0, 0), (0, out_pad - out_dim)))

    def row(v):
        v = v.reshape(1, -1).astype(jnp.float32)
        return jnp.pad(v, ((0, 0), (0, vec_pad - v.shape[1])))

    vec = jnp.concatenate(
        [row(params["b1"]), row(params["g1"]), row(params["be1"]),
         row(params["b2"]), row(params["g2"]), row(params["be2"]),
         row(params["b3"]),
         jnp.zeros((1, vec_pad), jnp.float32)],   # pad to 8 sublanes
        axis=0)

    return {
        "w1": params["w1"].astype(jnp.bfloat16),
        "w2": params["w2"].astype(jnp.bfloat16),
        "w3": w3.astype(jnp.bfloat16),
        "vec": vec,
        "in_dim": in_dim, "hid": hid,
        "out_dim": out_dim, "out_pad": out_pad,
    }


def mlp_forward(x, prep, *, final_sigmoid=True, tile_b=None):
    """x: [B, input_dim]. prep: output of prepare_params()."""
    B = x.shape[0]
    in_dim, hid = prep["in_dim"], prep["hid"]
    out_dim, out_pad = prep["out_dim"], prep["out_pad"]

    # Halve the only per-tile streamed input DMA; kernel needs bf16 anyway.
    x_bf16 = x.astype(jnp.bfloat16)

    # --- generation-aware batch tiling --------------------------------------
    n_cores = _tensorcores_per_chip()
    if tile_b is None:
        tile_b = pl.cdiv(B, n_cores)           # 1 tile per TensorCore
    tile_b = min(tile_b, B)

    # Cap tile_b so double-buffered x/out + f32 activations stay well under
    # the 32 MiB scoped-VMEM default (matters on v7x for large B).
    row_bytes = 2 * (in_dim * 2 + out_pad * 4) + (2 * hid + out_pad) * 4
    max_rows = max(8, ((24 << 20) // max(row_bytes, 1)) // 8 * 8)
    tile_b = min(tile_b, max_rows)

    if tile_b != B:
        tile_b = max(8, (tile_b // 8) * 8)     # sublane alignment when tiling

    # --- specs ---------------------------------------------------------------
    def row_spec(d):
        return pl.BlockSpec((tile_b, d), lambda i: (i, 0))

    def full_spec(a):
        # Constant block index across the grid -> fetched once, never re-DMA'd.
        return pl.BlockSpec(a.shape, lambda i: (0,) * a.ndim)

    args = (x_bf16, prep["w1"], prep["w2"], prep["w3"], prep["vec"])
    in_specs = [row_spec(in_dim)] + [full_spec(a) for a in args[1:]]

    # Advisory cost estimate for XLA scheduling around the custom call.
    flops = 2 * B * (in_dim * hid + hid * hid + hid * out_pad)
    transcendentals = B * ((out_pad if final_sigmoid else 0) + 2)
    bytes_accessed = (x_bf16.size * 2 + B * out_pad * 4
                      + sum(int(a.size) * a.dtype.itemsize for a in args[1:]))

    kernel = functools.partial(mlp_kernel, hid=hid, out_pad=out_pad,
                               final_sigmoid=final_sigmoid)

    out = pl.pallas_call(
        kernel,
        out_shape=jax.ShapeDtypeStruct((B, out_pad), jnp.float32),
        grid_spec=pltpu.PrefetchScalarGridSpec(
            num_scalar_prefetch=0,
            grid=(pl.cdiv(B, tile_b),),
            in_specs=in_specs,
            out_specs=row_spec(out_pad),
        ),
        compiler_params=pltpu.CompilerParams(
            dimension_semantics=("parallel",)),
        cost_estimate=pl.CostEstimate(
            flops=int(flops),
            transcendentals=int(transcendentals),
            bytes_accessed=int(bytes_accessed)),
    )(*args)

    # Padded sigmoid columns (0.5) are discarded here and never read elsewhere.
    return out[:, :out_dim] if out_pad != out_dim else out


def init_params(key, input_dim, hidden_dim, output_dim):
    """Deterministic init mimicking PyTorch Linear (uniform +-1/sqrt(fan_in))
    and LayerNorm (gamma=1, beta=0). Weights stored as [D_in, D_out], f32."""
    ks = jax.random.split(key, 6)

    def lin(kw, kb, din, dout):
        bound = 1.0 / jnp.sqrt(din)
        w = jax.random.uniform(kw, (din, dout), jnp.float32, -bound, bound)
        b = jax.random.uniform(kb, (1, dout), jnp.float32, -bound, bound)
        return w, b

    w1, b1 = lin(ks[0], ks[1], input_dim, hidden_dim)
    w2, b2 = lin(ks[2], ks[3], hidden_dim, hidden_dim)
    w3, b3 = lin(ks[4], ks[5], hidden_dim, output_dim)
    return {
        "w1": w1, "b1": b1,
        "g1": jnp.ones((1, hidden_dim), jnp.float32),
        "be1": jnp.zeros((1, hidden_dim), jnp.float32),
        "w2": w2, "b2": b2,
        "g2": jnp.ones((1, hidden_dim), jnp.float32),
        "be2": jnp.zeros((1, hidden_dim), jnp.float32),
        "w3": w3, "b3": b3,
    }


def mlp_reference_bf16(x, p, *, final_sigmoid=True):
    """Pure-JAX reference mirroring the kernel's bf16-matmul / f32-accum path."""
    def dot(a, w):
        return jnp.dot(a.astype(jnp.bfloat16), w.astype(jnp.bfloat16),
                       preferred_element_type=jnp.float32)
    h = dot(x, p["w1"]) + p["b1"]
    h = _layernorm_relu(h, p["g1"], p["be1"])
    h = dot(h, p["w2"]) + p["b2"]
    h = _layernorm_relu(h, p["g2"], p["be2"])
    h = dot(h, p["w3"]) + p["b3"]
    return jax.nn.sigmoid(h) if final_sigmoid else h


def mlp_reference_f32(x, p, *, final_sigmoid=True):
    """Full-f32 reference replicating the PyTorch forward exactly."""
    def ln(h, g, b):
        mu = jnp.mean(h, axis=-1, keepdims=True)
        var = jnp.mean((h - mu) ** 2, axis=-1, keepdims=True)
        return (h - mu) * jax.lax.rsqrt(var + LN_EPS) * g + b
    h = x @ p["w1"] + p["b1"]
    h = jnp.maximum(ln(h, p["g1"], p["be1"]), 0.0)
    h = h @ p["w2"] + p["b2"]
    h = jnp.maximum(ln(h, p["g2"], p["be2"]), 0.0)
    h = h @ p["w3"] + p["b3"]
    return jax.nn.sigmoid(h) if final_sigmoid else h


if __name__ == "__main__":
    # Mlp(input_dim=32, output_dim=16, hidden_dim=64, num_layers=2,
    #     final_sigmoid=True); batch 512 so dual-TC v7x gets 2 parallel tiles.
    B, INPUT_DIM, HIDDEN_DIM, OUTPUT_DIM = 512, 32, 64, 16

    key = jax.random.PRNGKey(0)
    kx, kp = jax.random.split(key)
    x = jax.random.normal(kx, (B, INPUT_DIM), jnp.float32)
    params = init_params(kp, INPUT_DIM, HIDDEN_DIM, OUTPUT_DIM)

    # One-time weight preparation (bf16 cast, w3 padding, vector packing).
    prep = jax.tree_util.tree_map(jax.block_until_ready, prepare_params(params))

    out = mlp_forward(x, prep, final_sigmoid=True)
    out = jax.block_until_ready(out)
    assert out.shape == (B, OUTPUT_DIM)

    ref_bf16 = mlp_reference_bf16(x, params, final_sigmoid=True)
    ref_f32 = mlp_reference_f32(x, params, final_sigmoid=True)
    assert jnp.allclose(out, ref_bf16, atol=1e-3, rtol=1e-3), \
        "mismatch vs bf16-matmul reference"
    assert jnp.allclose(out, ref_f32, atol=2e-2, rtol=2e-2), \
        "mismatch vs f32 reference"

    print("KERNEL_OK")
</pallas_src>

<mosaic_0001>
module attributes {stable_mosaic.version = 11 : i64} {
  func.func @mlp_kernel(%arg0: i32, %arg1: memref<512x32xbf16, #tpu.memory_space<vmem>>, %arg2: memref<32x64xbf16, #tpu.memory_space<vmem>>, %arg3: memref<64x64xbf16, #tpu.memory_space<vmem>>, %arg4: memref<64x128xbf16, #tpu.memory_space<vmem>>, %arg5: memref<8x128xf32, #tpu.memory_space<vmem>>, %arg6: memref<512x128xf32, #tpu.memory_space<vmem>>) attributes {dimension_semantics = [#tpu.dimension_semantics<parallel>], iteration_bounds = array<i64: 1>, scalar_prefetch = 0 : i64, scratch_operands = 0 : i64, tpu.core_type = #tpu.core_type<tc>, window_params = [{transform_indices = @transform_0, window_bounds = array<i64: 512, 32>}, {pipeline_mode = #tpu.pipeline_mode<synchronous>, transform_indices = @transform_1, window_bounds = array<i64: 32, 64>}, {pipeline_mode = #tpu.pipeline_mode<synchronous>, transform_indices = @transform_2, window_bounds = array<i64: 64, 64>}, {pipeline_mode = #tpu.pipeline_mode<synchronous>, transform_indices = @transform_3, window_bounds = array<i64: 64, 128>}, {pipeline_mode = #tpu.pipeline_mode<synchronous>, transform_indices = @transform_4, window_bounds = array<i64: 8, 128>}, {transform_indices = @transform_5, window_bounds = array<i64: 512, 128>}]} {
    %c0 = arith.constant 0 : index
    %c0_0 = arith.constant 0 : index
    %0 = vector.load %arg5[%c0, %c0_0] : memref<8x128xf32, #tpu.memory_space<vmem>>, vector<8x128xf32>
    %1 = vector.extract_strided_slice %0 {offsets = [0, 0], sizes = [1, 64], strides = [1, 1]} : vector<8x128xf32> to vector<1x64xf32>
    %2 = vector.extract_strided_slice %0 {offsets = [1, 0], sizes = [1, 64], strides = [1, 1]} : vector<8x128xf32> to vector<1x64xf32>
    %3 = vector.extract_strided_slice %0 {offsets = [2, 0], sizes = [1, 64], strides = [1, 1]} : vector<8x128xf32> to vector<1x64xf32>
    %4 = vector.extract_strided_slice %0 {offsets = [3, 0], sizes = [1, 64], strides = [1, 1]} : vector<8x128xf32> to vector<1x64xf32>
    %5 = vector.extract_strided_slice %0 {offsets = [4, 0], sizes = [1, 64], strides = [1, 1]} : vector<8x128xf32> to vector<1x64xf32>
    %6 = vector.extract_strided_slice %0 {offsets = [5, 0], sizes = [1, 64], strides = [1, 1]} : vector<8x128xf32> to vector<1x64xf32>
    %7 = vector.extract_strided_slice %0 {offsets = [6, 0], sizes = [1, 128], strides = [1, 1]} : vector<8x128xf32> to vector<1x128xf32>
    %c0_1 = arith.constant 0 : index
    %c0_2 = arith.constant 0 : index
    %8 = vector.load %arg1[%c0_1, %c0_2] : memref<512x32xbf16, #tpu.memory_space<vmem>>, vector<512x32xbf16>
    %c0_3 = arith.constant 0 : index
    %c0_4 = arith.constant 0 : index
    %9 = vector.load %arg2[%c0_3, %c0_4] : memref<32x64xbf16, #tpu.memory_space<vmem>>, vector<32x64xbf16>
    %cst = arith.constant dense<0.000000e+00> : vector<512x64xf32>
    %10 = tpu.matmul %8, %9, %cst {dimension_numbers = #tpu.dot_dimension_numbers<[1], [0], [0], [1], [0, 0, 1, 1], [], []>} : vector<512x32xbf16>, vector<32x64xbf16>, vector<512x64xf32> -> vector<512x64xf32>
    %11 = vector.broadcast %1 : vector<1x64xf32> to vector<512x64xf32>
    %12 = arith.addf %10, %11 : vector<512x64xf32>
    %cst_5 = arith.constant dense<0.000000e+00> : vector<512xf32>
    %13 = vector.multi_reduction <add>, %12, %cst_5 [1] : vector<512x64xf32> to vector<512xf32>
    %14 = vector.shape_cast %13 : vector<512xf32> to vector<512x1xf32>
    %cst_6 = arith.constant 6.400000e+01 : f32
    %15 = vector.broadcast %cst_6 : f32 to vector<512x1xf32>
    %16 = arith.divf %14, %15 : vector<512x1xf32>
    %17 = vector.broadcast %16 : vector<512x1xf32> to vector<512x64xf32>
    %18 = arith.subf %12, %17 : vector<512x64xf32>
    %19 = arith.mulf %18, %18 : vector<512x64xf32>
    %cst_7 = arith.constant dense<0.000000e+00> : vector<512xf32>
    %20 = vector.multi_reduction <add>, %19, %cst_7 [1] : vector<512x64xf32> to vector<512xf32>
    %21 = vector.shape_cast %20 : vector<512xf32> to vector<512x1xf32>
    %cst_8 = arith.constant 6.400000e+01 : f32
    %22 = vector.broadcast %cst_8 : f32 to vector<512x1xf32>
    %23 = arith.divf %21, %22 : vector<512x1xf32>
    %cst_9 = arith.constant 9.99999974E-6 : f32
    %24 = vector.broadcast %cst_9 : f32 to vector<512x1xf32>
    %25 = arith.addf %23, %24 : vector<512x1xf32>
    %26 = math.rsqrt %25 : vector<512x1xf32>
    %27 = vector.broadcast %26 : vector<512x1xf32> to vector<512x64xf32>
    %28 = arith.mulf %18, %27 : vector<512x64xf32>
    %29 = vector.broadcast %2 : vector<1x64xf32> to vector<512x64xf32>
    %30 = arith.mulf %28, %29 : vector<512x64xf32>
    %31 = vector.broadcast %3 : vector<1x64xf32> to vector<512x64xf32>
    %32 = arith.addf %30, %31 : vector<512x64xf32>
    %cst_10 = arith.constant 0.000000e+00 : f32
    %33 = vector.broadcast %cst_10 : f32 to vector<512x64xf32>
    %34 = arith.maximumf %32, %33 : vector<512x64xf32>
    %35 = arith.truncf %34 : vector<512x64xf32> to vector<512x64xbf16>
    %c0_11 = arith.constant 0 : index
    %c0_12 = arith.constant 0 : index
    %36 = vector.load %arg3[%c0_11, %c0_12] : memref<64x64xbf16, #tpu.memory_space<vmem>>, vector<64x64xbf16>
    %cst_13 = arith.constant dense<0.000000e+00> : vector<512x64xf32>
    %37 = tpu.matmul %35, %36, %cst_13 {dimension_numbers = #tpu.dot_dimension_numbers<[1], [0], [0], [1], [0, 0, 1, 1], [], []>} : vector<512x64xbf16>, vector<64x64xbf16>, vector<512x64xf32> -> vector<512x64xf32>
    %38 = vector.broadcast %4 : vector<1x64xf32> to vector<512x64xf32>
    %39 = arith.addf %37, %38 : vector<512x64xf32>
    %cst_14 = arith.constant dense<0.000000e+00> : vector<512xf32>
    %40 = vector.multi_reduction <add>, %39, %cst_14 [1] : vector<512x64xf32> to vector<512xf32>
    %41 = vector.shape_cast %40 : vector<512xf32> to vector<512x1xf32>
    %cst_15 = arith.constant 6.400000e+01 : f32
    %42 = vector.broadcast %cst_15 : f32 to vector<512x1xf32>
    %43 = arith.divf %41, %42 : vector<512x1xf32>
    %44 = vector.broadcast %43 : vector<512x1xf32> to vector<512x64xf32>
    %45 = arith.subf %39, %44 : vector<512x64xf32>
    %46 = arith.mulf %45, %45 : vector<512x64xf32>
    %cst_16 = arith.constant dense<0.000000e+00> : vector<512xf32>
    %47 = vector.multi_reduction <add>, %46, %cst_16 [1] : vector<512x64xf32> to vector<512xf32>
    %48 = vector.shape_cast %47 : vector<512xf32> to vector<512x1xf32>
    %cst_17 = arith.constant 6.400000e+01 : f32
    %49 = vector.broadcast %cst_17 : f32 to vector<512x1xf32>
    %50 = arith.divf %48, %49 : vector<512x1xf32>
    %cst_18 = arith.constant 9.99999974E-6 : f32
    %51 = vector.broadcast %cst_18 : f32 to vector<512x1xf32>
    %52 = arith.addf %50, %51 : vector<512x1xf32>
    %53 = math.rsqrt %52 : vector<512x1xf32>
    %54 = vector.broadcast %53 : vector<512x1xf32> to vector<512x64xf32>
    %55 = arith.mulf %45, %54 : vector<512x64xf32>
    %56 = vector.broadcast %5 : vector<1x64xf32> to vector<512x64xf32>
    %57 = arith.mulf %55, %56 : vector<512x64xf32>
    %58 = vector.broadcast %6 : vector<1x64xf32> to vector<512x64xf32>
    %59 = arith.addf %57, %58 : vector<512x64xf32>
    %cst_19 = arith.constant 0.000000e+00 : f32
    %60 = vector.broadcast %cst_19 : f32 to vector<512x64xf32>
    %61 = arith.maximumf %59, %60 : vector<512x64xf32>
    %62 = arith.truncf %61 : vector<512x64xf32> to vector<512x64xbf16>
    %c0_20 = arith.constant 0 : index
    %c0_21 = arith.constant 0 : index
    %63 = vector.load %arg4[%c0_20, %c0_21] : memref<64x128xbf16, #tpu.memory_space<vmem>>, vector<64x128xbf16>
    %cst_22 = arith.constant dense<0.000000e+00> : vector<512x128xf32>
    %64 = tpu.matmul %62, %63, %cst_22 {dimension_numbers = #tpu.dot_dimension_numbers<[1], [0], [0], [1], [0, 0, 1, 1], [], []>} : vector<512x64xbf16>, vector<64x128xbf16>, vector<512x128xf32> -> vector<512x128xf32>
    %65 = vector.broadcast %7 : vector<1x128xf32> to vector<512x128xf32>
    %66 = arith.addf %64, %65 : vector<512x128xf32>
    %67 = arith.negf %66 : vector<512x128xf32>
    %68 = math.exp %67 : vector<512x128xf32>
    %cst_23 = arith.constant 1.000000e+00 : f32
    %69 = vector.broadcast %cst_23 : f32 to vector<512x128xf32>
    %70 = arith.addf %69, %68 : vector<512x128xf32>
    %71 = arith.divf %69, %70 : vector<512x128xf32>
    %c0_24 = arith.constant 0 : index
    %c0_25 = arith.constant 0 : index
    %72 = vector.load %arg6[%c0_24, %c0_25] : memref<512x128xf32, #tpu.memory_space<vmem>>, vector<512x128xf32>
    tpu.vector_store %arg6[%c0_24, %c0_25], %71 {strides = array<i32>} : memref<512x128xf32, #tpu.memory_space<vmem>>, vector<512x128xf32>,
    return
  }
  func.func @transform_0(%arg0: i32) -> (i32, i32) {
    %c0_i32 = arith.constant 0 : i32
    %c0_i32_0 = arith.constant 0 : i32
    return %arg0, %c0_i32 : i32, i32
  }
  func.func @transform_1(%arg0: i32) -> (i32, i32) {
    %c0_i32 = arith.constant 0 : i32
    %c0_i32_0 = arith.constant 0 : i32
    %c0_i32_1 = arith.constant 0 : i32
    return %c0_i32, %c0_i32_0 : i32, i32
  }
  func.func @transform_2(%arg0: i32) -> (i32, i32) {
    %c0_i32 = arith.constant 0 : i32
    %c0_i32_0 = arith.constant 0 : i32
    %c0_i32_1 = arith.constant 0 : i32
    return %c0_i32, %c0_i32_0 : i32, i32
  }
  func.func @transform_3(%arg0: i32) -> (i32, i32) {
    %c0_i32 = arith.constant 0 : i32
    %c0_i32_0 = arith.constant 0 : i32
    %c0_i32_1 = arith.constant 0 : i32
    return %c0_i32, %c0_i32_0 : i32, i32
  }
  func.func @transform_4(%arg0: i32) -> (i32, i32) {
    %c0_i32 = arith.constant 0 : i32
    %c0_i32_0 = arith.constant 0 : i32
    %c0_i32_1 = arith.constant 0 : i32
    return %c0_i32, %c0_i32_0 : i32, i32
  }
  func.func @transform_5(%arg0: i32) -> (i32, i32) {
    %c0_i32 = arith.constant 0 : i32
    %c0_i32_0 = arith.constant 0 : i32
    return %arg0, %c0_i32 : i32, i32
  }
}

</mosaic_0001>

<llo_original>
// kernel: tpu_custom_call.1
$region0: #{tpu_custom_call.1}
  #allocation0 [shape = 'u32[]', space=smem, size = 0x4, offset = 0x4, fixed_abs, tag = 'smem constant byte address 0x4 - core index']
  #allocation1 [shape = 'u32[144,128]{1,0:T(1,128)}', space=vmem, size = 0x12000, scoped, tag = 'internal scratch']
  %s0 = inlined_call_operand.vmem [shape: bf16[512,32], index: 0, kind: input, shape index: {}]
  %s1 = inlined_call_operand.vmem [shape: bf16[32,64], index: 1, kind: input, shape index: {}]
  %s2 = inlined_call_operand.vmem [shape: bf16[64,64], index: 2, kind: input, shape index: {}]
  %s3 = inlined_call_operand.vmem [shape: bf16[64,128], index: 3, kind: input, shape index: {}]
  %s4 = inlined_call_operand.vmem [shape: f32[8,128], index: 4, kind: input, shape index: {}]
  %s5 = inlined_call_operand.hbm [shape: f32[512,128], index: 5, kind: output, shape index: {}]
  %s6 = sld [smem:[#allocation0]]
  $region30: #{tpu_custom_call.1} parent=0
    _
  %s8 = ssub.s32 1, %s6
  %s9 = scalar_select 0, %s8, %s6
  $region1: #{tpu_custom_call.1} parent=0
    #allocation2 [shape = 'u8[262144]{0}', space=vmem, size = 0x40000, scoped, tag = 'output window, operand 0, single buffered']
    #allocation3 [shape = 's32[1]{0}', space=sflag, size = 0x4, scoped, tag = 'scoped memory for tpu_custom_call.1']
    %10 = vsyncpa [#allocation3], 0
    // Predicated region
    $region2: #{tpu_custom_call.1} parent=1 // pred_check
      _
    $region3: #{tpu_custom_call.1} parent=1 // pred_check_branch
      %12 = sbr.rel (0) target = $region5
    $region4: #{tpu_custom_call.1} parent=1 // pred_region
      _
    $region5: #{tpu_custom_call.1} parent=1 // pred_fallthru
      _
    // Predicated region
    $region6: #{tpu_custom_call.1} parent=1 // pred_check
      _
    $region7: #{tpu_custom_call.1} parent=1 // pred_check_branch
      %14 = sbr.rel (0) target = $region9
    $region8: #{tpu_custom_call.1} parent=1 // pred_region
      _
    $region9: #{tpu_custom_call.1} parent=1 // pred_fallthru
      _
    // Predicated region
    $region10: #{tpu_custom_call.1} parent=1 // pred_check
      _
    $region11: #{tpu_custom_call.1} parent=1 // pred_check_branch
      %16 = sbr.rel (0) target = $region13
    $region12: #{tpu_custom_call.1} parent=1 // pred_region
      _
    $region13: #{tpu_custom_call.1} parent=1 // pred_fallthru
      _
    // Predicated region
    $region14: #{tpu_custom_call.1} parent=1 // pred_check
      _
    $region15: #{tpu_custom_call.1} parent=1 // pred_check_branch
      %18 = sbr.rel (0) target = $region17
    $region16: #{tpu_custom_call.1} parent=1 // pred_region
      _
    $region17: #{tpu_custom_call.1} parent=1 // pred_fallthru
      _
    // Predicated region
    $region18: #{tpu_custom_call.1} parent=1 // pred_check
      _
    $region19: #{tpu_custom_call.1} parent=1 // pred_check_branch
      %20 = sbr.rel (0) target = $region21
    $region20: #{tpu_custom_call.1} parent=1 // pred_region
      _
    $region21: #{tpu_custom_call.1} parent=1 // pred_fallthru
      _
    %v22 = vld [vmem:[%s4] sm:$0xff]
    %v23 = vld [vmem:[%s0] sm:$0xf]
    %v24 = vld [vmem:[%s0 + $0x4] sm:$0xf]
    %v25 = vld [vmem:[%s0 + $0x8] sm:$0xf]
    %v26 = vld [vmem:[%s0 + $0xc] sm:$0xf]
    %v27 = vld [vmem:[%s0 + $0x10] sm:$0xf]
    %v28 = vld [vmem:[%s0 + $0x14] sm:$0xf]
    %v29 = vld [vmem:[%s0 + $0x18] sm:$0xf]
    %v30 = vld [vmem:[%s0 + $0x1c] sm:$0xf]
    %v31 = vld [vmem:[%s0 + $0x20] sm:$0xf]
    %v32 = vld [vmem:[%s0 + $0x24] sm:$0xf]
    %v33 = vld [vmem:[%s0 + $0x28] sm:$0xf]
    %v34 = vld [vmem:[%s0 + $0x2c] sm:$0xf]
    %v35 = vld [vmem:[%s0 + $0x30] sm:$0xf]
    %v36 = vld [vmem:[%s0 + $0x34] sm:$0xf]
    %v37 = vld [vmem:[%s0 + $0x38] sm:$0xf]
    %v38 = vld [vmem:[%s0 + $0x3c] sm:$0xf]
    %v39 = vld [vmem:[%s0 + $0x40] sm:$0xf]
    %v40 = vld [vmem:[%s0 + $0x44] sm:$0xf]
    %v41 = vld [vmem:[%s0 + $0x48] sm:$0xf]
    %v42 = vld [vmem:[%s0 + $0x4c] sm:$0xf]
    %v43 = vld [vmem:[%s0 + $0x50] sm:$0xf]
    %v44 = vld [vmem:[%s0 + $0x54] sm:$0xf]
    %v45 = vld [vmem:[%s0 + $0x58] sm:$0xf]
    %v46 = vld [vmem:[%s0 + $0x5c] sm:$0xf]
    %v47 = vld [vmem:[%s0 + $0x60] sm:$0xf]
    %v48 = vld [vmem:[%s0 + $0x64] sm:$0xf]
    %v49 = vld [vmem:[%s0 + $0x68] sm:$0xf]
    %v50 = vld [vmem:[%s0 + $0x6c] sm:$0xf]
    %v51 = vld [vmem:[%s0 + $0x70] sm:$0xf]
    %v52 = vld [vmem:[%s0 + $0x74] sm:$0xf]
    %v53 = vld [vmem:[%s0 + $0x78] sm:$0xf]
    %v54 = vld [vmem:[%s0 + $0x7c] sm:$0xf]
    %v55 = vld [vmem:[%s0 + $0x80] sm:$0xf]
    %v56 = vld [vmem:[%s0 + $0x84] sm:$0xf]
    %v57 = vld [vmem:[%s0 + $0x88] sm:$0xf]
    %v58 = vld [vmem:[%s0 + $0x8c] sm:$0xf]
    %v59 = vld [vmem:[%s0 + $0x90] sm:$0xf]
    %v60 = vld [vmem:[%s0 + $0x94] sm:$0xf]
    %v61 = vld [vmem:[%s0 + $0x98] sm:$0xf]
    %v62 = vld [vmem:[%s0 + $0x9c] sm:$0xf]
    %v63 = vld [vmem:[%s0 + $0xa0] sm:$0xf]
    %v64 = vld [vmem:[%s0 + $0xa4] sm:$0xf]
    %v65 = vld [vmem:[%s0 + $0xa8] sm:$0xf]
    %v66 = vld [vmem:[%s0 + $0xac] sm:$0xf]
    %v67 = vld [vmem:[%s0 + $0xb0] sm:$0xf]
    %v68 = vld [vmem:[%s0 + $0xb4] sm:$0xf]
    %v69 = vld [vmem:[%s0 + $0xb8] sm:$0xf]
    %v70 = vld [vmem:[%s0 + $0xbc] sm:$0xf]
    %v71 = vld [vmem:[%s0 + $0xc0] sm:$0xf]
    %v72 = vld [vmem:[%s0 + $0xc4] sm:$0xf]
    %v73 = vld [vmem:[%s0 + $0xc8] sm:$0xf]
    %v74 = vld [vmem:[%s0 + $0xcc] sm:$0xf]
    %v75 = vld [vmem:[%s0 + $0xd0] sm:$0xf]
    %v76 = vld [vmem:[%s0 + $0xd4] sm:$0xf]
    %v77 = vld [vmem:[%s0 + $0xd8] sm:$0xf]
    %v78 = vld [vmem:[%s0 + $0xdc] sm:$0xf]
    %v79 = vld [vmem:[%s0 + $0xe0] sm:$0xf]
    %v80 = vld [vmem:[%s0 + $0xe4] sm:$0xf]
    %v81 = vld [vmem:[%s0 + $0xe8] sm:$0xf]
    %v82 = vld [vmem:[%s0 + $0xec] sm:$0xf]
    %v83 = vld [vmem:[%s0 + $0xf0] sm:$0xf]
    %v84 = vld [vmem:[%s0 + $0xf4] sm:$0xf]
    %v85 = vld [vmem:[%s0 + $0xf8] sm:$0xf]
    %v86 = vld [vmem:[%s0 + $0xfc] sm:$0xf]
    %v87 = vld [vmem:[%s1] sm:$0xf]
    %v88 = vld [vmem:[%s1 + $0x4] sm:$0xf]
    %v89 = vld [vmem:[%s1 + $0x8] sm:$0xf]
    %v90 = vld [vmem:[%s1 + $0xc] sm:$0xf]
    %v91 = vlaneseq
    %v92 = vshrl.u32 %v91, 7
    %v93 = vsub.s32 0, %v92
    %v94 = vrot.slane %v22, %v93
    %v159 = vunpack.c.l.b16 %v23
    %v160 = vunpack.c.l.b16 %v24
    %v161 = vunpack.c.l.b16 %v25
    %v162 = vunpack.c.l.b16 %v26
    %v163 = vunpack.c.l.b16 %v27
    %v164 = vunpack.c.l.b16 %v28
    %v165 = vunpack.c.l.b16 %v29
    %v166 = vunpack.c.l.b16 %v30
    %v167 = vunpack.c.l.b16 %v31
    %v168 = vunpack.c.l.b16 %v32
    %v169 = vunpack.c.l.b16 %v33
    %v170 = vunpack.c.l.b16 %v34
    %v171 = vunpack.c.l.b16 %v35
    %v172 = vunpack.c.l.b16 %v36
    %v173 = vunpack.c.l.b16 %v37
    %v174 = vunpack.c.l.b16 %v38
    %v175 = vunpack.c.l.b16 %v39
    %v176 = vunpack.c.l.b16 %v40
    %v177 = vunpack.c.l.b16 %v41
    %v178 = vunpack.c.l.b16 %v42
    %v179 = vunpack.c.l.b16 %v43
    %v180 = vunpack.c.l.b16 %v44
    %v181 = vunpack.c.l.b16 %v45
    %v182 = vunpack.c.l.b16 %v46
    %v183 = vunpack.c.l.b16 %v47
    %v184 = vunpack.c.l.b16 %v48
    %v185 = vunpack.c.l.b16 %v49
    %v186 = vunpack.c.l.b16 %v50
    %v187 = vunpack.c.l.b16 %v51
    %v188 = vunpack.c.l.b16 %v52
    %v189 = vunpack.c.l.b16 %v53
    %v190 = vunpack.c.l.b16 %v54
    %v191 = vunpack.c.l.b16 %v55
    %v192 = vunpack.c.l.b16 %v56
    %v193 = vunpack.c.l.b16 %v57
    %v194 = vunpack.c.l.b16 %v58
    %v195 = vunpack.c.l.b16 %v59
    %v196 = vunpack.c.l.b16 %v60
    %v197 = vunpack.c.l.b16 %v61
    %v198 = vunpack.c.l.b16 %v62
    %v199 = vunpack.c.l.b16 %v63
    %v200 = vunpack.c.l.b16 %v64
    %v201 = vunpack.c.l.b16 %v65
    %v202 = vunpack.c.l.b16 %v66
    %v203 = vunpack.c.l.b16 %v67
    %v204 = vunpack.c.l.b16 %v68
    %v205 = vunpack.c.l.b16 %v69
    %v206 = vunpack.c.l.b16 %v70
    %v207 = vunpack.c.l.b16 %v71
    %v208 = vunpack.c.l.b16 %v72
    %v209 = vunpack.c.l.b16 %v73
    %v210 = vunpack.c.l.b16 %v74
    %v211 = vunpack.c.l.b16 %v75
    %v212 = vunpack.c.l.b16 %v76
    %v213 = vunpack.c.l.b16 %v77
    %v214 = vunpack.c.l.b16 %v78
    %v215 = vunpack.c.l.b16 %v79
    %v216 = vunpack.c.l.b16 %v80
    %v217 = vunpack.c.l.b16 %v81
    %v218 = vunpack.c.l.b16 %v82
    %v219 = vunpack.c.l.b16 %v83
    %v220 = vunpack.c.l.b16 %v84
    %v221 = vunpack.c.l.b16 %v85
    %v222 = vunpack.c.l.b16 %v86
    %v223 = vpack.c.b16 %v160, %v159
    %v224 = vpack.c.b16 %v162, %v161
    %v225 = vpack.c.b16 %v164, %v163
    %v226 = vpack.c.b16 %v166, %v165
    %v227 = vpack.c.b16 %v168, %v167
    %v228 = vpack.c.b16 %v170, %v169
    %v229 = vpack.c.b16 %v172, %v171
    %v230 = vpack.c.b16 %v174, %v173
    %v231 = vpack.c.b16 %v176, %v175
    %v232 = vpack.c.b16 %v178, %v177
    %v233 = vpack.c.b16 %v180, %v179
    %v234 = vpack.c.b16 %v182, %v181
    %v235 = vpack.c.b16 %v184, %v183
    %v236 = vpack.c.b16 %v186, %v185
    %v237 = vpack.c.b16 %v188, %v187
    %v238 = vpack.c.b16 %v190, %v189
    %v239 = vpack.c.b16 %v192, %v191
    %v240 = vpack.c.b16 %v194, %v193
    %v241 = vpack.c.b16 %v196, %v195
    %v242 = vpack.c.b16 %v198, %v197
    %v243 = vpack.c.b16 %v200, %v199
    %v244 = vpack.c.b16 %v202, %v201
    %v245 = vpack.c.b16 %v204, %v203
    %v246 = vpack.c.b16 %v206, %v205
    %v247 = vpack.c.b16 %v208, %v207
    %v248 = vpack.c.b16 %v210, %v209
    %v249 = vpack.c.b16 %v212, %v211
    %v250 = vpack.c.b16 %v214, %v213
    %v251 = vpack.c.b16 %v216, %v215
    %v252 = vpack.c.b16 %v218, %v217
    %v253 = vpack.c.b16 %v220, %v219
    %v254 = vpack.c.b16 %v222, %v221
    %v259 = vunpack.c.l.b16 %v87
    %v260 = vunpack.c.l.b16 %v88
    %v261 = vunpack.c.l.b16 %v89
    %v262 = vunpack.c.l.b16 %v90
    %v263 = vpack.c.b16 %v260, %v259
    %v264 = vpack.c.b16 %v262, %v261
    %vm267 = vcmask 261120
    %v269 = vsel %vm267, %v223, 0
    %v272 = vsel %vm267, %v224, 0
    %v275 = vsel %vm267, %v225, 0
    %v278 = vsel %vm267, %v226, 0
    %v281 = vsel %vm267, %v227, 0
    %v284 = vsel %vm267, %v228, 0
    %v287 = vsel %vm267, %v229, 0
    %v290 = vsel %vm267, %v230, 0
    %v293 = vsel %vm267, %v231, 0
    %v296 = vsel %vm267, %v232, 0
    %v299 = vsel %vm267, %v233, 0
    %v302 = vsel %vm267, %v234, 0
    %v305 = vsel %vm267, %v235, 0
    %v308 = vsel %vm267, %v236, 0
    %v311 = vsel %vm267, %v237, 0
    %v314 = vsel %vm267, %v238, 0
    %v317 = vsel %vm267, %v239, 0
    %v320 = vsel %vm267, %v240, 0
    %v323 = vsel %vm267, %v241, 0
    %v326 = vsel %vm267, %v242, 0
    %v329 = vsel %vm267, %v243, 0
    %v332 = vsel %vm267, %v244, 0
    %v335 = vsel %vm267, %v245, 0
    %v338 = vsel %vm267, %v246, 0
    %v341 = vsel %vm267, %v247, 0
    %v344 = vsel %vm267, %v248, 0
    %v347 = vsel %vm267, %v249, 0
    %v350 = vsel %vm267, %v250, 0
    %v353 = vsel %vm267, %v251, 0
    %v356 = vsel %vm267, %v252, 0
    %v359 = vsel %vm267, %v253, 0
    %v362 = vsel %vm267, %v254, 0
    %364 = vmatprep.subr.bf16.mxu0 0
    %365 = vmatpush1.bf16.msra.mxu0 %v263
    %366 = vmatprep.subr.bf16.mxu0 0
    %367 = vmatpush1.bf16.msra.mxu0 %v264
    %368 = vmatprep.subr.bf16.mxu0 0
    %369 = vmatpush1.bf16.msra.mxu0 0
    %370 = vmatprep.subr.bf16.mxu0 0
    %371 = vmatpush1.bf16.msra.mxu0 0
    %372 = vmatprep.subr.bf16.mxu0 0
    %373 = vmatpush1.bf16.msra.mxu0 0
    %374 = vmatprep.subr.bf16.mxu0 0
    %375 = vmatpush1.bf16.msra.mxu0 0
    %376 = vmatprep.subr.bf16.mxu0 0
    %377 = vmatpush1.bf16.msra.mxu0 0
    %378 = vmatprep.subr.bf16.mxu0 0
    %379 = vmatpush1.bf16.msra.mxu0 0
    %380 = vmatprep.subr.bf16.mxu0 0
    %381 = vmatpush1.bf16.msra.mxu0 0
    %382 = vmatprep.subr.bf16.mxu0 0
    %383 = vmatpush1.bf16.msra.mxu0 0
    %384 = vmatprep.subr.bf16.mxu0 0
    %385 = vmatpush1.bf16.msra.mxu0 0
    %386 = vmatprep.subr.bf16.mxu0 0
    %387 = vmatpush1.bf16.msra.mxu0 0
    %388 = vmatprep.subr.bf16.mxu0 0
    %389 = vmatpush1.bf16.msra.mxu0 0
    %390 = vmatprep.subr.bf16.mxu0 0
    %391 = vmatpush1.bf16.msra.mxu0 0
    %392 = vmatprep.subr.bf16.mxu0 0
    %393 = vmatpush1.bf16.msra.mxu0 0
    %394 = vmatprep.subr.bf16.mxu0 0
    %395 = vmatpush1.bf16.msra.mxu0 0
    %396 = vmatprep.mubr.bf16.mxu0 0
    %397 = vmatmul.mubr.bf16.gmra.mrb[0].mxu0 %v269
    %v398 = vpop.f32.mrb[0].mxu0
    %v399 = vadd.f32 %v94, %v398
    %v400 = vpop.f32.mrb[0].mxu0
    %v401 = vpop.f32.mrb[0].mxu0
    %v402 = vadd.f32 %v94, %v401
    %v403 = vpop.f32.mrb[0].mxu0
    %404 = vmatprep.mubr.bf16.mxu0 0
    %405 = vmatmul.mubr.bf16.gmra.mrb[0].mxu0 %v272
    %v406 = vpop.f32.mrb[0].mxu0
    %v407 = vadd.f32 %v94, %v406
    %v408 = vpop.f32.mrb[0].mxu0
    %v409 = vpop.f32.mrb[0].mxu0
    %v410 = vadd.f32 %v94, %v409
    %v411 = vpop.f32.mrb[0].mxu0
    %412 = vmatprep.mubr.bf16.mxu0 0
    %413 = vmatmul.mubr.bf16.gmra.mrb[0].mxu0 %v275
    %v414 = vpop.f32.mrb[0].mxu0
    %v415 = vadd.f32 %v94, %v414
    %v416 = vpop.f32.mrb[0].mxu0
    %v417 = vpop.f32.mrb[0].mxu0
    %v418 = vadd.f32 %v94, %v417
    %v419 = vpop.f32.mrb[0].mxu0
    %420 = vmatprep.mubr.bf16.mxu0 0
    %421 = vmatmul.mubr.bf16.gmra.mrb[0].mxu0 %v278
    %v422 = vpop.f32.mrb[0].mxu0
    %v423 = vadd.f32 %v94, %v422
    %v424 = vpop.f32.mrb[0].mxu0
    %v425 = vpop.f32.mrb[0].mxu0
    %v426 = vadd.f32 %v94, %v425
    %v427 = vpop.f32.mrb[0].mxu0
    %428 = vmatprep.mubr.bf16.mxu0 0
    %429 = vmatmul.mubr.bf16.gmra.mrb[0].mxu0 %v281
    %v430 = vpop.f32.mrb[0].mxu0
    %v431 = vadd.f32 %v94, %v430
    %v432 = vpop.f32.mrb[0].mxu0
    %v433 = vpop.f32.mrb[0].mxu0
    %v434 = vadd.f32 %v94, %v433
    %v435 = vpop.f32.mrb[0].mxu0
    %436 = vmatprep.mubr.bf16.mxu0 0
    %437 = vmatmul.mubr.bf16.gmra.mrb[0].mxu0 %v284
    %v438 = vpop.f32.mrb[0].mxu0
    %v439 = vadd.f32 %v94, %v438
    %v440 = vpop.f32.mrb[0].mxu0
    %v441 = vpop.f32.mrb[0].mxu0
    %v442 = vadd.f32 %v94, %v441
    %v443 = vpop.f32.mrb[0].mxu0
    %444 = vmatprep.mubr.bf16.mxu0 0
    %445 = vmatmul.mubr.bf16.gmra.mrb[0].mxu0 %v287
    %v446 = vpop.f32.mrb[0].mxu0
    %v447 = vadd.f32 %v94, %v446
    %v448 = vpop.f32.mrb[0].mxu0
    %v449 = vpop.f32.mrb[0].mxu0
    %v450 = vadd.f32 %v94, %v449
    %v451 = vpop.f32.mrb[0].mxu0
    %452 = vmatprep.mubr.bf16.mxu0 0
    %453 = vmatmul.mubr.bf16.gmra.mrb[0].mxu0 %v290
    %v454 = vpop.f32.mrb[0].mxu0
    %v455 = vadd.f32 %v94, %v454
    %v456 = vpop.f32.mrb[0].mxu0
    %v457 = vpop.f32.mrb[0].mxu0
    %v458 = vadd.f32 %v94, %v457
    %v459 = vpop.f32.mrb[0].mxu0
    %460 = vmatprep.mubr.bf16.mxu0 0
    %461 = vmatmul.mubr.bf16.gmra.mrb[0].mxu0 %v293
    %v462 = vpop.f32.mrb[0].mxu0
    %v463 = vadd.f32 %v94, %v462
    %v464 = vpop.f32.mrb[0].mxu0
    %v465 = vpop.f32.mrb[0].mxu0
    %v466 = vadd.f32 %v94, %v465
    %v467 = vpop.f32.mrb[0].mxu0
    %468 = vmatprep.mubr.bf16.mxu0 0
    %469 = vmatmul.mubr.bf16.gmra.mrb[0].mxu0 %v296
    %v470 = vpop.f32.mrb[0].mxu0
    %v471 = vadd.f32 %v94, %v470
    %v472 = vpop.f32.mrb[0].mxu0
    %v473 = vpop.f32.mrb[0].mxu0
    %v474 = vadd.f32 %v94, %v473
    %v475 = vpop.f32.mrb[0].mxu0
    %476 = vmatprep.mubr.bf16.mxu0 0
    %477 = vmatmul.mubr.bf16.gmra.mrb[0].mxu0 %v299
    %v478 = vpop.f32.mrb[0].mxu0
    %v479 = vadd.f32 %v94, %v478
    %v480 = vpop.f32.mrb[0].mxu0
    %v481 = vpop.f32.mrb[0].mxu0
    %v482 = vadd.f32 %v94, %v481
    %v483 = vpop.f32.mrb[0].mxu0
    %484 = vmatprep.mubr.bf16.mxu0 0
    %485 = vmatmul.mubr.bf16.gmra.mrb[0].mxu0 %v302
    %v486 = vpop.f32.mrb[0].mxu0
    %v487 = vadd.f32 %v94, %v486
    %v488 = vpop.f32.mrb[0].mxu0
    %v489 = vpop.f32.mrb[0].mxu0
    %v490 = vadd.f32 %v94, %v489
    %v491 = vpop.f32.mrb[0].mxu0
    %492 = vmatprep.mubr.bf16.mxu0 0
    %493 = vmatmul.mubr.bf16.gmra.mrb[0].mxu0 %v305
    %v494 = vpop.f32.mrb[0].mxu0
    %v495 = vadd.f32 %v94, %v494
    %v496 = vpop.f32.mrb[0].mxu0
    %v497 = vpop.f32.mrb[0].mxu0
    %v498 = vadd.f32 %v94, %v497
    %v499 = vpop.f32.mrb[0].mxu0
    %500 = vmatprep.mubr.bf16.mxu0 0
    %501 = vmatmul.mubr.bf16.gmra.mrb[0].mxu0 %v308
    %v502 = vpop.f32.mrb[0].mxu0
    %v503 = vadd.f32 %v94, %v502
    %v504 = vpop.f32.mrb[0].mxu0
    %v505 = vpop.f32.mrb[0].mxu0
    %v506 = vadd.f32 %v94, %v505
    %v507 = vpop.f32.mrb[0].mxu0
    %508 = vmatprep.mubr.bf16.mxu0 0
    %509 = vmatmul.mubr.bf16.gmra.mrb[0].mxu0 %v311
    %v510 = vpop.f32.mrb[0].mxu0
    %v511 = vadd.f32 %v94, %v510
    %v512 = vpop.f32.mrb[0].mxu0
    %v513 = vpop.f32.mrb[0].mxu0
    %v514 = vadd.f32 %v94, %v513
    %v515 = vpop.f32.mrb[0].mxu0
    %516 = vmatprep.mubr.bf16.mxu0 0
    %517 = vmatmul.mubr.bf16.gmra.mrb[0].mxu0 %v314
    %v518 = vpop.f32.mrb[0].mxu0
    %v519 = vadd.f32 %v94, %v518
    %v520 = vpop.f32.mrb[0].mxu0
    %v521 = vpop.f32.mrb[0].mxu0
    %v522 = vadd.f32 %v94, %v521
    %v523 = vpop.f32.mrb[0].mxu0
    %524 = vmatprep.mubr.bf16.mxu0 0
    %525 = vmatmul.mubr.bf16.gmra.mrb[0].mxu0 %v317
    %v526 = vpop.f32.mrb[0].mxu0
    %v527 = vadd.f32 %v94, %v526
    %v528 = vpop.f32.mrb[0].mxu0
    %v529 = vpop.f32.mrb[0].mxu0
    %v530 = vadd.f32 %v94, %v529
    %v531 = vpop.f32.mrb[0].mxu0
    %532 = vmatprep.mubr.bf16.mxu0 0
    %533 = vmatmul.mubr.bf16.gmra.mrb[0].mxu0 %v320
    %v534 = vpop.f32.mrb[0].mxu0
    %v535 = vadd.f32 %v94, %v534
    %v536 = vpop.f32.mrb[0].mxu0
    %v537 = vpop.f32.mrb[0].mxu0
    %v538 = vadd.f32 %v94, %v537
    %v539 = vpop.f32.mrb[0].mxu0
    %540 = vmatprep.mubr.bf16.mxu0 0
    %541 = vmatmul.mubr.bf16.gmra.mrb[0].mxu0 %v323
    %v542 = vpop.f32.mrb[0].mxu0
    %v543 = vadd.f32 %v94, %v542
    %v544 = vpop.f32.mrb[0].mxu0
    %v545 = vpop.f32.mrb[0].mxu0
    %v546 = vadd.f32 %v94, %v545
    %v547 = vpop.f32.mrb[0].mxu0
    %548 = vmatprep.mubr.bf16.mxu0 0
    %549 = vmatmul.mubr.bf16.gmra.mrb[0].mxu0 %v326
    %v550 = vpop.f32.mrb[0].mxu0
    %v551 = vadd.f32 %v94, %v550
    %v552 = vpop.f32.mrb[0].mxu0
    %v553 = vpop.f32.mrb[0].mxu0
    %v554 = vadd.f32 %v94, %v553
    %v555 = vpop.f32.mrb[0].mxu0
    %556 = vmatprep.mubr.bf16.mxu0 0
    %557 = vmatmul.mubr.bf16.gmra.mrb[0].mxu0 %v329
    %v558 = vpop.f32.mrb[0].mxu0
    %v559 = vadd.f32 %v94, %v558
    %v560 = vpop.f32.mrb[0].mxu0
    %v561 = vpop.f32.mrb[0].mxu0
    %v562 = vadd.f32 %v94, %v561
    %v563 = vpop.f32.mrb[0].mxu0
    %564 = vmatprep.mubr.bf16.mxu0 0
    %565 = vmatmul.mubr.bf16.gmra.mrb[0].mxu0 %v332
    %v566 = vpop.f32.mrb[0].mxu0
    %v567 = vadd.f32 %v94, %v566
    %v568 = vpop.f32.mrb[0].mxu0
    %v569 = vpop.f32.mrb[0].mxu0
    %v570 = vadd.f32 %v94, %v569
    %v571 = vpop.f32.mrb[0].mxu0
    %572 = vmatprep.mubr.bf16.mxu0 0
    %573 = vmatmul.mubr.bf16.gmra.mrb[0].mxu0 %v335
    %v574 = vpop.f32.mrb[0].mxu0
    %v575 = vadd.f32 %v94, %v574
    %v576 = vpop.f32.mrb[0].mxu0
    %v577 = vpop.f32.mrb[0].mxu0
    %v578 = vadd.f32 %v94, %v577
    %v579 = vpop.f32.mrb[0].mxu0
    %580 = vmatprep.mubr.bf16.mxu0 0
    %581 = vmatmul.mubr.bf16.gmra.mrb[0].mxu0 %v338
    %v582 = vpop.f32.mrb[0].mxu0
    %v583 = vadd.f32 %v94, %v582
    %v584 = vpop.f32.mrb[0].mxu0
    %v585 = vpop.f32.mrb[0].mxu0
    %v586 = vadd.f32 %v94, %v585
    %v587 = vpop.f32.mrb[0].mxu0
    %588 = vmatprep.mubr.bf16.mxu0 0
    %589 = vmatmul.mubr.bf16.gmra.mrb[0].mxu0 %v341
    %v590 = vpop.f32.mrb[0].mxu0
    %v591 = vadd.f32 %v94, %v590
    %v592 = vpop.f32.mrb[0].mxu0
    %v593 = vpop.f32.mrb[0].mxu0
    %v594 = vadd.f32 %v94, %v593
    %v595 = vpop.f32.mrb[0].mxu0
    %596 = vmatprep.mubr.bf16.mxu0 0
    %597 = vmatmul.mubr.bf16.gmra.mrb[0].mxu0 %v344
    %v598 = vpop.f32.mrb[0].mxu0
    %v599 = vadd.f32 %v94, %v598
    %v600 = vpop.f32.mrb[0].mxu0
    %v601 = vpop.f32.mrb[0].mxu0
    %v602 = vadd.f32 %v94, %v601
    %v603 = vpop.f32.mrb[0].mxu0
    %604 = vmatprep.mubr.bf16.mxu0 0
    %605 = vmatmul.mubr.bf16.gmra.mrb[0].mxu0 %v347
    %v606 = vpop.f32.mrb[0].mxu0
    %v607 = vadd.f32 %v94, %v606
    %v608 = vpop.f32.mrb[0].mxu0
    %v609 = vpop.f32.mrb[0].mxu0
    %v610 = vadd.f32 %v94, %v609
    %v611 = vpop.f32.mrb[0].mxu0
    %612 = vmatprep.mubr.bf16.mxu0 0
    %613 = vmatmul.mubr.bf16.gmra.mrb[0].mxu0 %v350
    %v614 = vpop.f32.mrb[0].mxu0
    %v615 = vadd.f32 %v94, %v614
    %v616 = vpop.f32.mrb[0].mxu0
    %v617 = vpop.f32.mrb[0].mxu0
    %v618 = vadd.f32 %v94, %v617
    %v619 = vpop.f32.mrb[0].mxu0
    %620 = vmatprep.mubr.bf16.mxu0 0
    %621 = vmatmul.mubr.bf16.gmra.mrb[0].mxu0 %v353
    %v622 = vpop.f32.mrb[0].mxu0
    %v623 = vadd.f32 %v94, %v622
    %v624 = vpop.f32.mrb[0].mxu0
    %v625 = vpop.f32.mrb[0].mxu0
    %v626 = vadd.f32 %v94, %v625
    %v627 = vpop.f32.mrb[0].mxu0
    %628 = vmatprep.mubr.bf16.mxu0 0
    %629 = vmatmul.mubr.bf16.gmra.mrb[0].mxu0 %v356
    %v630 = vpop.f32.mrb[0].mxu0
    %v631 = vadd.f32 %v94, %v630
    %v632 = vpop.f32.mrb[0].mxu0
    %v633 = vpop.f32.mrb[0].mxu0
    %v634 = vadd.f32 %v94, %v633
    %v635 = vpop.f32.mrb[0].mxu0
    %636 = vmatprep.mubr.bf16.mxu0 0
    %637 = vmatmul.mubr.bf16.gmra.mrb[0].mxu0 %v359
    %v638 = vpop.f32.mrb[0].mxu0
    %v639 = vadd.f32 %v94, %v638
    %v640 = vpop.f32.mrb[0].mxu0
    %v641 = vpop.f32.mrb[0].mxu0
    %v642 = vadd.f32 %v94, %v641
    %v643 = vpop.f32.mrb[0].mxu0
    %644 = vmatprep.mubr.bf16.mxu0 0
    %645 = vmatmul.mubr.bf16.gmra.mrb[0].mxu0 %v362
    %v646 = vpop.f32.mrb[0].mxu0
    %v647 = vadd.f32 %v94, %v646
    %v648 = vpop.f32.mrb[0].mxu0
    %v649 = vpop.f32.mrb[0].mxu0
    %v650 = vadd.f32 %v94, %v649
    %v651 = vpop.f32.mrb[0].mxu0
    %652 = vdwg.mxu0
    %vm653 = vcmask 523264
    %v654 = vsel %vm653, %v399, 0.0
    %655 = vadd.xlane.f32.xlu0 %v654
    %v656 = vpop.xlane.xlu0 %655
    %v657 = vsel %vm653, %v402, 0.0
    %658 = vadd.xlane.f32.xlu0 %v657
    %v659 = vpop.xlane.xlu0 %658
    %v660 = vsel %vm653, %v407, 0.0
    %661 = vadd.xlane.f32.xlu0 %v660
    %v662 = vpop.xlane.xlu0 %661
    %v663 = vsel %vm653, %v410, 0.0
    %664 = vadd.xlane.f32.xlu0 %v663
    %v665 = vpop.xlane.xlu0 %664
    %v666 = vsel %vm653, %v415, 0.0
    %667 = vadd.xlane.f32.xlu0 %v666
    %v668 = vpop.xlane.xlu0 %667
    %v669 = vsel %vm653, %v418, 0.0
    %670 = vadd.xlane.f32.xlu0 %v669
    %v671 = vpop.xlane.xlu0 %670
    %v672 = vsel %vm653, %v423, 0.0
    %673 = vadd.xlane.f32.xlu0 %v672
    %v674 = vpop.xlane.xlu0 %673
    %v675 = vsel %vm653, %v426, 0.0
    %676 = vadd.xlane.f32.xlu0 %v675
    %v677 = vpop.xlane.xlu0 %676
    %v678 = vsel %vm653, %v431, 0.0
    %679 = vadd.xlane.f32.xlu0 %v678
    %v680 = vpop.xlane.xlu0 %679
    %v681 = vsel %vm653, %v434, 0.0
    %682 = vadd.xlane.f32.xlu0 %v681
    %v683 = vpop.xlane.xlu0 %682
    %v684 = vsel %vm653, %v439, 0.0
    %685 = vadd.xlane.f32.xlu0 %v684
    %v686 = vpop.xlane.xlu0 %685
    %v687 = vsel %vm653, %v442, 0.0
    %688 = vadd.xlane.f32.xlu0 %v687
    %v689 = vpop.xlane.xlu0 %688
    %v690 = vsel %vm653, %v447, 0.0
    %691 = vadd.xlane.f32.xlu0 %v690
    %v692 = vpop.xlane.xlu0 %691
    %v693 = vsel %vm653, %v450, 0.0
    %694 = vadd.xlane.f32.xlu0 %v693
    %v695 = vpop.xlane.xlu0 %694
    %v696 = vsel %vm653, %v455, 0.0
    %697 = vadd.xlane.f32.xlu0 %v696
    %v698 = vpop.xlane.xlu0 %697
    %v699 = vsel %vm653, %v458, 0.0
    %700 = vadd.xlane.f32.xlu0 %v699
    %v701 = vpop.xlane.xlu0 %700
    %v702 = vsel %vm653, %v463, 0.0
    %703 = vadd.xlane.f32.xlu0 %v702
    %v704 = vpop.xlane.xlu0 %703
    %v705 = vsel %vm653, %v466, 0.0
    %706 = vadd.xlane.f32.xlu0 %v705
    %v707 = vpop.xlane.xlu0 %706
    %v708 = vsel %vm653, %v471, 0.0
    %709 = vadd.xlane.f32.xlu0 %v708
    %v710 = vpop.xlane.xlu0 %709
    %v711 = vsel %vm653, %v474, 0.0
    %712 = vadd.xlane.f32.xlu0 %v711
    %v713 = vpop.xlane.xlu0 %712
    %v714 = vsel %vm653, %v479, 0.0
    %715 = vadd.xlane.f32.xlu0 %v714
    %v716 = vpop.xlane.xlu0 %715
    %v717 = vsel %vm653, %v482, 0.0
    %718 = vadd.xlane.f32.xlu0 %v717
    %v719 = vpop.xlane.xlu0 %718
    %v720 = vsel %vm653, %v487, 0.0
    %721 = vadd.xlane.f32.xlu0 %v720
    %v722 = vpop.xlane.xlu0 %721
    %v723 = vsel %vm653, %v490, 0.0
    %724 = vadd.xlane.f32.xlu0 %v723
    %v725 = vpop.xlane.xlu0 %724
    %v726 = vsel %vm653, %v495, 0.0
    %727 = vadd.xlane.f32.xlu0 %v726
    %v728 = vpop.xlane.xlu0 %727
    %v729 = vsel %vm653, %v498, 0.0
    %730 = vadd.xlane.f32.xlu0 %v729
    %v731 = vpop.xlane.xlu0 %730
    %v732 = vsel %vm653, %v503, 0.0
    %733 = vadd.xlane.f32.xlu0 %v732
    %v734 = vpop.xlane.xlu0 %733
    %v735 = vsel %vm653, %v506, 0.0
    %736 = vadd.xlane.f32.xlu0 %v735
    %v737 = vpop.xlane.xlu0 %736
    %v738 = vsel %vm653, %v511, 0.0
    %739 = vadd.xlane.f32.xlu0 %v738
    %v740 = vpop.xlane.xlu0 %739
    %v741 = vsel %vm653, %v514, 0.0
    %742 = vadd.xlane.f32.xlu0 %v741
    %v743 = vpop.xlane.xlu0 %742
    %v744 = vsel %vm653, %v519, 0.0
    %745 = vadd.xlane.f32.xlu0 %v744
    %v746 = vpop.xlane.xlu0 %745
    %v747 = vsel %vm653, %v522, 0.0
    %748 = vadd.xlane.f32.xlu0 %v747
    %v749 = vpop.xlane.xlu0 %748
    %v750 = vsel %vm653, %v527, 0.0
    %751 = vadd.xlane.f32.xlu0 %v750
    %v752 = vpop.xlane.xlu0 %751
    %v753 = vsel %vm653, %v530, 0.0
    %754 = vadd.xlane.f32.xlu0 %v753
    %v755 = vpop.xlane.xlu0 %754
    %v756 = vsel %vm653, %v535, 0.0
    %757 = vadd.xlane.f32.xlu0 %v756
    %v758 = vpop.xlane.xlu0 %757
    %v759 = vsel %vm653, %v538, 0.0
    %760 = vadd.xlane.f32.xlu0 %v759
    %v761 = vpop.xlane.xlu0 %760
    %v762 = vsel %vm653, %v543, 0.0
    %763 = vadd.xlane.f32.xlu0 %v762
    %v764 = vpop.xlane.xlu0 %763
    %v765 = vsel %vm653, %v546, 0.0
    %766 = vadd.xlane.f32.xlu0 %v765
    %v767 = vpop.xlane.xlu0 %766
    %v768 = vsel %vm653, %v551, 0.0
    %769 = vadd.xlane.f32.xlu0 %v768
    %v770 = vpop.xlane.xlu0 %769
    %v771 = vsel %vm653, %v554, 0.0
    %772 = vadd.xlane.f32.xlu0 %v771
    %v773 = vpop.xlane.xlu0 %772
    %v774 = vsel %vm653, %v559, 0.0
    %775 = vadd.xlane.f32.xlu0 %v774
    %v776 = vpop.xlane.xlu0 %775
    %v777 = vsel %vm653, %v562, 0.0
    %778 = vadd.xlane.f32.xlu0 %v777
    %v779 = vpop.xlane.xlu0 %778
    %v780 = vsel %vm653, %v567, 0.0
    %781 = vadd.xlane.f32.xlu0 %v780
    %v782 = vpop.xlane.xlu0 %781
    %v783 = vsel %vm653, %v570, 0.0
    %784 = vadd.xlane.f32.xlu0 %v783
    %v785 = vpop.xlane.xlu0 %784
    %v786 = vsel %vm653, %v575, 0.0
    %787 = vadd.xlane.f32.xlu0 %v786
    %v788 = vpop.xlane.xlu0 %787
    %v789 = vsel %vm653, %v578, 0.0
    %790 = vadd.xlane.f32.xlu0 %v789
    %v791 = vpop.xlane.xlu0 %790
    %v792 = vsel %vm653, %v583, 0.0
    %793 = vadd.xlane.f32.xlu0 %v792
    %v794 = vpop.xlane.xlu0 %793
    %v795 = vsel %vm653, %v586, 0.0
    %796 = vadd.xlane.f32.xlu0 %v795
    %v797 = vpop.xlane.xlu0 %796
    %v798 = vsel %vm653, %v591, 0.0
    %799 = vadd.xlane.f32.xlu0 %v798
    %v800 = vpop.xlane.xlu0 %799
    %v801 = vsel %vm653, %v594, 0.0
    %802 = vadd.xlane.f32.xlu0 %v801
    %v803 = vpop.xlane.xlu0 %802
    %v804 = vsel %vm653, %v599, 0.0
    %805 = vadd.xlane.f32.xlu0 %v804
    %v806 = vpop.xlane.xlu0 %805
    %v807 = vsel %vm653, %v602, 0.0
    %808 = vadd.xlane.f32.xlu0 %v807
    %v809 = vpop.xlane.xlu0 %808
    %v810 = vsel %vm653, %v607, 0.0
    %811 = vadd.xlane.f32.xlu0 %v810
    %v812 = vpop.xlane.xlu0 %811
    %v813 = vsel %vm653, %v610, 0.0
    %814 = vadd.xlane.f32.xlu0 %v813
    %v815 = vpop.xlane.xlu0 %814
    %v816 = vsel %vm653, %v615, 0.0
    %817 = vadd.xlane.f32.xlu0 %v816
    %v818 = vpop.xlane.xlu0 %817
    %v819 = vsel %vm653, %v618, 0.0
    %820 = vadd.xlane.f32.xlu0 %v819
    %v821 = vpop.xlane.xlu0 %820
    %v822 = vsel %vm653, %v623, 0.0
    %823 = vadd.xlane.f32.xlu0 %v822
    %v824 = vpop.xlane.xlu0 %823
    %v825 = vsel %vm653, %v626, 0.0
    %826 = vadd.xlane.f32.xlu0 %v825
    %v827 = vpop.xlane.xlu0 %826
    %v828 = vsel %vm653, %v631, 0.0
    %829 = vadd.xlane.f32.xlu0 %v828
    %v830 = vpop.xlane.xlu0 %829
    %v831 = vsel %vm653, %v634, 0.0
    %832 = vadd.xlane.f32.xlu0 %v831
    %v833 = vpop.xlane.xlu0 %832
    %v834 = vsel %vm653, %v639, 0.0
    %835 = vadd.xlane.f32.xlu0 %v834
    %v836 = vpop.xlane.xlu0 %835
    %v837 = vsel %vm653, %v642, 0.0
    %838 = vadd.xlane.f32.xlu0 %v837
    %v839 = vpop.xlane.xlu0 %838
    %v840 = vsel %vm653, %v647, 0.0
    %841 = vadd.xlane.f32.xlu0 %v840
    %v842 = vpop.xlane.xlu0 %841
    %v843 = vsel %vm653, %v650, 0.0
    %844 = vadd.xlane.f32.xlu0 %v843
    %v845 = vpop.xlane.xlu0 %844
    %v846 = vrcp.pop 64.0
    %v847 = vmul.f32 %v656, %v846
    %v848 = vmul.f32 %v659, %v846
    %v849 = vmul.f32 %v662, %v846
    %v850 = vmul.f32 %v665, %v846
    %v851 = vmul.f32 %v668, %v846
    %v852 = vmul.f32 %v671, %v846
    %v853 = vmul.f32 %v674, %v846
    %v854 = vmul.f32 %v677, %v846
    %v855 = vmul.f32 %v680, %v846
    %v856 = vmul.f32 %v683, %v846
    %v857 = vmul.f32 %v686, %v846
    %v858 = vmul.f32 %v689, %v846
    %v859 = vmul.f32 %v692, %v846
    %v860 = vmul.f32 %v695, %v846
    %v861 = vmul.f32 %v698, %v846
    %v862 = vmul.f32 %v701, %v846
    %v863 = vmul.f32 %v704, %v846
    %v864 = vmul.f32 %v707, %v846
    %v865 = vmul.f32 %v710, %v846
    %v866 = vmul.f32 %v713, %v846
    %v867 = vmul.f32 %v716, %v846
    %v868 = vmul.f32 %v719, %v846
    %v869 = vmul.f32 %v722, %v846
    %v870 = vmul.f32 %v725, %v846
    %v871 = vmul.f32 %v728, %v846
    %v872 = vmul.f32 %v731, %v846
    %v873 = vmul.f32 %v734, %v846
    %v874 = vmul.f32 %v737, %v846
    %v875 = vmul.f32 %v740, %v846
    %v876 = vmul.f32 %v743, %v846
    %v877 = vmul.f32 %v746, %v846
    %v878 = vmul.f32 %v749, %v846
    %v879 = vmul.f32 %v752, %v846
    %v880 = vmul.f32 %v755, %v846
    %v881 = vmul.f32 %v758, %v846
    %v882 = vmul.f32 %v761, %v846
    %v883 = vmul.f32 %v764, %v846
    %v884 = vmul.f32 %v767, %v846
    %v885 = vmul.f32 %v770, %v846
    %v886 = vmul.f32 %v773, %v846
    %v887 = vmul.f32 %v776, %v846
    %v888 = vmul.f32 %v779, %v846
    %v889 = vmul.f32 %v782, %v846
    %v890 = vmul.f32 %v785, %v846
    %v891 = vmul.f32 %v788, %v846
    %v892 = vmul.f32 %v791, %v846
    %v893 = vmul.f32 %v794, %v846
    %v894 = vmul.f32 %v797, %v846
    %v895 = vmul.f32 %v800, %v846
    %v896 = vmul.f32 %v803, %v846
    %v897 = vmul.f32 %v806, %v846
    %v898 = vmul.f32 %v809, %v846
    %v899 = vmul.f32 %v812, %v846
    %v900 = vmul.f32 %v815, %v846
    %v901 = vmul.f32 %v818, %v846
    %v902 = vmul.f32 %v821, %v846
    %v903 = vmul.f32 %v824, %v846
    %v904 = vmul.f32 %v827, %v846
    %v905 = vmul.f32 %v830, %v846
    %v906 = vmul.f32 %v833, %v846
    %v907 = vmul.f32 %v836, %v846
    %v908 = vmul.f32 %v839, %v846
    %v909 = vmul.f32 %v842, %v846
    %v910 = vmul.f32 %v845, %v846
    %v911 = vsub.f32 %v399, %v847
    %v912 = vsub.f32 %v402, %v848
    %v913 = vsub.f32 %v407, %v849
    %v914 = vsub.f32 %v410, %v850
    %v915 = vsub.f32 %v415, %v851
    %v916 = vsub.f32 %v418, %v852
    %v917 = vsub.f32 %v423, %v853
    %v918 = vsub.f32 %v426, %v854
    %v919 = vsub.f32 %v431, %v855
    %v920 = vsub.f32 %v434, %v856
    %v921 = vsub.f32 %v439, %v857
    %v922 = vsub.f32 %v442, %v858
    %v923 = vsub.f32 %v447, %v859
    %v924 = vsub.f32 %v450, %v860
    %v925 = vsub.f32 %v455, %v861
    %v926 = vsub.f32 %v458, %v862
    %v927 = vsub.f32 %v463, %v863
    %v928 = vsub.f32 %v466, %v864
    %v929 = vsub.f32 %v471, %v865
    %v930 = vsub.f32 %v474, %v866
    %v931 = vsub.f32 %v479, %v867
    %v932 = vsub.f32 %v482, %v868
    %v933 = vsub.f32 %v487, %v869
    %v934 = vsub.f32 %v490, %v870
    %v935 = vsub.f32 %v495, %v871
    %v936 = vsub.f32 %v498, %v872
    %v937 = vsub.f32 %v503, %v873
    %v938 = vsub.f32 %v506, %v874
    %v939 = vsub.f32 %v511, %v875
    %v940 = vsub.f32 %v514, %v876
    %v941 = vsub.f32 %v519, %v877
    %v942 = vsub.f32 %v522, %v878
    %v943 = vsub.f32 %v527, %v879
    %v944 = vsub.f32 %v530, %v880
    %v945 = vsub.f32 %v535, %v881
    %v946 = vsub.f32 %v538, %v882
    %v947 = vsub.f32 %v543, %v883
    %v948 = vsub.f32 %v546, %v884
    %v949 = vsub.f32 %v551, %v885
    %v950 = vsub.f32 %v554, %v886
    %v951 = vsub.f32 %v559, %v887
    %v952 = vsub.f32 %v562, %v888
    %v953 = vsub.f32 %v567, %v889
    %v954 = vsub.f32 %v570, %v890
    %v955 = vsub.f32 %v575, %v891
    %v956 = vsub.f32 %v578, %v892
    %v957 = vsub.f32 %v583, %v893
    %v958 = vsub.f32 %v586, %v894
    %v959 = vsub.f32 %v591, %v895
    %v960 = vsub.f32 %v594, %v896
    %v961 = vsub.f32 %v599, %v897
    %v962 = vsub.f32 %v602, %v898
    %v963 = vsub.f32 %v607, %v899
    %v964 = vsub.f32 %v610, %v900
    %v965 = vsub.f32 %v615, %v901
    %v966 = vsub.f32 %v618, %v902
    %v967 = vsub.f32 %v623, %v903
    %v968 = vsub.f32 %v626, %v904
    %v969 = vsub.f32 %v631, %v905
    %v970 = vsub.f32 %v634, %v906
    %v971 = vsub.f32 %v639, %v907
    %v972 = vsub.f32 %v642, %v908
    %v973 = vsub.f32 %v647, %v909
    %v974 = vsub.f32 %v650, %v910
    %v975 = vmul.f32 %v911, %v911
    %v976 = vmul.f32 %v912, %v912
    %v977 = vmul.f32 %v913, %v913
    %v978 = vmul.f32 %v914, %v914
    %v979 = vmul.f32 %v915, %v915
    %v980 = vmul.f32 %v916, %v916
    %v981 = vmul.f32 %v917, %v917
    %v982 = vmul.f32 %v918, %v918
    %v983 = vmul.f32 %v919, %v919
    %v984 = vmul.f32 %v920, %v920
    %v985 = vmul.f32 %v921, %v921
    %v986 = vmul.f32 %v922, %v922
    %v987 = vmul.f32 %v923, %v923
    %v988 = vmul.f32 %v924, %v924
    %v989 = vmul.f32 %v925, %v925
    %v990 = vmul.f32 %v926, %v926
    %v991 = vmul.f32 %v927, %v927
    %v992 = vmul.f32 %v928, %v928
    %v993 = vmul.f32 %v929, %v929
    %v994 = vmul.f32 %v930, %v930
    %v995 = vmul.f32 %v931, %v931
    %v996 = vmul.f32 %v932, %v932
    %v997 = vmul.f32 %v933, %v933
    %v998 = vmul.f32 %v934, %v934
    %v999 = vmul.f32 %v935, %v935
    %v1000 = vmul.f32 %v936, %v936
    %v1001 = vmul.f32 %v937, %v937
    %v1002 = vmul.f32 %v938, %v938
    %v1003 = vmul.f32 %v939, %v939
    %v1004 = vmul.f32 %v940, %v940
    %v1005 = vmul.f32 %v941, %v941
    %v1006 = vmul.f32 %v942, %v942
    %v1007 = vmul.f32 %v943, %v943
    %v1008 = vmul.f32 %v944, %v944
    %v1009 = vmul.f32 %v945, %v945
    %v1010 = vmul.f32 %v946, %v946
    %v1011 = vmul.f32 %v947, %v947
    %v1012 = vmul.f32 %v948, %v948
    %v1013 = vmul.f32 %v949, %v949
    %v1014 = vmul.f32 %v950, %v950
    %v1015 = vmul.f32 %v951, %v951
    %v1016 = vmul.f32 %v952, %v952
    %v1017 = vmul.f32 %v953, %v953
    %v1018 = vmul.f32 %v954, %v954
    %v1019 = vmul.f32 %v955, %v955
    %v1020 = vmul.f32 %v956, %v956
    %v1021 = vmul.f32 %v957, %v957
    %v1022 = vmul.f32 %v958, %v958
    %v1023 = vmul.f32 %v959, %v959
    %v1024 = vmul.f32 %v960, %v960
    %v1025 = vmul.f32 %v961, %v961
    %v1026 = vmul.f32 %v962, %v962
    %v1027 = vmul.f32 %v963, %v963
    %v1028 = vmul.f32 %v964, %v964
    %v1029 = vmul.f32 %v965, %v965
    %v1030 = vmul.f32 %v966, %v966
    %v1031 = vmul.f32 %v967, %v967
    %v1032 = vmul.f32 %v968, %v968
    %v1033 = vmul.f32 %v969, %v969
    %v1034 = vmul.f32 %v970, %v970
    %v1035 = vmul.f32 %v971, %v971
    %v1036 = vmul.f32 %v972, %v972
    %v1037 = vmul.f32 %v973, %v973
    %v1038 = vmul.f32 %v974, %v974
    %v1039 = vsel %vm653, %v975, 0.0
    %1040 = vadd.xlane.f32.xlu0 %v1039
    %v1041 = vpop.xlane.xlu0 %1040
    %v1042 = vsel %vm653, %v976, 0.0
    %1043 = vadd.xlane.f32.xlu0 %v1042
    %v1044 = vpop.xlane.xlu0 %1043
    %v1045 = vsel %vm653, %v977, 0.0
    %1046 = vadd.xlane.f32.xlu0 %v1045
    %v1047 = vpop.xlane.xlu0 %1046
    %v1048 = vsel %vm653, %v978, 0.0
    %1049 = vadd.xlane.f32.xlu0 %v1048
    %v1050 = vpop.xlane.xlu0 %1049
    %v1051 = vsel %vm653, %v979, 0.0
    %1052 = vadd.xlane.f32.xlu0 %v1051
    %v1053 = vpop.xlane.xlu0 %1052
    %v1054 = vsel %vm653, %v980, 0.0
    %1055 = vadd.xlane.f32.xlu0 %v1054
    %v1056 = vpop.xlane.xlu0 %1055
    %v1057 = vsel %vm653, %v981, 0.0
    %1058 = vadd.xlane.f32.xlu0 %v1057
    %v1059 = vpop.xlane.xlu0 %1058
    %v1060 = vsel %vm653, %v982, 0.0
    %1061 = vadd.xlane.f32.xlu0 %v1060
    %v1062 = vpop.xlane.xlu0 %1061
    %v1063 = vsel %vm653, %v983, 0.0
    %1064 = vadd.xlane.f32.xlu0 %v1063
    %v1065 = vpop.xlane.xlu0 %1064
    %v1066 = vsel %vm653, %v984, 0.0
    %1067 = vadd.xlane.f32.xlu0 %v1066
    %v1068 = vpop.xlane.xlu0 %1067
    %v1069 = vsel %vm653, %v985, 0.0
    %1070 = vadd.xlane.f32.xlu0 %v1069
    %v1071 = vpop.xlane.xlu0 %1070
    %v1072 = vsel %vm653, %v986, 0.0
    %1073 = vadd.xlane.f32.xlu0 %v1072
    %v1074 = vpop.xlane.xlu0 %1073
    %v1075 = vsel %vm653, %v987, 0.0
    %1076 = vadd.xlane.f32.xlu0 %v1075
    %v1077 = vpop.xlane.xlu0 %1076
    %v1078 = vsel %vm653, %v988, 0.0
    %1079 = vadd.xlane.f32.xlu0 %v1078
    %v1080 = vpop.xlane.xlu0 %1079
    %v1081 = vsel %vm653, %v989, 0.0
    %1082 = vadd.xlane.f32.xlu0 %v1081
    %v1083 = vpop.xlane.xlu0 %1082
    %v1084 = vsel %vm653, %v990, 0.0
    %1085 = vadd.xlane.f32.xlu0 %v1084
    %v1086 = vpop.xlane.xlu0 %1085
    %v1087 = vsel %vm653, %v991, 0.0
    %1088 = vadd.xlane.f32.xlu0 %v1087
    %v1089 = vpop.xlane.xlu0 %1088
    %v1090 = vsel %vm653, %v992, 0.0
    %1091 = vadd.xlane.f32.xlu0 %v1090
    %v1092 = vpop.xlane.xlu0 %1091
    %v1093 = vsel %vm653, %v993, 0.0
    %1094 = vadd.xlane.f32.xlu0 %v1093
    %v1095 = vpop.xlane.xlu0 %1094
    %v1096 = vsel %vm653, %v994, 0.0
    %1097 = vadd.xlane.f32.xlu0 %v1096
    %v1098 = vpop.xlane.xlu0 %1097
    %v1099 = vsel %vm653, %v995, 0.0
    %1100 = vadd.xlane.f32.xlu0 %v1099
    %v1101 = vpop.xlane.xlu0 %1100
    %v1102 = vsel %vm653, %v996, 0.0
    %1103 = vadd.xlane.f32.xlu0 %v1102
    %v1104 = vpop.xlane.xlu0 %1103
    %v1105 = vsel %vm653, %v997, 0.0
    %1106 = vadd.xlane.f32.xlu0 %v1105
    %v1107 = vpop.xlane.xlu0 %1106
    %v1108 = vsel %vm653, %v998, 0.0
    %1109 = vadd.xlane.f32.xlu0 %v1108
    %v1110 = vpop.xlane.xlu0 %1109
    %v1111 = vsel %vm653, %v999, 0.0
    %1112 = vadd.xlane.f32.xlu0 %v1111
    %v1113 = vpop.xlane.xlu0 %1112
    %v1114 = vsel %vm653, %v1000, 0.0
    %1115 = vadd.xlane.f32.xlu0 %v1114
    %v1116 = vpop.xlane.xlu0 %1115
    %v1117 = vsel %vm653, %v1001, 0.0
    %1118 = vadd.xlane.f32.xlu0 %v1117
    %v1119 = vpop.xlane.xlu0 %1118
    %v1120 = vsel %vm653, %v1002, 0.0
    %1121 = vadd.xlane.f32.xlu0 %v1120
    %v1122 = vpop.xlane.xlu0 %1121
    %v1123 = vsel %vm653, %v1003, 0.0
    %1124 = vadd.xlane.f32.xlu0 %v1123
    %v1125 = vpop.xlane.xlu0 %1124
    %v1126 = vsel %vm653, %v1004, 0.0
    %1127 = vadd.xlane.f32.xlu0 %v1126
    %v1128 = vpop.xlane.xlu0 %1127
    %v1129 = vsel %vm653, %v1005, 0.0
    %1130 = vadd.xlane.f32.xlu0 %v1129
    %v1131 = vpop.xlane.xlu0 %1130
    %v1132 = vsel %vm653, %v1006, 0.0
    %1133 = vadd.xlane.f32.xlu0 %v1132
    %v1134 = vpop.xlane.xlu0 %1133
    %v1135 = vsel %vm653, %v1007, 0.0
    %1136 = vadd.xlane.f32.xlu0 %v1135
    %v1137 = vpop.xlane.xlu0 %1136
    %v1138 = vsel %vm653, %v1008, 0.0
    %1139 = vadd.xlane.f32.xlu0 %v1138
    %v1140 = vpop.xlane.xlu0 %1139
    %v1141 = vsel %vm653, %v1009, 0.0
    %1142 = vadd.xlane.f32.xlu0 %v1141
    %v1143 = vpop.xlane.xlu0 %1142
    %v1144 = vsel %vm653, %v1010, 0.0
    %1145 = vadd.xlane.f32.xlu0 %v1144
    %v1146 = vpop.xlane.xlu0 %1145
    %v1147 = vsel %vm653, %v1011, 0.0
    %1148 = vadd.xlane.f32.xlu0 %v1147
    %v1149 = vpop.xlane.xlu0 %1148
    %v1150 = vsel %vm653, %v1012, 0.0
    %1151 = vadd.xlane.f32.xlu0 %v1150
    %v1152 = vpop.xlane.xlu0 %1151
    %v1153 = vsel %vm653, %v1013, 0.0
    %1154 = vadd.xlane.f32.xlu0 %v1153
    %v1155 = vpop.xlane.xlu0 %1154
    %v1156 = vsel %vm653, %v1014, 0.0
    %1157 = vadd.xlane.f32.xlu0 %v1156
    %v1158 = vpop.xlane.xlu0 %1157
    %v1159 = vsel %vm653, %v1015, 0.0
    %1160 = vadd.xlane.f32.xlu0 %v1159
    %v1161 = vpop.xlane.xlu0 %1160
    %v1162 = vsel %vm653, %v1016, 0.0
    %1163 = vadd.xlane.f32.xlu0 %v1162
    %v1164 = vpop.xlane.xlu0 %1163
    %v1165 = vsel %vm653, %v1017, 0.0
    %1166 = vadd.xlane.f32.xlu0 %v1165
    %v1167 = vpop.xlane.xlu0 %1166
    %v1168 = vsel %vm653, %v1018, 0.0
    %1169 = vadd.xlane.f32.xlu0 %v1168
    %v1170 = vpop.xlane.xlu0 %1169
    %v1171 = vsel %vm653, %v1019, 0.0
    %1172 = vadd.xlane.f32.xlu0 %v1171
    %v1173 = vpop.xlane.xlu0 %1172
    %v1174 = vsel %vm653, %v1020, 0.0
    %1175 = vadd.xlane.f32.xlu0 %v1174
    %v1176 = vpop.xlane.xlu0 %1175
    %v1177 = vsel %vm653, %v1021, 0.0
    %1178 = vadd.xlane.f32.xlu0 %v1177
    %v1179 = vpop.xlane.xlu0 %1178
    %v1180 = vsel %vm653, %v1022, 0.0
    %1181 = vadd.xlane.f32.xlu0 %v1180
    %v1182 = vpop.xlane.xlu0 %1181
    %v1183 = vsel %vm653, %v1023, 0.0
    %1184 = vadd.xlane.f32.xlu0 %v1183
    %v1185 = vpop.xlane.xlu0 %1184
    %v1186 = vsel %vm653, %v1024, 0.0
    %1187 = vadd.xlane.f32.xlu0 %v1186
    %v1188 = vpop.xlane.xlu0 %1187
    %v1189 = vsel %vm653, %v1025, 0.0
    %1190 = vadd.xlane.f32.xlu0 %v1189
    %v1191 = vpop.xlane.xlu0 %1190
    %v1192 = vsel %vm653, %v1026, 0.0
    %1193 = vadd.xlane.f32.xlu0 %v1192
    %v1194 = vpop.xlane.xlu0 %1193
    %v1195 = vsel %vm653, %v1027, 0.0
    %1196 = vadd.xlane.f32.xlu0 %v1195
    %v1197 = vpop.xlane.xlu0 %1196
    %v1198 = vsel %vm653, %v1028, 0.0
    %1199 = vadd.xlane.f32.xlu0 %v1198
    %v1200 = vpop.xlane.xlu0 %1199
    %v1201 = vsel %vm653, %v1029, 0.0
    %1202 = vadd.xlane.f32.xlu0 %v1201
    %v1203 = vpop.xlane.xlu0 %1202
    %v1204 = vsel %vm653, %v1030, 0.0
    %1205 = vadd.xlane.f32.xlu0 %v1204
    %v1206 = vpop.xlane.xlu0 %1205
    %v1207 = vsel %vm653, %v1031, 0.0
    %1208 = vadd.xlane.f32.xlu0 %v1207
    %v1209 = vpop.xlane.xlu0 %1208
    %v1210 = vsel %vm653, %v1032, 0.0
    %1211 = vadd.xlane.f32.xlu0 %v1210
    %v1212 = vpop.xlane.xlu0 %1211
    %v1213 = vsel %vm653, %v1033, 0.0
    %1214 = vadd.xlane.f32.xlu0 %v1213
    %v1215 = vpop.xlane.xlu0 %1214
    %v1216 = vsel %vm653, %v1034, 0.0
    %1217 = vadd.xlane.f32.xlu0 %v1216
    %v1218 = vpop.xlane.xlu0 %1217
    %v1219 = vsel %vm653, %v1035, 0.0
    %1220 = vadd.xlane.f32.xlu0 %v1219
    %v1221 = vpop.xlane.xlu0 %1220
    %v1222 = vsel %vm653, %v1036, 0.0
    %1223 = vadd.xlane.f32.xlu0 %v1222
    %v1224 = vpop.xlane.xlu0 %1223
    %v1225 = vsel %vm653, %v1037, 0.0
    %1226 = vadd.xlane.f32.xlu0 %v1225
    %v1227 = vpop.xlane.xlu0 %1226
    %v1228 = vsel %vm653, %v1038, 0.0
    %1229 = vadd.xlane.f32.xlu0 %v1228
    %v1230 = vpop.xlane.xlu0 %1229
    %v1231 = vmul.f32 %v1041, %v846
    %v1232 = vmul.f32 %v1044, %v846
    %v1233 = vmul.f32 %v1047, %v846
    %v1234 = vmul.f32 %v1050, %v846
    %v1235 = vmul.f32 %v1053, %v846
    %v1236 = vmul.f32 %v1056, %v846
    %v1237 = vmul.f32 %v1059, %v846
    %v1238 = vmul.f32 %v1062, %v846
    %v1239 = vmul.f32 %v1065, %v846
    %v1240 = vmul.f32 %v1068, %v846
    %v1241 = vmul.f32 %v1071, %v846
    %v1242 = vmul.f32 %v1074, %v846
    %v1243 = vmul.f32 %v1077, %v846
    %v1244 = vmul.f32 %v1080, %v846
    %v1245 = vmul.f32 %v1083, %v846
    %v1246 = vmul.f32 %v1086, %v846
    %v1247 = vmul.f32 %v1089, %v846
    %v1248 = vmul.f32 %v1092, %v846
    %v1249 = vmul.f32 %v1095, %v846
    %v1250 = vmul.f32 %v1098, %v846
    %v1251 = vmul.f32 %v1101, %v846
    %v1252 = vmul.f32 %v1104, %v846
    %v1253 = vmul.f32 %v1107, %v846
    %v1254 = vmul.f32 %v1110, %v846
    %v1255 = vmul.f32 %v1113, %v846
    %v1256 = vmul.f32 %v1116, %v846
    %v1257 = vmul.f32 %v1119, %v846
    %v1258 = vmul.f32 %v1122, %v846
    %v1259 = vmul.f32 %v1125, %v846
    %v1260 = vmul.f32 %v1128, %v846
    %v1261 = vmul.f32 %v1131, %v846
    %v1262 = vmul.f32 %v1134, %v846
    %v1263 = vmul.f32 %v1137, %v846
    %v1264 = vmul.f32 %v1140, %v846
    %v1265 = vmul.f32 %v1143, %v846
    %v1266 = vmul.f32 %v1146, %v846
    %v1267 = vmul.f32 %v1149, %v846
    %v1268 = vmul.f32 %v1152, %v846
    %v1269 = vmul.f32 %v1155, %v846
    %v1270 = vmul.f32 %v1158, %v846
    %v1271 = vmul.f32 %v1161, %v846
    %v1272 = vmul.f32 %v1164, %v846
    %v1273 = vmul.f32 %v1167, %v846
    %v1274 = vmul.f32 %v1170, %v846
    %v1275 = vmul.f32 %v1173, %v846
    %v1276 = vmul.f32 %v1176, %v846
    %v1277 = vmul.f32 %v1179, %v846
    %v1278 = vmul.f32 %v1182, %v846
    %v1279 = vmul.f32 %v1185, %v846
    %v1280 = vmul.f32 %v1188, %v846
    %v1281 = vmul.f32 %v1191, %v846
    %v1282 = vmul.f32 %v1194, %v846
    %v1283 = vmul.f32 %v1197, %v846
    %v1284 = vmul.f32 %v1200, %v846
    %v1285 = vmul.f32 %v1203, %v846
    %v1286 = vmul.f32 %v1206, %v846
    %v1287 = vmul.f32 %v1209, %v846
    %v1288 = vmul.f32 %v1212, %v846
    %v1289 = vmul.f32 %v1215, %v846
    %v1290 = vmul.f32 %v1218, %v846
    %v1291 = vmul.f32 %v1221, %v846
    %v1292 = vmul.f32 %v1224, %v846
    %v1293 = vmul.f32 %v1227, %v846
    %v1294 = vmul.f32 %v1230, %v846
    %v1295 = vadd.f32 %v1231, 1e-05
    %v1296 = vadd.f32 %v1232, 1e-05
    %v1297 = vadd.f32 %v1233, 1e-05
    %v1298 = vadd.f32 %v1234, 1e-05
    %v1299 = vadd.f32 %v1235, 1e-05
    %v1300 = vadd.f32 %v1236, 1e-05
    %v1301 = vadd.f32 %v1237, 1e-05
    %v1302 = vadd.f32 %v1238, 1e-05
    %v1303 = vadd.f32 %v1239, 1e-05
    %v1304 = vadd.f32 %v1240, 1e-05
    %v1305 = vadd.f32 %v1241, 1e-05
    %v1306 = vadd.f32 %v1242, 1e-05
    %v1307 = vadd.f32 %v1243, 1e-05
    %v1308 = vadd.f32 %v1244, 1e-05
    %v1309 = vadd.f32 %v1245, 1e-05
    %v1310 = vadd.f32 %v1246, 1e-05
    %v1311 = vadd.f32 %v1247, 1e-05
    %v1312 = vadd.f32 %v1248, 1e-05
    %v1313 = vadd.f32 %v1249, 1e-05
    %v1314 = vadd.f32 %v1250, 1e-05
    %v1315 = vadd.f32 %v1251, 1e-05
    %v1316 = vadd.f32 %v1252, 1e-05
    %v1317 = vadd.f32 %v1253, 1e-05
    %v1318 = vadd.f32 %v1254, 1e-05
    %v1319 = vadd.f32 %v1255, 1e-05
    %v1320 = vadd.f32 %v1256, 1e-05
    %v1321 = vadd.f32 %v1257, 1e-05
    %v1322 = vadd.f32 %v1258, 1e-05
    %v1323 = vadd.f32 %v1259, 1e-05
    %v1324 = vadd.f32 %v1260, 1e-05
    %v1325 = vadd.f32 %v1261, 1e-05
    %v1326 = vadd.f32 %v1262, 1e-05
    %v1327 = vadd.f32 %v1263, 1e-05
    %v1328 = vadd.f32 %v1264, 1e-05
    %v1329 = vadd.f32 %v1265, 1e-05
    %v1330 = vadd.f32 %v1266, 1e-05
    %v1331 = vadd.f32 %v1267, 1e-05
    %v1332 = vadd.f32 %v1268, 1e-05
    %v1333 = vadd.f32 %v1269, 1e-05
    %v1334 = vadd.f32 %v1270, 1e-05
    %v1335 = vadd.f32 %v1271, 1e-05
    %v1336 = vadd.f32 %v1272, 1e-05
    %v1337 = vadd.f32 %v1273, 1e-05
    %v1338 = vadd.f32 %v1274, 1e-05
    %v1339 = vadd.f32 %v1275, 1e-05
    %v1340 = vadd.f32 %v1276, 1e-05
    %v1341 = vadd.f32 %v1277, 1e-05
    %v1342 = vadd.f32 %v1278, 1e-05
    %v1343 = vadd.f32 %v1279, 1e-05
    %v1344 = vadd.f32 %v1280, 1e-05
    %v1345 = vadd.f32 %v1281, 1e-05
    %v1346 = vadd.f32 %v1282, 1e-05
    %v1347 = vadd.f32 %v1283, 1e-05
    %v1348 = vadd.f32 %v1284, 1e-05
    %v1349 = vadd.f32 %v1285, 1e-05
    %v1350 = vadd.f32 %v1286, 1e-05
    %v1351 = vadd.f32 %v1287, 1e-05
    %v1352 = vadd.f32 %v1288, 1e-05
    %v1353 = vadd.f32 %v1289, 1e-05
    %v1354 = vadd.f32 %v1290, 1e-05
    %v1355 = vadd.f32 %v1291, 1e-05
    %v1356 = vadd.f32 %v1292, 1e-05
    %v1357 = vadd.f32 %v1293, 1e-05
    %v1358 = vadd.f32 %v1294, 1e-05
    %v1359 = vrsqrt.pop %v1295
    %v1360 = vrsqrt.pop %v1296
    %v1361 = vrsqrt.pop %v1297
    %v1362 = vrsqrt.pop %v1298
    %v1363 = vrsqrt.pop %v1299
    %v1364 = vrsqrt.pop %v1300
    %v1365 = vrsqrt.pop %v1301
    %v1366 = vrsqrt.pop %v1302
    %v1367 = vrsqrt.pop %v1303
    %v1368 = vrsqrt.pop %v1304
    %v1369 = vrsqrt.pop %v1305
    %v1370 = vrsqrt.pop %v1306
    %v1371 = vrsqrt.pop %v1307
    %v1372 = vrsqrt.pop %v1308
    %v1373 = vrsqrt.pop %v1309
    %v1374 = vrsqrt.pop %v1310
    %v1375 = vrsqrt.pop %v1311
    %v1376 = vrsqrt.pop %v1312
    %v1377 = vrsqrt.pop %v1313
    %v1378 = vrsqrt.pop %v1314
    %v1379 = vrsqrt.pop %v1315
    %v1380 = vrsqrt.pop %v1316
    %v1381 = vrsqrt.pop %v1317
    %v1382 = vrsqrt.pop %v1318
    %v1383 = vrsqrt.pop %v1319
    %v1384 = vrsqrt.pop %v1320
    %v1385 = vrsqrt.pop %v1321
    %v1386 = vrsqrt.pop %v1322
    %v1387 = vrsqrt.pop %v1323
    %v1388 = vrsqrt.pop %v1324
    %v1389 = vrsqrt.pop %v1325
    %v1390 = vrsqrt.pop %v1326
    %v1391 = vrsqrt.pop %v1327
    %v1392 = vrsqrt.pop %v1328
    %v1393 = vrsqrt.pop %v1329
    %v1394 = vrsqrt.pop %v1330
    %v1395 = vrsqrt.pop %v1331
    %v1396 = vrsqrt.pop %v1332
    %v1397 = vrsqrt.pop %v1333
    %v1398 = vrsqrt.pop %v1334
    %v1399 = vrsqrt.pop %v1335
    %v1400 = vrsqrt.pop %v1336
    %v1401 = vrsqrt.pop %v1337
    %v1402 = vrsqrt.pop %v1338
    %v1403 = vrsqrt.pop %v1339
    %v1404 = vrsqrt.pop %v1340
    %v1405 = vrsqrt.pop %v1341
    %v1406 = vrsqrt.pop %v1342
    %v1407 = vrsqrt.pop %v1343
    %v1408 = vrsqrt.pop %v1344
    %v1409 = vrsqrt.pop %v1345
    %v1410 = vrsqrt.pop %v1346
    %v1411 = vrsqrt.pop %v1347
    %v1412 = vrsqrt.pop %v1348
    %v1413 = vrsqrt.pop %v1349
    %v1414 = vrsqrt.pop %v1350
    %v1415 = vrsqrt.pop %v1351
    %v1416 = vrsqrt.pop %v1352
    %v1417 = vrsqrt.pop %v1353
    %v1418 = vrsqrt.pop %v1354
    %v1419 = vrsqrt.pop %v1355
    %v1420 = vrsqrt.pop %v1356
    %v1421 = vrsqrt.pop %v1357
    %v1422 = vrsqrt.pop %v1358
    %v1423 = vmul.f32 %v911, %v1359
    %v1424 = vmul.f32 %v912, %v1360
    %v1425 = vmul.f32 %v913, %v1361
    %v1426 = vmul.f32 %v914, %v1362
    %v1427 = vmul.f32 %v915, %v1363
    %v1428 = vmul.f32 %v916, %v1364
    %v1429 = vmul.f32 %v917, %v1365
    %v1430 = vmul.f32 %v918, %v1366
    %v1431 = vmul.f32 %v919, %v1367
    %v1432 = vmul.f32 %v920, %v1368
    %v1433 = vmul.f32 %v921, %v1369
    %v1434 = vmul.f32 %v922, %v1370
    %v1435 = vmul.f32 %v923, %v1371
    %v1436 = vmul.f32 %v924, %v1372
    %v1437 = vmul.f32 %v925, %v1373
    %v1438 = vmul.f32 %v926, %v1374
    %v1439 = vmul.f32 %v927, %v1375
    %v1440 = vmul.f32 %v928, %v1376
    %v1441 = vmul.f32 %v929, %v1377
    %v1442 = vmul.f32 %v930, %v1378
    %v1443 = vmul.f32 %v931, %v1379
    %v1444 = vmul.f32 %v932, %v1380
    %v1445 = vmul.f32 %v933, %v1381
    %v1446 = vmul.f32 %v934, %v1382
    %v1447 = vmul.f32 %v935, %v1383
    %v1448 = vmul.f32 %v936, %v1384
    %v1449 = vmul.f32 %v937, %v1385
    %v1450 = vmul.f32 %v938, %v1386
    %v1451 = vmul.f32 %v939, %v1387
    %v1452 = vmul.f32 %v940, %v1388
    %v1453 = vmul.f32 %v941, %v1389
    %v1454 = vmul.f32 %v942, %v1390
    %v1455 = vmul.f32 %v943, %v1391
    %v1456 = vmul.f32 %v944, %v1392
    %v1457 = vmul.f32 %v945, %v1393
    %v1458 = vmul.f32 %v946, %v1394
    %v1459 = vmul.f32 %v947, %v1395
    %v1460 = vmul.f32 %v948, %v1396
    %v1461 = vmul.f32 %v949, %v1397
    %v1462 = vmul.f32 %v950, %v1398
    %v1463 = vmul.f32 %v951, %v1399
    %v1464 = vmul.f32 %v952, %v1400
    %v1465 = vmul.f32 %v953, %v1401
    %v1466 = vmul.f32 %v954, %v1402
    %v1467 = vmul.f32 %v955, %v1403
    %v1468 = vmul.f32 %v956, %v1404
    %v1469 = vmul.f32 %v957, %v1405
    %v1470 = vmul.f32 %v958, %v1406
    %v1471 = vmul.f32 %v959, %v1407
    %v1472 = vmul.f32 %v960, %v1408
    %v1473 = vmul.f32 %v961, %v1409
    %v1474 = vmul.f32 %v962, %v1410
    %v1475 = vmul.f32 %v963, %v1411
    %v1476 = vmul.f32 %v964, %v1412
    %v1477 = vmul.f32 %v965, %v1413
    %v1478 = vmul.f32 %v966, %v1414
    %v1479 = vmul.f32 %v967, %v1415
    %v1480 = vmul.f32 %v968, %v1416
    %v1481 = vmul.f32 %v969, %v1417
    %v1482 = vmul.f32 %v970, %v1418
    %v1483 = vmul.f32 %v971, %v1419
    %v1484 = vmul.f32 %v972, %v1420
    %v1485 = vmul.f32 %v973, %v1421
    %v1486 = vmul.f32 %v974, %v1422
    %v1487 = vlaneseq
    %v1488 = vshrl.u32 %v1487, 7
    %v1489 = vsub.s32 1, %v1488
    %v1490 = vrot.slane %v22, %v1489
    %v1491 = vmul.f32 %v1423, %v1490
    %v1492 = vmul.f32 %v1424, %v1490
    %v1493 = vmul.f32 %v1425, %v1490
    %v1494 = vmul.f32 %v1426, %v1490
    %v1495 = vmul.f32 %v1427, %v1490
    %v1496 = vmul.f32 %v1428, %v1490
    %v1497 = vmul.f32 %v1429, %v1490
    %v1498 = vmul.f32 %v1430, %v1490
    %v1499 = vmul.f32 %v1431, %v1490
    %v1500 = vmul.f32 %v1432, %v1490
    %v1501 = vmul.f32 %v1433, %v1490
    %v1502 = vmul.f32 %v1434, %v1490
    %v1503 = vmul.f32 %v1435, %v1490
    %v1504 = vmul.f32 %v1436, %v1490
    %v1505 = vmul.f32 %v1437, %v1490
    %v1506 = vmul.f32 %v1438, %v1490
    %v1507 = vmul.f32 %v1439, %v1490
    %v1508 = vmul.f32 %v1440, %v1490
    %v1509 = vmul.f32 %v1441, %v1490
    %v1510 = vmul.f32 %v1442, %v1490
    %v1511 = vmul.f32 %v1443, %v1490
    %v1512 = vmul.f32 %v1444, %v1490
    %v1513 = vmul.f32 %v1445, %v1490
    %v1514 = vmul.f32 %v1446, %v1490
    %v1515 = vmul.f32 %v1447, %v1490
    %v1516 = vmul.f32 %v1448, %v1490
    %v1517 = vmul.f32 %v1449, %v1490
    %v1518 = vmul.f32 %v1450, %v1490
    %v1519 = vmul.f32 %v1451, %v1490
    %v1520 = vmul.f32 %v1452, %v1490
    %v1521 = vmul.f32 %v1453, %v1490
    %v1522 = vmul.f32 %v1454, %v1490
    %v1523 = vmul.f32 %v1455, %v1490
    %v1524 = vmul.f32 %v1456, %v1490
    %v1525 = vmul.f32 %v1457, %v1490
    %v1526 = vmul.f32 %v1458, %v1490
    %v1527 = vmul.f32 %v1459, %v1490
    %v1528 = vmul.f32 %v1460, %v1490
    %v1529 = vmul.f32 %v1461, %v1490
    %v1530 = vmul.f32 %v1462, %v1490
    %v1531 = vmul.f32 %v1463, %v1490
    %v1532 = vmul.f32 %v1464, %v1490
    %v1533 = vmul.f32 %v1465, %v1490
    %v1534 = vmul.f32 %v1466, %v1490
    %v1535 = vmul.f32 %v1467, %v1490
    %v1536 = vmul.f32 %v1468, %v1490
    %v1537 = vmul.f32 %v1469, %v1490
    %v1538 = vmul.f32 %v1470, %v1490
    %v1539 = vmul.f32 %v1471, %v1490
    %v1540 = vmul.f32 %v1472, %v1490
    %v1541 = vmul.f32 %v1473, %v1490
    %v1542 = vmul.f32 %v1474, %v1490
    %v1543 = vmul.f32 %v1475, %v1490
    %v1544 = vmul.f32 %v1476, %v1490
    %v1545 = vmul.f32 %v1477, %v1490
    %v1546 = vmul.f32 %v1478, %v1490
    %v1547 = vmul.f32 %v1479, %v1490
    %v1548 = vmul.f32 %v1480, %v1490
    %v1549 = vmul.f32 %v1481, %v1490
    %v1550 = vmul.f32 %v1482, %v1490
    %v1551 = vmul.f32 %v1483, %v1490
    %v1552 = vmul.f32 %v1484, %v1490
    %v1553 = vmul.f32 %v1485, %v1490
    %v1554 = vmul.f32 %v1486, %v1490
    %v1555 = vlaneseq
    %v1556 = vshrl.u32 %v1555, 7
    %v1557 = vsub.s32 2, %v1556
    %v1558 = vrot.slane %v22, %v1557
    %v1559 = vadd.f32 %v1491, %v1558
    %v1560 = vadd.f32 %v1492, %v1558
    %v1561 = vadd.f32 %v1493, %v1558
    %v1562 = vadd.f32 %v1494, %v1558
    %v1563 = vadd.f32 %v1495, %v1558
    %v1564 = vadd.f32 %v1496, %v1558
    %v1565 = vadd.f32 %v1497, %v1558
    %v1566 = vadd.f32 %v1498, %v1558
    %v1567 = vadd.f32 %v1499, %v1558
    %v1568 = vadd.f32 %v1500, %v1558
    %v1569 = vadd.f32 %v1501, %v1558
    %v1570 = vadd.f32 %v1502, %v1558
    %v1571 = vadd.f32 %v1503, %v1558
    %v1572 = vadd.f32 %v1504, %v1558
    %v1573 = vadd.f32 %v1505, %v1558
    %v1574 = vadd.f32 %v1506, %v1558
    %v1575 = vadd.f32 %v1507, %v1558
    %v1576 = vadd.f32 %v1508, %v1558
    %v1577 = vadd.f32 %v1509, %v1558
    %v1578 = vadd.f32 %v1510, %v1558
    %v1579 = vadd.f32 %v1511, %v1558
    %v1580 = vadd.f32 %v1512, %v1558
    %v1581 = vadd.f32 %v1513, %v1558
    %v1582 = vadd.f32 %v1514, %v1558
    %v1583 = vadd.f32 %v1515, %v1558
    %v1584 = vadd.f32 %v1516, %v1558
    %v1585 = vadd.f32 %v1517, %v1558
    %v1586 = vadd.f32 %v1518, %v1558
    %v1587 = vadd.f32 %v1519, %v1558
    %v1588 = vadd.f32 %v1520, %v1558
    %v1589 = vadd.f32 %v1521, %v1558
    %v1590 = vadd.f32 %v1522, %v1558
    %v1591 = vadd.f32 %v1523, %v1558
    %v1592 = vadd.f32 %v1524, %v1558
    %v1593 = vadd.f32 %v1525, %v1558
    %v1594 = vadd.f32 %v1526, %v1558
    %v1595 = vadd.f32 %v1527, %v1558
    %v1596 = vadd.f32 %v1528, %v1558
    %v1597 = vadd.f32 %v1529, %v1558
    %v1598 = vadd.f32 %v1530, %v1558
    %v1599 = vadd.f32 %v1531, %v1558
    %v1600 = vadd.f32 %v1532, %v1558
    %v1601 = vadd.f32 %v1533, %v1558
    %v1602 = vadd.f32 %v1534, %v1558
    %v1603 = vadd.f32 %v1535, %v1558
    %v1604 = vadd.f32 %v1536, %v1558
    %v1605 = vadd.f32 %v1537, %v1558
    %v1606 = vadd.f32 %v1538, %v1558
    %v1607 = vadd.f32 %v1539, %v1558
    %v1608 = vadd.f32 %v1540, %v1558
    %v1609 = vadd.f32 %v1541, %v1558
    %v1610 = vadd.f32 %v1542, %v1558
    %v1611 = vadd.f32 %v1543, %v1558
    %v1612 = vadd.f32 %v1544, %v1558
    %v1613 = vadd.f32 %v1545, %v1558
    %v1614 = vadd.f32 %v1546, %v1558
    %v1615 = vadd.f32 %v1547, %v1558
    %v1616 = vadd.f32 %v1548, %v1558
    %v1617 = vadd.f32 %v1549, %v1558
    %v1618 = vadd.f32 %v1550, %v1558
    %v1619 = vadd.f32 %v1551, %v1558
    %v1620 = vadd.f32 %v1552, %v1558
    %v1621 = vadd.f32 %v1553, %v1558
    %v1622 = vadd.f32 %v1554, %v1558
    %v1623 = vmax.f32 %v1559, 0.0
    %v1624 = vmax.f32 %v1560, 0.0
    %v1625 = vmax.f32 %v1561, 0.0
    %v1626 = vmax.f32 %v1562, 0.0
    %v1627 = vmax.f32 %v1563, 0.0
    %v1628 = vmax.f32 %v1564, 0.0
    %v1629 = vmax.f32 %v1565, 0.0
    %v1630 = vmax.f32 %v1566, 0.0
    %v1631 = vmax.f32 %v1567, 0.0
    %v1632 = vmax.f32 %v1568, 0.0
    %v1633 = vmax.f32 %v1569, 0.0
    %v1634 = vmax.f32 %v1570, 0.0
    %v1635 = vmax.f32 %v1571, 0.0
    %v1636 = vmax.f32 %v1572, 0.0
    %v1637 = vmax.f32 %v1573, 0.0
    %v1638 = vmax.f32 %v1574, 0.0
    %v1639 = vmax.f32 %v1575, 0.0
    %v1640 = vmax.f32 %v1576, 0.0
    %v1641 = vmax.f32 %v1577, 0.0
    %v1642 = vmax.f32 %v1578, 0.0
    %v1643 = vmax.f32 %v1579, 0.0
    %v1644 = vmax.f32 %v1580, 0.0
    %v1645 = vmax.f32 %v1581, 0.0
    %v1646 = vmax.f32 %v1582, 0.0
    %v1647 = vmax.f32 %v1583, 0.0
    %v1648 = vmax.f32 %v1584, 0.0
    %v1649 = vmax.f32 %v1585, 0.0
    %v1650 = vmax.f32 %v1586, 0.0
    %v1651 = vmax.f32 %v1587, 0.0
    %v1652 = vmax.f32 %v1588, 0.0
    %v1653 = vmax.f32 %v1589, 0.0
    %v1654 = vmax.f32 %v1590, 0.0
    %v1655 = vmax.f32 %v1591, 0.0
    %v1656 = vmax.f32 %v1592, 0.0
    %v1657 = vmax.f32 %v1593, 0.0
    %v1658 = vmax.f32 %v1594, 0.0
    %v1659 = vmax.f32 %v1595, 0.0
    %v1660 = vmax.f32 %v1596, 0.0
    %v1661 = vmax.f32 %v1597, 0.0
    %v1662 = vmax.f32 %v1598, 0.0
    %v1663 = vmax.f32 %v1599, 0.0
    %v1664 = vmax.f32 %v1600, 0.0
    %v1665 = vmax.f32 %v1601, 0.0
    %v1666 = vmax.f32 %v1602, 0.0
    %v1667 = vmax.f32 %v1603, 0.0
    %v1668 = vmax.f32 %v1604, 0.0
    %v1669 = vmax.f32 %v1605, 0.0
    %v1670 = vmax.f32 %v1606, 0.0
    %v1671 = vmax.f32 %v1607, 0.0
    %v1672 = vmax.f32 %v1608, 0.0
    %v1673 = vmax.f32 %v1609, 0.0
    %v1674 = vmax.f32 %v1610, 0.0
    %v1675 = vmax.f32 %v1611, 0.0
    %v1676 = vmax.f32 %v1612, 0.0
    %v1677 = vmax.f32 %v1613, 0.0
    %v1678 = vmax.f32 %v1614, 0.0
    %v1679 = vmax.f32 %v1615, 0.0
    %v1680 = vmax.f32 %v1616, 0.0
    %v1681 = vmax.f32 %v1617, 0.0
    %v1682 = vmax.f32 %v1618, 0.0
    %v1683 = vmax.f32 %v1619, 0.0
    %v1684 = vmax.f32 %v1620, 0.0
    %v1685 = vmax.f32 %v1621, 0.0
    %v1686 = vmax.f32 %v1622, 0.0
    %v1687 = vpack.c.bf16 %v1624, %v1623
    %v1688 = vpack.c.bf16 %v1626, %v1625
    %v1689 = vpack.c.bf16 %v1628, %v1627
    %v1690 = vpack.c.bf16 %v1630, %v1629
    %v1691 = vpack.c.bf16 %v1632, %v1631
    %v1692 = vpack.c.bf16 %v1634, %v1633
    %v1693 = vpack.c.bf16 %v1636, %v1635
    %v1694 = vpack.c.bf16 %v1638, %v1637
    %v1695 = vpack.c.bf16 %v1640, %v1639
    %v1696 = vpack.c.bf16 %v1642, %v1641
    %v1697 = vpack.c.bf16 %v1644, %v1643
    %v1698 = vpack.c.bf16 %v1646, %v1645
    %v1699 = vpack.c.bf16 %v1648, %v1647
    %v1700 = vpack.c.bf16 %v1650, %v1649
    %v1701 = vpack.c.bf16 %v1652, %v1651
    %v1702 = vpack.c.bf16 %v1654, %v1653
    %v1703 = vpack.c.bf16 %v1656, %v1655
    %v1704 = vpack.c.bf16 %v1658, %v1657
    %v1705 = vpack.c.bf16 %v1660, %v1659
    %v1706 = vpack.c.bf16 %v1662, %v1661
    %v1707 = vpack.c.bf16 %v1664, %v1663
    %v1708 = vpack.c.bf16 %v1666, %v1665
    %v1709 = vpack.c.bf16 %v1668, %v1667
    %v1710 = vpack.c.bf16 %v1670, %v1669
    %v1711 = vpack.c.bf16 %v1672, %v1671
    %v1712 = vpack.c.bf16 %v1674, %v1673
    %v1713 = vpack.c.bf16 %v1676, %v1675
    %v1714 = vpack.c.bf16 %v1678, %v1677
    %v1715 = vpack.c.bf16 %v1680, %v1679
    %v1716 = vpack.c.bf16 %v1682, %v1681
    %v1717 = vpack.c.bf16 %v1684, %v1683
    %v1718 = vpack.c.bf16 %v1686, %v1685
    %v1719 = vld [vmem:[%s2] sm:$0xf]
    %v1720 = vld [vmem:[%s2 + $0x4] sm:$0xf]
    %v1721 = vld [vmem:[%s2 + $0x8] sm:$0xf]
    %v1722 = vld [vmem:[%s2 + $0xc] sm:$0xf]
    %v1723 = vld [vmem:[%s2 + $0x10] sm:$0xf]
    %v1724 = vld [vmem:[%s2 + $0x14] sm:$0xf]
    %v1725 = vld [vmem:[%s2 + $0x18] sm:$0xf]
    %v1726 = vld [vmem:[%s2 + $0x1c] sm:$0xf]
    %v1727 = vlaneseq
    %v1728 = vshrl.u32 %v1727, 7
    %v1729 = vsub.s32 3, %v1728
    %v1730 = vrot.slane %v22, %v1729
    %v1739 = vunpack.c.l.b16 %v1719
    %v1740 = vunpack.c.l.b16 %v1720
    %v1741 = vunpack.c.l.b16 %v1721
    %v1742 = vunpack.c.l.b16 %v1722
    %v1743 = vunpack.c.l.b16 %v1723
    %v1744 = vunpack.c.l.b16 %v1724
    %v1745 = vunpack.c.l.b16 %v1725
    %v1746 = vunpack.c.l.b16 %v1726
    %v1747 = vpack.c.b16 %v1740, %v1739
    %v1748 = vpack.c.b16 %v1742, %v1741
    %v1749 = vpack.c.b16 %v1744, %v1743
    %v1750 = vpack.c.b16 %v1746, %v1745
    %v1756 = vsel %vm653, %v1687, 0
    %v1759 = vsel %vm653, %v1688, 0
    %v1762 = vsel %vm653, %v1689, 0
    %v1765 = vsel %vm653, %v1690, 0
    %v1768 = vsel %vm653, %v1691, 0
    %v1771 = vsel %vm653, %v1692, 0
    %v1774 = vsel %vm653, %v1693, 0
    %v1777 = vsel %vm653, %v1694, 0
    %v1780 = vsel %vm653, %v1695, 0
    %v1783 = vsel %vm653, %v1696, 0
    %v1786 = vsel %vm653, %v1697, 0
    %v1789 = vsel %vm653, %v1698, 0
    %v1792 = vsel %vm653, %v1699, 0
    %v1795 = vsel %vm653, %v1700, 0
    %v1798 = vsel %vm653, %v1701, 0
    %v1801 = vsel %vm653, %v1702, 0
    %v1804 = vsel %vm653, %v1703, 0
    %v1807 = vsel %vm653, %v1704, 0
    %v1810 = vsel %vm653, %v1705, 0
    %v1813 = vsel %vm653, %v1706, 0
    %v1816 = vsel %vm653, %v1707, 0
    %v1819 = vsel %vm653, %v1708, 0
    %v1822 = vsel %vm653, %v1709, 0
    %v1825 = vsel %vm653, %v1710, 0
    %v1828 = vsel %vm653, %v1711, 0
    %v1831 = vsel %vm653, %v1712, 0
    %v1834 = vsel %vm653, %v1713, 0
    %v1837 = vsel %vm653, %v1714, 0
    %v1840 = vsel %vm653, %v1715, 0
    %v1843 = vsel %vm653, %v1716, 0
    %v1846 = vsel %vm653, %v1717, 0
    %v1849 = vsel %vm653, %v1718, 0
    %1851 = vmatprep.subr.bf16.mxu0 0
    %1852 = vmatpush1.bf16.msra.mxu0 %v1747
    %1853 = vmatprep.subr.bf16.mxu0 0
    %1854 = vmatpush1.bf16.msra.mxu0 %v1748
    %1855 = vmatprep.subr.bf16.mxu0 0
    %1856 = vmatpush1.bf16.msra.mxu0 %v1749
    %1857 = vmatprep.subr.bf16.mxu0 0
    %1858 = vmatpush1.bf16.msra.mxu0 %v1750
    %1859 = vmatprep.subr.bf16.mxu0 0
    %1860 = vmatpush1.bf16.msra.mxu0 0
    %1861 = vmatprep.subr.bf16.mxu0 0
    %1862 = vmatpush1.bf16.msra.mxu0 0
    %1863 = vmatprep.subr.bf16.mxu0 0
    %1864 = vmatpush1.bf16.msra.mxu0 0
    %1865 = vmatprep.subr.bf16.mxu0 0
    %1866 = vmatpush1.bf16.msra.mxu0 0
    %1867 = vmatprep.subr.bf16.mxu0 0
    %1868 = vmatpush1.bf16.msra.mxu0 0
    %1869 = vmatprep.subr.bf16.mxu0 0
    %1870 = vmatpush1.bf16.msra.mxu0 0
    %1871 = vmatprep.subr.bf16.mxu0 0
    %1872 = vmatpush1.bf16.msra.mxu0 0
    %1873 = vmatprep.subr.bf16.mxu0 0
    %1874 = vmatpush1.bf16.msra.mxu0 0
    %1875 = vmatprep.subr.bf16.mxu0 0
    %1876 = vmatpush1.bf16.msra.mxu0 0
    %1877 = vmatprep.subr.bf16.mxu0 0
    %1878 = vmatpush1.bf16.msra.mxu0 0
    %1879 = vmatprep.subr.bf16.mxu0 0
    %1880 = vmatpush1.bf16.msra.mxu0 0
    %1881 = vmatprep.subr.bf16.mxu0 0
    %1882 = vmatpush1.bf16.msra.mxu0 0
    %1883 = vmatprep.mubr.bf16.mxu0 0
    %1884 = vmatmul.mubr.bf16.gmra.mrb[0].mxu0 %v1756
    %v1885 = vpop.f32.mrb[0].mxu0
    %v1886 = vadd.f32 %v1730, %v1885
    %v1887 = vpop.f32.mrb[0].mxu0
    %v1888 = vpop.f32.mrb[0].mxu0
    %v1889 = vadd.f32 %v1730, %v1888
    %v1890 = vpop.f32.mrb[0].mxu0
    %1891 = vmatprep.mubr.bf16.mxu0 0
    %1892 = vmatmul.mubr.bf16.gmra.mrb[0].mxu0 %v1759
    %v1893 = vpop.f32.mrb[0].mxu0
    %v1894 = vadd.f32 %v1730, %v1893
    %v1895 = vpop.f32.mrb[0].mxu0
    %v1896 = vpop.f32.mrb[0].mxu0
    %v1897 = vadd.f32 %v1730, %v1896
    %v1898 = vpop.f32.mrb[0].mxu0
    %1899 = vmatprep.mubr.bf16.mxu0 0
    %1900 = vmatmul.mubr.bf16.gmra.mrb[0].mxu0 %v1762
    %v1901 = vpop.f32.mrb[0].mxu0
    %v1902 = vadd.f32 %v1730, %v1901
    %v1903 = vpop.f32.mrb[0].mxu0
    %v1904 = vpop.f32.mrb[0].mxu0
    %v1905 = vadd.f32 %v1730, %v1904
    %v1906 = vpop.f32.mrb[0].mxu0
    %1907 = vmatprep.mubr.bf16.mxu0 0
    %1908 = vmatmul.mubr.bf16.gmra.mrb[0].mxu0 %v1765
    %v1909 = vpop.f32.mrb[0].mxu0
    %v1910 = vadd.f32 %v1730, %v1909
    %v1911 = vpop.f32.mrb[0].mxu0
    %v1912 = vpop.f32.mrb[0].mxu0
    %v1913 = vadd.f32 %v1730, %v1912
    %v1914 = vpop.f32.mrb[0].mxu0
    %1915 = vmatprep.mubr.bf16.mxu0 0
    %1916 = vmatmul.mubr.bf16.gmra.mrb[0].mxu0 %v1768
    %v1917 = vpop.f32.mrb[0].mxu0
    %v1918 = vadd.f32 %v1730, %v1917
    %v1919 = vpop.f32.mrb[0].mxu0
    %v1920 = vpop.f32.mrb[0].mxu0
    %v1921 = vadd.f32 %v1730, %v1920
    %v1922 = vpop.f32.mrb[0].mxu0
    %1923 = vmatprep.mubr.bf16.mxu0 0
    %1924 = vmatmul.mubr.bf16.gmra.mrb[0].mxu0 %v1771
    %v1925 = vpop.f32.mrb[0].mxu0
    %v1926 = vadd.f32 %v1730, %v1925
    %v1927 = vpop.f32.mrb[0].mxu0
    %v1928 = vpop.f32.mrb[0].mxu0
    %v1929 = vadd.f32 %v1730, %v1928
    %v1930 = vpop.f32.mrb[0].mxu0
    %1931 = vmatprep.mubr.bf16.mxu0 0
    %1932 = vmatmul.mubr.bf16.gmra.mrb[0].mxu0 %v1774
    %v1933 = vpop.f32.mrb[0].mxu0
    %v1934 = vadd.f32 %v1730, %v1933
    %v1935 = vpop.f32.mrb[0].mxu0
    %v1936 = vpop.f32.mrb[0].mxu0
    %v1937 = vadd.f32 %v1730, %v1936
    %v1938 = vpop.f32.mrb[0].mxu0
    %1939 = vmatprep.mubr.bf16.mxu0 0
    %1940 = vmatmul.mubr.bf16.gmra.mrb[0].mxu0 %v1777
    %v1941 = vpop.f32.mrb[0].mxu0
    %v1942 = vadd.f32 %v1730, %v1941
    %v1943 = vpop.f32.mrb[0].mxu0
    %v1944 = vpop.f32.mrb[0].mxu0
    %v1945 = vadd.f32 %v1730, %v1944
    %v1946 = vpop.f32.mrb[0].mxu0
    %1947 = vmatprep.mubr.bf16.mxu0 0
    %1948 = vmatmul.mubr.bf16.gmra.mrb[0].mxu0 %v1780
    %v1949 = vpop.f32.mrb[0].mxu0
    %v1950 = vadd.f32 %v1730, %v1949
    %v1951 = vpop.f32.mrb[0].mxu0
    %v1952 = vpop.f32.mrb[0].mxu0
    %v1953 = vadd.f32 %v1730, %v1952
    %v1954 = vpop.f32.mrb[0].mxu0
    %1955 = vmatprep.mubr.bf16.mxu0 0
    %1956 = vmatmul.mubr.bf16.gmra.mrb[0].mxu0 %v1783
    %v1957 = vpop.f32.mrb[0].mxu0
    %v1958 = vadd.f32 %v1730, %v1957
    %v1959 = vpop.f32.mrb[0].mxu0
    %v1960 = vpop.f32.mrb[0].mxu0
    %v1961 = vadd.f32 %v1730, %v1960
    %v1962 = vpop.f32.mrb[0].mxu0
    %1963 = vmatprep.mubr.bf16.mxu0 0
    %1964 = vmatmul.mubr.bf16.gmra.mrb[0].mxu0 %v1786
    %v1965 = vpop.f32.mrb[0].mxu0
    %v1966 = vadd.f32 %v1730, %v1965
    %v1967 = vpop.f32.mrb[0].mxu0
    %v1968 = vpop.f32.mrb[0].mxu0
    %v1969 = vadd.f32 %v1730, %v1968
    %v1970 = vpop.f32.mrb[0].mxu0
    %1971 = vmatprep.mubr.bf16.mxu0 0
    %1972 = vmatmul.mubr.bf16.gmra.mrb[0].mxu0 %v1789
    %v1973 = vpop.f32.mrb[0].mxu0
    %v1974 = vadd.f32 %v1730, %v1973
    %v1975 = vpop.f32.mrb[0].mxu0
    %v1976 = vpop.f32.mrb[0].mxu0
    %v1977 = vadd.f32 %v1730, %v1976
    %v1978 = vpop.f32.mrb[0].mxu0
    %1979 = vmatprep.mubr.bf16.mxu0 0
    %1980 = vmatmul.mubr.bf16.gmra.mrb[0].mxu0 %v1792
    %v1981 = vpop.f32.mrb[0].mxu0
    %v1982 = vadd.f32 %v1730, %v1981
    %v1983 = vpop.f32.mrb[0].mxu0
    %v1984 = vpop.f32.mrb[0].mxu0
    %v1985 = vadd.f32 %v1730, %v1984
    %v1986 = vpop.f32.mrb[0].mxu0
    %1987 = vmatprep.mubr.bf16.mxu0 0
    %1988 = vmatmul.mubr.bf16.gmra.mrb[0].mxu0 %v1795
    %v1989 = vpop.f32.mrb[0].mxu0
    %v1990 = vadd.f32 %v1730, %v1989
    %v1991 = vpop.f32.mrb[0].mxu0
    %v1992 = vpop.f32.mrb[0].mxu0
    %v1993 = vadd.f32 %v1730, %v1992
    %v1994 = vpop.f32.mrb[0].mxu0
    %1995 = vmatprep.mubr.bf16.mxu0 0
    %1996 = vmatmul.mubr.bf16.gmra.mrb[0].mxu0 %v1798
    %v1997 = vpop.f32.mrb[0].mxu0
    %v1998 = vadd.f32 %v1730, %v1997
    %v1999 = vpop.f32.mrb[0].mxu0
    %v2000 = vpop.f32.mrb[0].mxu0
    %v2001 = vadd.f32 %v1730, %v2000
    %v2002 = vpop.f32.mrb[0].mxu0
    %2003 = vmatprep.mubr.bf16.mxu0 0
    %2004 = vmatmul.mubr.bf16.gmra.mrb[0].mxu0 %v1801
    %v2005 = vpop.f32.mrb[0].mxu0
    %v2006 = vadd.f32 %v1730, %v2005
    %v2007 = vpop.f32.mrb[0].mxu0
    %v2008 = vpop.f32.mrb[0].mxu0
    %v2009 = vadd.f32 %v1730, %v2008
    %v2010 = vpop.f32.mrb[0].mxu0
    %2011 = vmatprep.mubr.bf16.mxu0 0
    %2012 = vmatmul.mubr.bf16.gmra.mrb[0].mxu0 %v1804
    %v2013 = vpop.f32.mrb[0].mxu0
    %v2014 = vadd.f32 %v1730, %v2013
    %v2015 = vpop.f32.mrb[0].mxu0
    %v2016 = vpop.f32.mrb[0].mxu0
    %v2017 = vadd.f32 %v1730, %v2016
    %v2018 = vpop.f32.mrb[0].mxu0
    %2019 = vmatprep.mubr.bf16.mxu0 0
    %2020 = vmatmul.mubr.bf16.gmra.mrb[0].mxu0 %v1807
    %v2021 = vpop.f32.mrb[0].mxu0
    %v2022 = vadd.f32 %v1730, %v2021
    %v2023 = vpop.f32.mrb[0].mxu0
    %v2024 = vpop.f32.mrb[0].mxu0
    %v2025 = vadd.f32 %v1730, %v2024
    %v2026 = vpop.f32.mrb[0].mxu0
    %2027 = vmatprep.mubr.bf16.mxu0 0
    %2028 = vmatmul.mubr.bf16.gmra.mrb[0].mxu0 %v1810
    %v2029 = vpop.f32.mrb[0].mxu0
    %v2030 = vadd.f32 %v1730, %v2029
    %v2031 = vpop.f32.mrb[0].mxu0
    %v2032 = vpop.f32.mrb[0].mxu0
    %v2033 = vadd.f32 %v1730, %v2032
    %v2034 = vpop.f32.mrb[0].mxu0
    %2035 = vmatprep.mubr.bf16.mxu0 0
    %2036 = vmatmul.mubr.bf16.gmra.mrb[0].mxu0 %v1813
    %v2037 = vpop.f32.mrb[0].mxu0
    %v2038 = vadd.f32 %v1730, %v2037
    %v2039 = vpop.f32.mrb[0].mxu0
    %v2040 = vpop.f32.mrb[0].mxu0
    %v2041 = vadd.f32 %v1730, %v2040
    %v2042 = vpop.f32.mrb[0].mxu0
    %2043 = vmatprep.mubr.bf16.mxu0 0
    %2044 = vmatmul.mubr.bf16.gmra.mrb[0].mxu0 %v1816
    %v2045 = vpop.f32.mrb[0].mxu0
    %v2046 = vadd.f32 %v1730, %v2045
    %v2047 = vpop.f32.mrb[0].mxu0
    %v2048 = vpop.f32.mrb[0].mxu0
    %v2049 = vadd.f32 %v1730, %v2048
    %v2050 = vpop.f32.mrb[0].mxu0
    %2051 = vmatprep.mubr.bf16.mxu0 0
    %2052 = vmatmul.mubr.bf16.gmra.mrb[0].mxu0 %v1819
    %v2053 = vpop.f32.mrb[0].mxu0
    %v2054 = vadd.f32 %v1730, %v2053
    %v2055 = vpop.f32.mrb[0].mxu0
    %v2056 = vpop.f32.mrb[0].mxu0
    %v2057 = vadd.f32 %v1730, %v2056
    %v2058 = vpop.f32.mrb[0].mxu0
    %2059 = vmatprep.mubr.bf16.mxu0 0
    %2060 = vmatmul.mubr.bf16.gmra.mrb[0].mxu0 %v1822
    %v2061 = vpop.f32.mrb[0].mxu0
    %v2062 = vadd.f32 %v1730, %v2061
    %v2063 = vpop.f32.mrb[0].mxu0
    %v2064 = vpop.f32.mrb[0].mxu0
    %v2065 = vadd.f32 %v1730, %v2064
    %v2066 = vpop.f32.mrb[0].mxu0
    %2067 = vmatprep.mubr.bf16.mxu0 0
    %2068 = vmatmul.mubr.bf16.gmra.mrb[0].mxu0 %v1825
    %v2069 = vpop.f32.mrb[0].mxu0
    %v2070 = vadd.f32 %v1730, %v2069
    %v2071 = vpop.f32.mrb[0].mxu0
    %v2072 = vpop.f32.mrb[0].mxu0
    %v2073 = vadd.f32 %v1730, %v2072
    %v2074 = vpop.f32.mrb[0].mxu0
    %2075 = vmatprep.mubr.bf16.mxu0 0
    %2076 = vmatmul.mubr.bf16.gmra.mrb[0].mxu0 %v1828
    %v2077 = vpop.f32.mrb[0].mxu0
    %v2078 = vadd.f32 %v1730, %v2077
    %v2079 = vpop.f32.mrb[0].mxu0
    %v2080 = vpop.f32.mrb[0].mxu0
    %v2081 = vadd.f32 %v1730, %v2080
    %v2082 = vpop.f32.mrb[0].mxu0
    %2083 = vmatprep.mubr.bf16.mxu0 0
    %2084 = vmatmul.mubr.bf16.gmra.mrb[0].mxu0 %v1831
    %v2085 = vpop.f32.mrb[0].mxu0
    %v2086 = vadd.f32 %v1730, %v2085
    %v2087 = vpop.f32.mrb[0].mxu0
    %v2088 = vpop.f32.mrb[0].mxu0
    %v2089 = vadd.f32 %v1730, %v2088
    %v2090 = vpop.f32.mrb[0].mxu0
    %2091 = vmatprep.mubr.bf16.mxu0 0
    %2092 = vmatmul.mubr.bf16.gmra.mrb[0].mxu0 %v1834
    %v2093 = vpop.f32.mrb[0].mxu0
    %v2094 = vadd.f32 %v1730, %v2093
    %v2095 = vpop.f32.mrb[0].mxu0
    %v2096 = vpop.f32.mrb[0].mxu0
    %v2097 = vadd.f32 %v1730, %v2096
    %v2098 = vpop.f32.mrb[0].mxu0
    %2099 = vmatprep.mubr.bf16.mxu0 0
    %2100 = vmatmul.mubr.bf16.gmra.mrb[0].mxu0 %v1837
    %v2101 = vpop.f32.mrb[0].mxu0
    %v2102 = vadd.f32 %v1730, %v2101
    %v2103 = vpop.f32.mrb[0].mxu0
    %v2104 = vpop.f32.mrb[0].mxu0
    %v2105 = vadd.f32 %v1730, %v2104
    %v2106 = vpop.f32.mrb[0].mxu0
    %2107 = vmatprep.mubr.bf16.mxu0 0
    %2108 = vmatmul.mubr.bf16.gmra.mrb[0].mxu0 %v1840
    %v2109 = vpop.f32.mrb[0].mxu0
    %v2110 = vadd.f32 %v1730, %v2109
    %v2111 = vpop.f32.mrb[0].mxu0
    %v2112 = vpop.f32.mrb[0].mxu0
    %v2113 = vadd.f32 %v1730, %v2112
    %v2114 = vpop.f32.mrb[0].mxu0
    %2115 = vmatprep.mubr.bf16.mxu0 0
    %2116 = vmatmul.mubr.bf16.gmra.mrb[0].mxu0 %v1843
    %v2117 = vpop.f32.mrb[0].mxu0
    %v2118 = vadd.f32 %v1730, %v2117
    %v2119 = vpop.f32.mrb[0].mxu0
    %v2120 = vpop.f32.mrb[0].mxu0
    %v2121 = vadd.f32 %v1730, %v2120
    %v2122 = vpop.f32.mrb[0].mxu0
    %2123 = vmatprep.mubr.bf16.mxu0 0
    %2124 = vmatmul.mubr.bf16.gmra.mrb[0].mxu0 %v1846
    %v2125 = vpop.f32.mrb[0].mxu0
    %v2126 = vadd.f32 %v1730, %v2125
    %v2127 = vpop.f32.mrb[0].mxu0
    %v2128 = vpop.f32.mrb[0].mxu0
    %v2129 = vadd.f32 %v1730, %v2128
    %v2130 = vpop.f32.mrb[0].mxu0
    %2131 = vmatprep.mubr.bf16.mxu0 0
    %2132 = vmatmul.mubr.bf16.gmra.mrb[0].mxu0 %v1849
    %v2133 = vpop.f32.mrb[0].mxu0
    %v2134 = vadd.f32 %v1730, %v2133
    %v2135 = vpop.f32.mrb[0].mxu0
    %v2136 = vpop.f32.mrb[0].mxu0
    %v2137 = vadd.f32 %v1730, %v2136
    %v2138 = vpop.f32.mrb[0].mxu0
    %2139 = vdwg.mxu0
    %v2140 = vsel %vm653, %v1886, 0.0
    %2141 = vadd.xlane.f32.xlu0 %v2140
    %v2142 = vpop.xlane.xlu0 %2141
    %v2143 = vsel %vm653, %v1889, 0.0
    %2144 = vadd.xlane.f32.xlu0 %v2143
    %v2145 = vpop.xlane.xlu0 %2144
    %v2146 = vsel %vm653, %v1894, 0.0
    %2147 = vadd.xlane.f32.xlu0 %v2146
    %v2148 = vpop.xlane.xlu0 %2147
    %v2149 = vsel %vm653, %v1897, 0.0
    %2150 = vadd.xlane.f32.xlu0 %v2149
    %v2151 = vpop.xlane.xlu0 %2150
    %v2152 = vsel %vm653, %v1902, 0.0
    %2153 = vadd.xlane.f32.xlu0 %v2152
    %v2154 = vpop.xlane.xlu0 %2153
    %v2155 = vsel %vm653, %v1905, 0.0
    %2156 = vadd.xlane.f32.xlu0 %v2155
    %v2157 = vpop.xlane.xlu0 %2156
    %v2158 = vsel %vm653, %v1910, 0.0
    %2159 = vadd.xlane.f32.xlu0 %v2158
    %v2160 = vpop.xlane.xlu0 %2159
    %v2161 = vsel %vm653, %v1913, 0.0
    %2162 = vadd.xlane.f32.xlu0 %v2161
    %v2163 = vpop.xlane.xlu0 %2162
    %v2164 = vsel %vm653, %v1918, 0.0
    %2165 = vadd.xlane.f32.xlu0 %v2164
    %v2166 = vpop.xlane.xlu0 %2165
    %v2167 = vsel %vm653, %v1921, 0.0
    %2168 = vadd.xlane.f32.xlu0 %v2167
    %v2169 = vpop.xlane.xlu0 %2168
    %v2170 = vsel %vm653, %v1926, 0.0
    %2171 = vadd.xlane.f32.xlu0 %v2170
    %v2172 = vpop.xlane.xlu0 %2171
    %v2173 = vsel %vm653, %v1929, 0.0
    %2174 = vadd.xlane.f32.xlu0 %v2173
    %v2175 = vpop.xlane.xlu0 %2174
    %v2176 = vsel %vm653, %v1934, 0.0
    %2177 = vadd.xlane.f32.xlu0 %v2176
    %v2178 = vpop.xlane.xlu0 %2177
    %v2179 = vsel %vm653, %v1937, 0.0
    %2180 = vadd.xlane.f32.xlu0 %v2179
    %v2181 = vpop.xlane.xlu0 %2180
    %v2182 = vsel %vm653, %v1942, 0.0
    %2183 = vadd.xlane.f32.xlu0 %v2182
    %v2184 = vpop.xlane.xlu0 %2183
    %v2185 = vsel %vm653, %v1945, 0.0
    %2186 = vadd.xlane.f32.xlu0 %v2185
    %v2187 = vpop.xlane.xlu0 %2186
    %v2188 = vsel %vm653, %v1950, 0.0
    %2189 = vadd.xlane.f32.xlu0 %v2188
    %v2190 = vpop.xlane.xlu0 %2189
    %v2191 = vsel %vm653, %v1953, 0.0
    %2192 = vadd.xlane.f32.xlu0 %v2191
    %v2193 = vpop.xlane.xlu0 %2192
    %v2194 = vsel %vm653, %v1958, 0.0
    %2195 = vadd.xlane.f32.xlu0 %v2194
    %v2196 = vpop.xlane.xlu0 %2195
    %v2197 = vsel %vm653, %v1961, 0.0
    %2198 = vadd.xlane.f32.xlu0 %v2197
    %v2199 = vpop.xlane.xlu0 %2198
    %v2200 = vsel %vm653, %v1966, 0.0
    %2201 = vadd.xlane.f32.xlu0 %v2200
    %v2202 = vpop.xlane.xlu0 %2201
    %v2203 = vsel %vm653, %v1969, 0.0
    %2204 = vadd.xlane.f32.xlu0 %v2203
    %v2205 = vpop.xlane.xlu0 %2204
    %v2206 = vsel %vm653, %v1974, 0.0
    %2207 = vadd.xlane.f32.xlu0 %v2206
    %v2208 = vpop.xlane.xlu0 %2207
    %v2209 = vsel %vm653, %v1977, 0.0
    %2210 = vadd.xlane.f32.xlu0 %v2209
    %v2211 = vpop.xlane.xlu0 %2210
    %v2212 = vsel %vm653, %v1982, 0.0
    %2213 = vadd.xlane.f32.xlu0 %v2212
    %v2214 = vpop.xlane.xlu0 %2213
    %v2215 = vsel %vm653, %v1985, 0.0
    %2216 = vadd.xlane.f32.xlu0 %v2215
    %v2217 = vpop.xlane.xlu0 %2216
    %v2218 = vsel %vm653, %v1990, 0.0
    %2219 = vadd.xlane.f32.xlu0 %v2218
    %v2220 = vpop.xlane.xlu0 %2219
    %v2221 = vsel %vm653, %v1993, 0.0
    %2222 = vadd.xlane.f32.xlu0 %v2221
    %v2223 = vpop.xlane.xlu0 %2222
    %v2224 = vsel %vm653, %v1998, 0.0
    %2225 = vadd.xlane.f32.xlu0 %v2224
    %v2226 = vpop.xlane.xlu0 %2225
    %v2227 = vsel %vm653, %v2001, 0.0
    %2228 = vadd.xlane.f32.xlu0 %v2227
    %v2229 = vpop.xlane.xlu0 %2228
    %v2230 = vsel %vm653, %v2006, 0.0
    %2231 = vadd.xlane.f32.xlu0 %v2230
    %v2232 = vpop.xlane.xlu0 %2231
    %v2233 = vsel %vm653, %v2009, 0.0
    %2234 = vadd.xlane.f32.xlu0 %v2233
    %v2235 = vpop.xlane.xlu0 %2234
    %v2236 = vsel %vm653, %v2014, 0.0
    %2237 = vadd.xlane.f32.xlu0 %v2236
    %v2238 = vpop.xlane.xlu0 %2237
    %v2239 = vsel %vm653, %v2017, 0.0
    %2240 = vadd.xlane.f32.xlu0 %v2239
    %v2241 = vpop.xlane.xlu0 %2240
    %v2242 = vsel %vm653, %v2022, 0.0
    %2243 = vadd.xlane.f32.xlu0 %v2242
    %v2244 = vpop.xlane.xlu0 %2243
    %v2245 = vsel %vm653, %v2025, 0.0
    %2246 = vadd.xlane.f32.xlu0 %v2245
    %v2247 = vpop.xlane.xlu0 %2246
    %v2248 = vsel %vm653, %v2030, 0.0
    %2249 = vadd.xlane.f32.xlu0 %v2248
    %v2250 = vpop.xlane.xlu0 %2249
    %v2251 = vsel %vm653, %v2033, 0.0
    %2252 = vadd.xlane.f32.xlu0 %v2251
    %v2253 = vpop.xlane.xlu0 %2252
    %v2254 = vsel %vm653, %v2038, 0.0
    %2255 = vadd.xlane.f32.xlu0 %v2254
    %v2256 = vpop.xlane.xlu0 %2255
    %v2257 = vsel %vm653, %v2041, 0.0
    %2258 = vadd.xlane.f32.xlu0 %v2257
    %v2259 = vpop.xlane.xlu0 %2258
    %v2260 = vsel %vm653, %v2046, 0.0
    %2261 = vadd.xlane.f32.xlu0 %v2260
    %v2262 = vpop.xlane.xlu0 %2261
    %v2263 = vsel %vm653, %v2049, 0.0
    %2264 = vadd.xlane.f32.xlu0 %v2263
    %v2265 = vpop.xlane.xlu0 %2264
    %v2266 = vsel %vm653, %v2054, 0.0
    %2267 = vadd.xlane.f32.xlu0 %v2266
    %v2268 = vpop.xlane.xlu0 %2267
    %v2269 = vsel %vm653, %v2057, 0.0
    %2270 = vadd.xlane.f32.xlu0 %v2269
    %v2271 = vpop.xlane.xlu0 %2270
    %v2272 = vsel %vm653, %v2062, 0.0
    %2273 = vadd.xlane.f32.xlu0 %v2272
    %v2274 = vpop.xlane.xlu0 %2273
    %v2275 = vsel %vm653, %v2065, 0.0
    %2276 = vadd.xlane.f32.xlu0 %v2275
    %v2277 = vpop.xlane.xlu0 %2276
    %v2278 = vsel %vm653, %v2070, 0.0
    %2279 = vadd.xlane.f32.xlu0 %v2278
    %v2280 = vpop.xlane.xlu0 %2279
    %v2281 = vsel %vm653, %v2073, 0.0
    %2282 = vadd.xlane.f32.xlu0 %v2281
    %v2283 = vpop.xlane.xlu0 %2282
    %v2284 = vsel %vm653, %v2078, 0.0
    %2285 = vadd.xlane.f32.xlu0 %v2284
    %v2286 = vpop.xlane.xlu0 %2285
    %v2287 = vsel %vm653, %v2081, 0.0
    %2288 = vadd.xlane.f32.xlu0 %v2287
    %v2289 = vpop.xlane.xlu0 %2288
    %v2290 = vsel %vm653, %v2086, 0.0
    %2291 = vadd.xlane.f32.xlu0 %v2290
    %v2292 = vpop.xlane.xlu0 %2291
    %v2293 = vsel %vm653, %v2089, 0.0
    %2294 = vadd.xlane.f32.xlu0 %v2293
    %v2295 = vpop.xlane.xlu0 %2294
    %v2296 = vsel %vm653, %v2094, 0.0
    %2297 = vadd.xlane.f32.xlu0 %v2296
    %v2298 = vpop.xlane.xlu0 %2297
    %v2299 = vsel %vm653, %v2097, 0.0
    %2300 = vadd.xlane.f32.xlu0 %v2299
    %v2301 = vpop.xlane.xlu0 %2300
    %v2302 = vsel %vm653, %v2102, 0.0
    %2303 = vadd.xlane.f32.xlu0 %v2302
    %v2304 = vpop.xlane.xlu0 %2303
    %v2305 = vsel %vm653, %v2105, 0.0
    %2306 = vadd.xlane.f32.xlu0 %v2305
    %v2307 = vpop.xlane.xlu0 %2306
    %v2308 = vsel %vm653, %v2110, 0.0
    %2309 = vadd.xlane.f32.xlu0 %v2308
    %v2310 = vpop.xlane.xlu0 %2309
    %v2311 = vsel %vm653, %v2113, 0.0
    %2312 = vadd.xlane.f32.xlu0 %v2311
    %v2313 = vpop.xlane.xlu0 %2312
    %v2314 = vsel %vm653, %v2118, 0.0
    %2315 = vadd.xlane.f32.xlu0 %v2314
    %v2316 = vpop.xlane.xlu0 %2315
    %v2317 = vsel %vm653, %v2121, 0.0
    %2318 = vadd.xlane.f32.xlu0 %v2317
    %v2319 = vpop.xlane.xlu0 %2318
    %v2320 = vsel %vm653, %v2126, 0.0
    %2321 = vadd.xlane.f32.xlu0 %v2320
    %v2322 = vpop.xlane.xlu0 %2321
    %v2323 = vsel %vm653, %v2129, 0.0
    %2324 = vadd.xlane.f32.xlu0 %v2323
    %v2325 = vpop.xlane.xlu0 %2324
    %v2326 = vsel %vm653, %v2134, 0.0
    %2327 = vadd.xlane.f32.xlu0 %v2326
    %v2328 = vpop.xlane.xlu0 %2327
    %v2329 = vsel %vm653, %v2137, 0.0
    %2330 = vadd.xlane.f32.xlu0 %v2329
    %v2331 = vpop.xlane.xlu0 %2330
    %v2332 = vmul.f32 %v2142, %v846
    %v2333 = vmul.f32 %v2145, %v846
    %v2334 = vmul.f32 %v2148, %v846
    %v2335 = vmul.f32 %v2151, %v846
    %v2336 = vmul.f32 %v2154, %v846
    %v2337 = vmul.f32 %v2157, %v846
    %v2338 = vmul.f32 %v2160, %v846
    %v2339 = vmul.f32 %v2163, %v846
    %v2340 = vmul.f32 %v2166, %v846
    %v2341 = vmul.f32 %v2169, %v846
    %v2342 = vmul.f32 %v2172, %v846
    %v2343 = vmul.f32 %v2175, %v846
    %v2344 = vmul.f32 %v2178, %v846
    %v2345 = vmul.f32 %v2181, %v846
    %v2346 = vmul.f32 %v2184, %v846
    %v2347 = vmul.f32 %v2187, %v846
    %v2348 = vmul.f32 %v2190, %v846
    %v2349 = vmul.f32 %v2193, %v846
    %v2350 = vmul.f32 %v2196, %v846
    %v2351 = vmul.f32 %v2199, %v846
    %v2352 = vmul.f32 %v2202, %v846
    %v2353 = vmul.f32 %v2205, %v846
    %v2354 = vmul.f32 %v2208, %v846
    %v2355 = vmul.f32 %v2211, %v846
    %v2356 = vmul.f32 %v2214, %v846
    %v2357 = vmul.f32 %v2217, %v846
    %v2358 = vmul.f32 %v2220, %v846
    %v2359 = vmul.f32 %v2223, %v846
    %v2360 = vmul.f32 %v2226, %v846
    %v2361 = vmul.f32 %v2229, %v846
    %v2362 = vmul.f32 %v2232, %v846
    %v2363 = vmul.f32 %v2235, %v846
    %v2364 = vmul.f32 %v2238, %v846
    %v2365 = vmul.f32 %v2241, %v846
    %v2366 = vmul.f32 %v2244, %v846
    %v2367 = vmul.f32 %v2247, %v846
    %v2368 = vmul.f32 %v2250, %v846
    %v2369 = vmul.f32 %v2253, %v846
    %v2370 = vmul.f32 %v2256, %v846
    %v2371 = vmul.f32 %v2259, %v846
    %v2372 = vmul.f32 %v2262, %v846
    %v2373 = vmul.f32 %v2265, %v846
    %v2374 = vmul.f32 %v2268, %v846
    %v2375 = vmul.f32 %v2271, %v846
    %v2376 = vmul.f32 %v2274, %v846
    %v2377 = vmul.f32 %v2277, %v846
    %v2378 = vmul.f32 %v2280, %v846
    %v2379 = vmul.f32 %v2283, %v846
    %v2380 = vmul.f32 %v2286, %v846
    %v2381 = vmul.f32 %v2289, %v846
    %v2382 = vmul.f32 %v2292, %v846
    %v2383 = vmul.f32 %v2295, %v846
    %v2384 = vmul.f32 %v2298, %v846
    %v2385 = vmul.f32 %v2301, %v846
    %v2386 = vmul.f32 %v2304, %v846
    %v2387 = vmul.f32 %v2307, %v846
    %v2388 = vmul.f32 %v2310, %v846
    %v2389 = vmul.f32 %v2313, %v846
    %v2390 = vmul.f32 %v2316, %v846
    %v2391 = vmul.f32 %v2319, %v846
    %v2392 = vmul.f32 %v2322, %v846
    %v2393 = vmul.f32 %v2325, %v846
    %v2394 = vmul.f32 %v2328, %v846
    %v2395 = vmul.f32 %v2331, %v846
    %v2396 = vsub.f32 %v1886, %v2332
    %v2397 = vsub.f32 %v1889, %v2333
    %v2398 = vsub.f32 %v1894, %v2334
    %v2399 = vsub.f32 %v1897, %v2335
    %v2400 = vsub.f32 %v1902, %v2336
    %v2401 = vsub.f32 %v1905, %v2337
    %v2402 = vsub.f32 %v1910, %v2338
    %v2403 = vsub.f32 %v1913, %v2339
    %v2404 = vsub.f32 %v1918, %v2340
    %v2405 = vsub.f32 %v1921, %v2341
    %v2406 = vsub.f32 %v1926, %v2342
    %v2407 = vsub.f32 %v1929, %v2343
    %v2408 = vsub.f32 %v1934, %v2344
    %v2409 = vsub.f32 %v1937, %v2345
    %v2410 = vsub.f32 %v1942, %v2346
    %v2411 = vsub.f32 %v1945, %v2347
    %v2412 = vsub.f32 %v1950, %v2348
    %v2413 = vsub.f32 %v1953, %v2349
    %v2414 = vsub.f32 %v1958, %v2350
    %v2415 = vsub.f32 %v1961, %v2351
    %v2416 = vsub.f32 %v1966, %v2352
    %v2417 = vsub.f32 %v1969, %v2353
    %v2418 = vsub.f32 %v1974, %v2354
    %v2419 = vsub.f32 %v1977, %v2355
    %v2420 = vsub.f32 %v1982, %v2356
    %v2421 = vsub.f32 %v1985, %v2357
    %v2422 = vsub.f32 %v1990, %v2358
    %v2423 = vsub.f32 %v1993, %v2359
    %v2424 = vsub.f32 %v1998, %v2360
    %v2425 = vsub.f32 %v2001, %v2361
    %v2426 = vsub.f32 %v2006, %v2362
    %v2427 = vsub.f32 %v2009, %v2363
    %v2428 = vsub.f32 %v2014, %v2364
    %v2429 = vsub.f32 %v2017, %v2365
    %v2430 = vsub.f32 %v2022, %v2366
    %v2431 = vsub.f32 %v2025, %v2367
    %v2432 = vsub.f32 %v2030, %v2368
    %v2433 = vsub.f32 %v2033, %v2369
    %v2434 = vsub.f32 %v2038, %v2370
    %v2435 = vsub.f32 %v2041, %v2371
    %v2436 = vsub.f32 %v2046, %v2372
    %v2437 = vsub.f32 %v2049, %v2373
    %v2438 = vsub.f32 %v2054, %v2374
    %v2439 = vsub.f32 %v2057, %v2375
    %v2440 = vsub.f32 %v2062, %v2376
    %v2441 = vsub.f32 %v2065, %v2377
    %v2442 = vsub.f32 %v2070, %v2378
    %v2443 = vsub.f32 %v2073, %v2379
    %v2444 = vsub.f32 %v2078, %v2380
    %v2445 = vsub.f32 %v2081, %v2381
    %v2446 = vsub.f32 %v2086, %v2382
    %v2447 = vsub.f32 %v2089, %v2383
    %v2448 = vsub.f32 %v2094, %v2384
    %v2449 = vsub.f32 %v2097, %v2385
    %v2450 = vsub.f32 %v2102, %v2386
    %v2451 = vsub.f32 %v2105, %v2387
    %v2452 = vsub.f32 %v2110, %v2388
    %v2453 = vsub.f32 %v2113, %v2389
    %v2454 = vsub.f32 %v2118, %v2390
    %v2455 = vsub.f32 %v2121, %v2391
    %v2456 = vsub.f32 %v2126, %v2392
    %v2457 = vsub.f32 %v2129, %v2393
    %v2458 = vsub.f32 %v2134, %v2394
    %v2459 = vsub.f32 %v2137, %v2395
    %v2460 = vmul.f32 %v2396, %v2396
    %v2461 = vmul.f32 %v2397, %v2397
    %v2462 = vmul.f32 %v2398, %v2398
    %v2463 = vmul.f32 %v2399, %v2399
    %v2464 = vmul.f32 %v2400, %v2400
    %v2465 = vmul.f32 %v2401, %v2401
    %v2466 = vmul.f32 %v2402, %v2402
    %v2467 = vmul.f32 %v2403, %v2403
    %v2468 = vmul.f32 %v2404, %v2404
    %v2469 = vmul.f32 %v2405, %v2405
    %v2470 = vmul.f32 %v2406, %v2406
    %v2471 = vmul.f32 %v2407, %v2407
    %v2472 = vmul.f32 %v2408, %v2408
    %v2473 = vmul.f32 %v2409, %v2409
    %v2474 = vmul.f32 %v2410, %v2410
    %v2475 = vmul.f32 %v2411, %v2411
    %v2476 = vmul.f32 %v2412, %v2412
    %v2477 = vmul.f32 %v2413, %v2413
    %v2478 = vmul.f32 %v2414, %v2414
    %v2479 = vmul.f32 %v2415, %v2415
    %v2480 = vmul.f32 %v2416, %v2416
    %v2481 = vmul.f32 %v2417, %v2417
    %v2482 = vmul.f32 %v2418, %v2418
    %v2483 = vmul.f32 %v2419, %v2419
    %v2484 = vmul.f32 %v2420, %v2420
    %v2485 = vmul.f32 %v2421, %v2421
    %v2486 = vmul.f32 %v2422, %v2422
    %v2487 = vmul.f32 %v2423, %v2423
    %v2488 = vmul.f32 %v2424, %v2424
    %v2489 = vmul.f32 %v2425, %v2425
    %v2490 = vmul.f32 %v2426, %v2426
    %v2491 = vmul.f32 %v2427, %v2427
    %v2492 = vmul.f32 %v2428, %v2428
    %v2493 = vmul.f32 %v2429, %v2429
    %v2494 = vmul.f32 %v2430, %v2430
    %v2495 = vmul.f32 %v2431, %v2431
    %v2496 = vmul.f32 %v2432, %v2432
    %v2497 = vmul.f32 %v2433, %v2433
    %v2498 = vmul.f32 %v2434, %v2434
    %v2499 = vmul.f32 %v2435, %v2435
    %v2500 = vmul.f32 %v2436, %v2436
    %v2501 = vmul.f32 %v2437, %v2437
    %v2502 = vmul.f32 %v2438, %v2438
    %v2503 = vmul.f32 %v2439, %v2439
    %v2504 = vmul.f32 %v2440, %v2440
    %v2505 = vmul.f32 %v2441, %v2441
    %v2506 = vmul.f32 %v2442, %v2442
    %v2507 = vmul.f32 %v2443, %v2443
    %v2508 = vmul.f32 %v2444, %v2444
    %v2509 = vmul.f32 %v2445, %v2445
    %v2510 = vmul.f32 %v2446, %v2446
    %v2511 = vmul.f32 %v2447, %v2447
    %v2512 = vmul.f32 %v2448, %v2448
    %v2513 = vmul.f32 %v2449, %v2449
    %v2514 = vmul.f32 %v2450, %v2450
    %v2515 = vmul.f32 %v2451, %v2451
    %v2516 = vmul.f32 %v2452, %v2452
    %v2517 = vmul.f32 %v2453, %v2453
    %v2518 = vmul.f32 %v2454, %v2454
    %v2519 = vmul.f32 %v2455, %v2455
    %v2520 = vmul.f32 %v2456, %v2456
    %v2521 = vmul.f32 %v2457, %v2457
    %v2522 = vmul.f32 %v2458, %v2458
    %v2523 = vmul.f32 %v2459, %v2459
    %v2524 = vsel %vm653, %v2460, 0.0
    %2525 = vadd.xlane.f32.xlu0 %v2524
    %v2526 = vpop.xlane.xlu0 %2525
    %v2527 = vsel %vm653, %v2461, 0.0
    %2528 = vadd.xlane.f32.xlu0 %v2527
    %v2529 = vpop.xlane.xlu0 %2528
    %v2530 = vsel %vm653, %v2462, 0.0
    %2531 = vadd.xlane.f32.xlu0 %v2530
    %v2532 = vpop.xlane.xlu0 %2531
    %v2533 = vsel %vm653, %v2463, 0.0
    %2534 = vadd.xlane.f32.xlu0 %v2533
    %v2535 = vpop.xlane.xlu0 %2534
    %v2536 = vsel %vm653, %v2464, 0.0
    %2537 = vadd.xlane.f32.xlu0 %v2536
    %v2538 = vpop.xlane.xlu0 %2537
    %v2539 = vsel %vm653, %v2465, 0.0
    %2540 = vadd.xlane.f32.xlu0 %v2539
    %v2541 = vpop.xlane.xlu0 %2540
    %v2542 = vsel %vm653, %v2466, 0.0
    %2543 = vadd.xlane.f32.xlu0 %v2542
    %v2544 = vpop.xlane.xlu0 %2543
    %v2545 = vsel %vm653, %v2467, 0.0
    %2546 = vadd.xlane.f32.xlu0 %v2545
    %v2547 = vpop.xlane.xlu0 %2546
    %v2548 = vsel %vm653, %v2468, 0.0
    %2549 = vadd.xlane.f32.xlu0 %v2548
    %v2550 = vpop.xlane.xlu0 %2549
    %v2551 = vsel %vm653, %v2469, 0.0
    %2552 = vadd.xlane.f32.xlu0 %v2551
    %v2553 = vpop.xlane.xlu0 %2552
    %v2554 = vsel %vm653, %v2470, 0.0
    %2555 = vadd.xlane.f32.xlu0 %v2554
    %v2556 = vpop.xlane.xlu0 %2555
    %v2557 = vsel %vm653, %v2471, 0.0
    %2558 = vadd.xlane.f32.xlu0 %v2557
    %v2559 = vpop.xlane.xlu0 %2558
    %v2560 = vsel %vm653, %v2472, 0.0
    %2561 = vadd.xlane.f32.xlu0 %v2560
    %v2562 = vpop.xlane.xlu0 %2561
    %v2563 = vsel %vm653, %v2473, 0.0
    %2564 = vadd.xlane.f32.xlu0 %v2563
    %v2565 = vpop.xlane.xlu0 %2564
    %v2566 = vsel %vm653, %v2474, 0.0
    %2567 = vadd.xlane.f32.xlu0 %v2566
    %v2568 = vpop.xlane.xlu0 %2567
    %v2569 = vsel %vm653, %v2475, 0.0
    %2570 = vadd.xlane.f32.xlu0 %v2569
    %v2571 = vpop.xlane.xlu0 %2570
    %v2572 = vsel %vm653, %v2476, 0.0
    %2573 = vadd.xlane.f32.xlu0 %v2572
    %v2574 = vpop.xlane.xlu0 %2573
    %v2575 = vsel %vm653, %v2477, 0.0
    %2576 = vadd.xlane.f32.xlu0 %v2575
    %v2577 = vpop.xlane.xlu0 %2576
    %v2578 = vsel %vm653, %v2478, 0.0
    %2579 = vadd.xlane.f32.xlu0 %v2578
    %v2580 = vpop.xlane.xlu0 %2579
    %v2581 = vsel %vm653, %v2479, 0.0
    %2582 = vadd.xlane.f32.xlu0 %v2581
    %v2583 = vpop.xlane.xlu0 %2582
    %v2584 = vsel %vm653, %v2480, 0.0
    %2585 = vadd.xlane.f32.xlu0 %v2584
    %v2586 = vpop.xlane.xlu0 %2585
    %v2587 = vsel %vm653, %v2481, 0.0
    %2588 = vadd.xlane.f32.xlu0 %v2587
    %v2589 = vpop.xlane.xlu0 %2588
    %v2590 = vsel %vm653, %v2482, 0.0
    %2591 = vadd.xlane.f32.xlu0 %v2590
    %v2592 = vpop.xlane.xlu0 %2591
    %v2593 = vsel %vm653, %v2483, 0.0
    %2594 = vadd.xlane.f32.xlu0 %v2593
    %v2595 = vpop.xlane.xlu0 %2594
    %v2596 = vsel %vm653, %v2484, 0.0
    %2597 = vadd.xlane.f32.xlu0 %v2596
    %v2598 = vpop.xlane.xlu0 %2597
    %v2599 = vsel %vm653, %v2485, 0.0
    %2600 = vadd.xlane.f32.xlu0 %v2599
    %v2601 = vpop.xlane.xlu0 %2600
    %v2602 = vsel %vm653, %v2486, 0.0
    %2603 = vadd.xlane.f32.xlu0 %v2602
    %v2604 = vpop.xlane.xlu0 %2603
    %v2605 = vsel %vm653, %v2487, 0.0
    %2606 = vadd.xlane.f32.xlu0 %v2605
    %v2607 = vpop.xlane.xlu0 %2606
    %v2608 = vsel %vm653, %v2488, 0.0
    %2609 = vadd.xlane.f32.xlu0 %v2608
    %v2610 = vpop.xlane.xlu0 %2609
    %v2611 = vsel %vm653, %v2489, 0.0
    %2612 = vadd.xlane.f32.xlu0 %v2611
    %v2613 = vpop.xlane.xlu0 %2612
    %v2614 = vsel %vm653, %v2490, 0.0
    %2615 = vadd.xlane.f32.xlu0 %v2614
    %v2616 = vpop.xlane.xlu0 %2615
    %v2617 = vsel %vm653, %v2491, 0.0
    %2618 = vadd.xlane.f32.xlu0 %v2617
    %v2619 = vpop.xlane.xlu0 %2618
    %v2620 = vsel %vm653, %v2492, 0.0
    %2621 = vadd.xlane.f32.xlu0 %v2620
    %v2622 = vpop.xlane.xlu0 %2621
    %v2623 = vsel %vm653, %v2493, 0.0
    %2624 = vadd.xlane.f32.xlu0 %v2623
    %v2625 = vpop.xlane.xlu0 %2624
    %v2626 = vsel %vm653, %v2494, 0.0
    %2627 = vadd.xlane.f32.xlu0 %v2626
    %v2628 = vpop.xlane.xlu0 %2627
    %v2629 = vsel %vm653, %v2495, 0.0
    %2630 = vadd.xlane.f32.xlu0 %v2629
    %v2631 = vpop.xlane.xlu0 %2630
    %v2632 = vsel %vm653, %v2496, 0.0
    %2633 = vadd.xlane.f32.xlu0 %v2632
    %v2634 = vpop.xlane.xlu0 %2633
    %v2635 = vsel %vm653, %v2497, 0.0
    %2636 = vadd.xlane.f32.xlu0 %v2635
    %v2637 = vpop.xlane.xlu0 %2636
    %v2638 = vsel %vm653, %v2498, 0.0
    %2639 = vadd.xlane.f32.xlu0 %v2638
    %v2640 = vpop.xlane.xlu0 %2639
    %v2641 = vsel %vm653, %v2499, 0.0
    %2642 = vadd.xlane.f32.xlu0 %v2641
    %v2643 = vpop.xlane.xlu0 %2642
    %v2644 = vsel %vm653, %v2500, 0.0
    %2645 = vadd.xlane.f32.xlu0 %v2644
    %v2646 = vpop.xlane.xlu0 %2645
    %v2647 = vsel %vm653, %v2501, 0.0
    %2648 = vadd.xlane.f32.xlu0 %v2647
    %v2649 = vpop.xlane.xlu0 %2648
    %v2650 = vsel %vm653, %v2502, 0.0
    %2651 = vadd.xlane.f32.xlu0 %v2650
    %v2652 = vpop.xlane.xlu0 %2651
    %v2653 = vsel %vm653, %v2503, 0.0
    %2654 = vadd.xlane.f32.xlu0 %v2653
    %v2655 = vpop.xlane.xlu0 %2654
    %v2656 = vsel %vm653, %v2504, 0.0
    %2657 = vadd.xlane.f32.xlu0 %v2656
    %v2658 = vpop.xlane.xlu0 %2657
    %v2659 = vsel %vm653, %v2505, 0.0
    %2660 = vadd.xlane.f32.xlu0 %v2659
    %v2661 = vpop.xlane.xlu0 %2660
    %v2662 = vsel %vm653, %v2506, 0.0
    %2663 = vadd.xlane.f32.xlu0 %v2662
    %v2664 = vpop.xlane.xlu0 %2663
    %v2665 = vsel %vm653, %v2507, 0.0
    %2666 = vadd.xlane.f32.xlu0 %v2665
    %v2667 = vpop.xlane.xlu0 %2666
    %v2668 = vsel %vm653, %v2508, 0.0
    %2669 = vadd.xlane.f32.xlu0 %v2668
    %v2670 = vpop.xlane.xlu0 %2669
    %v2671 = vsel %vm653, %v2509, 0.0
    %2672 = vadd.xlane.f32.xlu0 %v2671
    %v2673 = vpop.xlane.xlu0 %2672
    %v2674 = vsel %vm653, %v2510, 0.0
    %2675 = vadd.xlane.f32.xlu0 %v2674
    %v2676 = vpop.xlane.xlu0 %2675
    %v2677 = vsel %vm653, %v2511, 0.0
    %2678 = vadd.xlane.f32.xlu0 %v2677
    %v2679 = vpop.xlane.xlu0 %2678
    %v2680 = vsel %vm653, %v2512, 0.0
    %2681 = vadd.xlane.f32.xlu0 %v2680
    %v2682 = vpop.xlane.xlu0 %2681
    %v2683 = vsel %vm653, %v2513, 0.0
    %2684 = vadd.xlane.f32.xlu0 %v2683
    %v2685 = vpop.xlane.xlu0 %2684
    %v2686 = vsel %vm653, %v2514, 0.0
    %2687 = vadd.xlane.f32.xlu0 %v2686
    %v2688 = vpop.xlane.xlu0 %2687
    %v2689 = vsel %vm653, %v2515, 0.0
    %2690 = vadd.xlane.f32.xlu0 %v2689
    %v2691 = vpop.xlane.xlu0 %2690
    %v2692 = vsel %vm653, %v2516, 0.0
    %2693 = vadd.xlane.f32.xlu0 %v2692
    %v2694 = vpop.xlane.xlu0 %2693
    %v2695 = vsel %vm653, %v2517, 0.0
    %2696 = vadd.xlane.f32.xlu0 %v2695
    %v2697 = vpop.xlane.xlu0 %2696
    %v2698 = vsel %vm653, %v2518, 0.0
    %2699 = vadd.xlane.f32.xlu0 %v2698
    %v2700 = vpop.xlane.xlu0 %2699
    %v2701 = vsel %vm653, %v2519, 0.0
    %2702 = vadd.xlane.f32.xlu0 %v2701
    %v2703 = vpop.xlane.xlu0 %2702
    %v2704 = vsel %vm653, %v2520, 0.0
    %2705 = vadd.xlane.f32.xlu0 %v2704
    %v2706 = vpop.xlane.xlu0 %2705
    %v2707 = vsel %vm653, %v2521, 0.0
    %2708 = vadd.xlane.f32.xlu0 %v2707
    %v2709 = vpop.xlane.xlu0 %2708
    %v2710 = vsel %vm653, %v2522, 0.0
    %2711 = vadd.xlane.f32.xlu0 %v2710
    %v2712 = vpop.xlane.xlu0 %2711
    %v2713 = vsel %vm653, %v2523, 0.0
    %2714 = vadd.xlane.f32.xlu0 %v2713
    %v2715 = vpop.xlane.xlu0 %2714
    %v2716 = vmul.f32 %v2526, %v846
    %v2717 = vmul.f32 %v2529, %v846
    %v2718 = vmul.f32 %v2532, %v846
    %v2719 = vmul.f32 %v2535, %v846
    %v2720 = vmul.f32 %v2538, %v846
    %v2721 = vmul.f32 %v2541, %v846
    %v2722 = vmul.f32 %v2544, %v846
    %v2723 = vmul.f32 %v2547, %v846
    %v2724 = vmul.f32 %v2550, %v846
    %v2725 = vmul.f32 %v2553, %v846
    %v2726 = vmul.f32 %v2556, %v846
    %v2727 = vmul.f32 %v2559, %v846
    %v2728 = vmul.f32 %v2562, %v846
    %v2729 = vmul.f32 %v2565, %v846
    %v2730 = vmul.f32 %v2568, %v846
    %v2731 = vmul.f32 %v2571, %v846
    %v2732 = vmul.f32 %v2574, %v846
    %v2733 = vmul.f32 %v2577, %v846
    %v2734 = vmul.f32 %v2580, %v846
    %v2735 = vmul.f32 %v2583, %v846
    %v2736 = vmul.f32 %v2586, %v846
    %v2737 = vmul.f32 %v2589, %v846
    %v2738 = vmul.f32 %v2592, %v846
    %v2739 = vmul.f32 %v2595, %v846
    %v2740 = vmul.f32 %v2598, %v846
    %v2741 = vmul.f32 %v2601, %v846
    %v2742 = vmul.f32 %v2604, %v846
    %v2743 = vmul.f32 %v2607, %v846
    %v2744 = vmul.f32 %v2610, %v846
    %v2745 = vmul.f32 %v2613, %v846
    %v2746 = vmul.f32 %v2616, %v846
    %v2747 = vmul.f32 %v2619, %v846
    %v2748 = vmul.f32 %v2622, %v846
    %v2749 = vmul.f32 %v2625, %v846
    %v2750 = vmul.f32 %v2628, %v846
    %v2751 = vmul.f32 %v2631, %v846
    %v2752 = vmul.f32 %v2634, %v846
    %v2753 = vmul.f32 %v2637, %v846
    %v2754 = vmul.f32 %v2640, %v846
    %v2755 = vmul.f32 %v2643, %v846
    %v2756 = vmul.f32 %v2646, %v846
    %v2757 = vmul.f32 %v2649, %v846
    %v2758 = vmul.f32 %v2652, %v846
    %v2759 = vmul.f32 %v2655, %v846
    %v2760 = vmul.f32 %v2658, %v846
    %v2761 = vmul.f32 %v2661, %v846
    %v2762 = vmul.f32 %v2664, %v846
    %v2763 = vmul.f32 %v2667, %v846
    %v2764 = vmul.f32 %v2670, %v846
    %v2765 = vmul.f32 %v2673, %v846
    %v2766 = vmul.f32 %v2676, %v846
    %v2767 = vmul.f32 %v2679, %v846
    %v2768 = vmul.f32 %v2682, %v846
    %v2769 = vmul.f32 %v2685, %v846
    %v2770 = vmul.f32 %v2688, %v846
    %v2771 = vmul.f32 %v2691, %v846
    %v2772 = vmul.f32 %v2694, %v846
    %v2773 = vmul.f32 %v2697, %v846
    %v2774 = vmul.f32 %v2700, %v846
    %v2775 = vmul.f32 %v2703, %v846
    %v2776 = vmul.f32 %v2706, %v846
    %v2777 = vmul.f32 %v2709, %v846
    %v2778 = vmul.f32 %v2712, %v846
    %v2779 = vmul.f32 %v2715, %v846
    %v2780 = vadd.f32 %v2716, 1e-05
    %v2781 = vadd.f32 %v2717, 1e-05
    %v2782 = vadd.f32 %v2718, 1e-05
    %v2783 = vadd.f32 %v2719, 1e-05
    %v2784 = vadd.f32 %v2720, 1e-05
    %v2785 = vadd.f32 %v2721, 1e-05
    %v2786 = vadd.f32 %v2722, 1e-05
    %v2787 = vadd.f32 %v2723, 1e-05
    %v2788 = vadd.f32 %v2724, 1e-05
    %v2789 = vadd.f32 %v2725, 1e-05
    %v2790 = vadd.f32 %v2726, 1e-05
    %v2791 = vadd.f32 %v2727, 1e-05
    %v2792 = vadd.f32 %v2728, 1e-05
    %v2793 = vadd.f32 %v2729, 1e-05
    %v2794 = vadd.f32 %v2730, 1e-05
    %v2795 = vadd.f32 %v2731, 1e-05
    %v2796 = vadd.f32 %v2732, 1e-05
    %v2797 = vadd.f32 %v2733, 1e-05
    %v2798 = vadd.f32 %v2734, 1e-05
    %v2799 = vadd.f32 %v2735, 1e-05
    %v2800 = vadd.f32 %v2736, 1e-05
    %v2801 = vadd.f32 %v2737, 1e-05
    %v2802 = vadd.f32 %v2738, 1e-05
    %v2803 = vadd.f32 %v2739, 1e-05
    %v2804 = vadd.f32 %v2740, 1e-05
    %v2805 = vadd.f32 %v2741, 1e-05
    %v2806 = vadd.f32 %v2742, 1e-05
    %v2807 = vadd.f32 %v2743, 1e-05
    %v2808 = vadd.f32 %v2744, 1e-05
    %v2809 = vadd.f32 %v2745, 1e-05
    %v2810 = vadd.f32 %v2746, 1e-05
    %v2811 = vadd.f32 %v2747, 1e-05
    %v2812 = vadd.f32 %v2748, 1e-05
    %v2813 = vadd.f32 %v2749, 1e-05
    %v2814 = vadd.f32 %v2750, 1e-05
    %v2815 = vadd.f32 %v2751, 1e-05
    %v2816 = vadd.f32 %v2752, 1e-05
    %v2817 = vadd.f32 %v2753, 1e-05
    %v2818 = vadd.f32 %v2754, 1e-05
    %v2819 = vadd.f32 %v2755, 1e-05
    %v2820 = vadd.f32 %v2756, 1e-05
    %v2821 = vadd.f32 %v2757, 1e-05
    %v2822 = vadd.f32 %v2758, 1e-05
    %v2823 = vadd.f32 %v2759, 1e-05
    %v2824 = vadd.f32 %v2760, 1e-05
    %v2825 = vadd.f32 %v2761, 1e-05
    %v2826 = vadd.f32 %v2762, 1e-05
    %v2827 = vadd.f32 %v2763, 1e-05
    %v2828 = vadd.f32 %v2764, 1e-05
    %v2829 = vadd.f32 %v2765, 1e-05
    %v2830 = vadd.f32 %v2766, 1e-05
    %v2831 = vadd.f32 %v2767, 1e-05
    %v2832 = vadd.f32 %v2768, 1e-05
    %v2833 = vadd.f32 %v2769, 1e-05
    %v2834 = vadd.f32 %v2770, 1e-05
    %v2835 = vadd.f32 %v2771, 1e-05
    %v2836 = vadd.f32 %v2772, 1e-05
    %v2837 = vadd.f32 %v2773, 1e-05
    %v2838 = vadd.f32 %v2774, 1e-05
    %v2839 = vadd.f32 %v2775, 1e-05
    %v2840 = vadd.f32 %v2776, 1e-05
    %v2841 = vadd.f32 %v2777, 1e-05
    %v2842 = vadd.f32 %v2778, 1e-05
    %v2843 = vadd.f32 %v2779, 1e-05
    %v2844 = vrsqrt.pop %v2780
    %v2845 = vrsqrt.pop %v2781
    %v2846 = vrsqrt.pop %v2782
    %v2847 = vrsqrt.pop %v2783
    %v2848 = vrsqrt.pop %v2784
    %v2849 = vrsqrt.pop %v2785
    %v2850 = vrsqrt.pop %v2786
    %v2851 = vrsqrt.pop %v2787
    %v2852 = vrsqrt.pop %v2788
    %v2853 = vrsqrt.pop %v2789
    %v2854 = vrsqrt.pop %v2790
    %v2855 = vrsqrt.pop %v2791
    %v2856 = vrsqrt.pop %v2792
    %v2857 = vrsqrt.pop %v2793
    %v2858 = vrsqrt.pop %v2794
    %v2859 = vrsqrt.pop %v2795
    %v2860 = vrsqrt.pop %v2796
    %v2861 = vrsqrt.pop %v2797
    %v2862 = vrsqrt.pop %v2798
    %v2863 = vrsqrt.pop %v2799
    %v2864 = vrsqrt.pop %v2800
    %v2865 = vrsqrt.pop %v2801
    %v2866 = vrsqrt.pop %v2802
    %v2867 = vrsqrt.pop %v2803
    %v2868 = vrsqrt.pop %v2804
    %v2869 = vrsqrt.pop %v2805
    %v2870 = vrsqrt.pop %v2806
    %v2871 = vrsqrt.pop %v2807
    %v2872 = vrsqrt.pop %v2808
    %v2873 = vrsqrt.pop %v2809
    %v2874 = vrsqrt.pop %v2810
    %v2875 = vrsqrt.pop %v2811
    %v2876 = vrsqrt.pop %v2812
    %v2877 = vrsqrt.pop %v2813
    %v2878 = vrsqrt.pop %v2814
    %v2879 = vrsqrt.pop %v2815
    %v2880 = vrsqrt.pop %v2816
    %v2881 = vrsqrt.pop %v2817
    %v2882 = vrsqrt.pop %v2818
    %v2883 = vrsqrt.pop %v2819
    %v2884 = vrsqrt.pop %v2820
    %v2885 = vrsqrt.pop %v2821
    %v2886 = vrsqrt.pop %v2822
    %v2887 = vrsqrt.pop %v2823
    %v2888 = vrsqrt.pop %v2824
    %v2889 = vrsqrt.pop %v2825
    %v2890 = vrsqrt.pop %v2826
    %v2891 = vrsqrt.pop %v2827
    %v2892 = vrsqrt.pop %v2828
    %v2893 = vrsqrt.pop %v2829
    %v2894 = vrsqrt.pop %v2830
    %v2895 = vrsqrt.pop %v2831
    %v2896 = vrsqrt.pop %v2832
    %v2897 = vrsqrt.pop %v2833
    %v2898 = vrsqrt.pop %v2834
    %v2899 = vrsqrt.pop %v2835
    %v2900 = vrsqrt.pop %v2836
    %v2901 = vrsqrt.pop %v2837
    %v2902 = vrsqrt.pop %v2838
    %v2903 = vrsqrt.pop %v2839
    %v2904 = vrsqrt.pop %v2840
    %v2905 = vrsqrt.pop %v2841
    %v2906 = vrsqrt.pop %v2842
    %v2907 = vrsqrt.pop %v2843
    %v2908 = vmul.f32 %v2396, %v2844
    %v2909 = vmul.f32 %v2397, %v2845
    %v2910 = vmul.f32 %v2398, %v2846
    %v2911 = vmul.f32 %v2399, %v2847
    %v2912 = vmul.f32 %v2400, %v2848
    %v2913 = vmul.f32 %v2401, %v2849
    %v2914 = vmul.f32 %v2402, %v2850
    %v2915 = vmul.f32 %v2403, %v2851
    %v2916 = vmul.f32 %v2404, %v2852
    %v2917 = vmul.f32 %v2405, %v2853
    %v2918 = vmul.f32 %v2406, %v2854
    %v2919 = vmul.f32 %v2407, %v2855
    %v2920 = vmul.f32 %v2408, %v2856
    %v2921 = vmul.f32 %v2409, %v2857
    %v2922 = vmul.f32 %v2410, %v2858
    %v2923 = vmul.f32 %v2411, %v2859
    %v2924 = vmul.f32 %v2412, %v2860
    %v2925 = vmul.f32 %v2413, %v2861
    %v2926 = vmul.f32 %v2414, %v2862
    %v2927 = vmul.f32 %v2415, %v2863
    %v2928 = vmul.f32 %v2416, %v2864
    %v2929 = vmul.f32 %v2417, %v2865
    %v2930 = vmul.f32 %v2418, %v2866
    %v2931 = vmul.f32 %v2419, %v2867
    %v2932 = vmul.f32 %v2420, %v2868
    %v2933 = vmul.f32 %v2421, %v2869
    %v2934 = vmul.f32 %v2422, %v2870
    %v2935 = vmul.f32 %v2423, %v2871
    %v2936 = vmul.f32 %v2424, %v2872
    %v2937 = vmul.f32 %v2425, %v2873
    %v2938 = vmul.f32 %v2426, %v2874
    %v2939 = vmul.f32 %v2427, %v2875
    %v2940 = vmul.f32 %v2428, %v2876
    %v2941 = vmul.f32 %v2429, %v2877
    %v2942 = vmul.f32 %v2430, %v2878
    %v2943 = vmul.f32 %v2431, %v2879
    %v2944 = vmul.f32 %v2432, %v2880
    %v2945 = vmul.f32 %v2433, %v2881
    %v2946 = vmul.f32 %v2434, %v2882
    %v2947 = vmul.f32 %v2435, %v2883
    %v2948 = vmul.f32 %v2436, %v2884
    %v2949 = vmul.f32 %v2437, %v2885
    %v2950 = vmul.f32 %v2438, %v2886
    %v2951 = vmul.f32 %v2439, %v2887
    %v2952 = vmul.f32 %v2440, %v2888
    %v2953 = vmul.f32 %v2441, %v2889
    %v2954 = vmul.f32 %v2442, %v2890
    %v2955 = vmul.f32 %v2443, %v2891
    %v2956 = vmul.f32 %v2444, %v2892
    %v2957 = vmul.f32 %v2445, %v2893
    %v2958 = vmul.f32 %v2446, %v2894
    %v2959 = vmul.f32 %v2447, %v2895
    %v2960 = vmul.f32 %v2448, %v2896
    %v2961 = vmul.f32 %v2449, %v2897
    %v2962 = vmul.f32 %v2450, %v2898
    %v2963 = vmul.f32 %v2451, %v2899
    %v2964 = vmul.f32 %v2452, %v2900
    %v2965 = vmul.f32 %v2453, %v2901
    %v2966 = vmul.f32 %v2454, %v2902
    %v2967 = vmul.f32 %v2455, %v2903
    %v2968 = vmul.f32 %v2456, %v2904
    %v2969 = vmul.f32 %v2457, %v2905
    %v2970 = vmul.f32 %v2458, %v2906
    %v2971 = vmul.f32 %v2459, %v2907
    %v2972 = vlaneseq
    %v2973 = vshrl.u32 %v2972, 7
    %v2974 = vsub.s32 4, %v2973
    %v2975 = vrot.slane %v22, %v2974
    %v2976 = vmul.f32 %v2908, %v2975
    %v2977 = vmul.f32 %v2909, %v2975
    %v2978 = vmul.f32 %v2910, %v2975
    %v2979 = vmul.f32 %v2911, %v2975
    %v2980 = vmul.f32 %v2912, %v2975
    %v2981 = vmul.f32 %v2913, %v2975
    %v2982 = vmul.f32 %v2914, %v2975
    %v2983 = vmul.f32 %v2915, %v2975
    %v2984 = vmul.f32 %v2916, %v2975
    %v2985 = vmul.f32 %v2917, %v2975
    %v2986 = vmul.f32 %v2918, %v2975
    %v2987 = vmul.f32 %v2919, %v2975
    %v2988 = vmul.f32 %v2920, %v2975
    %v2989 = vmul.f32 %v2921, %v2975
    %v2990 = vmul.f32 %v2922, %v2975
    %v2991 = vmul.f32 %v2923, %v2975
    %v2992 = vmul.f32 %v2924, %v2975
    %v2993 = vmul.f32 %v2925, %v2975
    %v2994 = vmul.f32 %v2926, %v2975
    %v2995 = vmul.f32 %v2927, %v2975
    %v2996 = vmul.f32 %v2928, %v2975
    %v2997 = vmul.f32 %v2929, %v2975
    %v2998 = vmul.f32 %v2930, %v2975
    %v2999 = vmul.f32 %v2931, %v2975
    %v3000 = vmul.f32 %v2932, %v2975
    %v3001 = vmul.f32 %v2933, %v2975
    %v3002 = vmul.f32 %v2934, %v2975
    %v3003 = vmul.f32 %v2935, %v2975
    %v3004 = vmul.f32 %v2936, %v2975
    %v3005 = vmul.f32 %v2937, %v2975
    %v3006 = vmul.f32 %v2938, %v2975
    %v3007 = vmul.f32 %v2939, %v2975
    %v3008 = vmul.f32 %v2940, %v2975
    %v3009 = vmul.f32 %v2941, %v2975
    %v3010 = vmul.f32 %v2942, %v2975
    %v3011 = vmul.f32 %v2943, %v2975
    %v3012 = vmul.f32 %v2944, %v2975
    %v3013 = vmul.f32 %v2945, %v2975
    %v3014 = vmul.f32 %v2946, %v2975
    %v3015 = vmul.f32 %v2947, %v2975
    %v3016 = vmul.f32 %v2948, %v2975
    %v3017 = vmul.f32 %v2949, %v2975
    %v3018 = vmul.f32 %v2950, %v2975
    %v3019 = vmul.f32 %v2951, %v2975
    %v3020 = vmul.f32 %v2952, %v2975
    %v3021 = vmul.f32 %v2953, %v2975
    %v3022 = vmul.f32 %v2954, %v2975
    %v3023 = vmul.f32 %v2955, %v2975
    %v3024 = vmul.f32 %v2956, %v2975
    %v3025 = vmul.f32 %v2957, %v2975
    %v3026 = vmul.f32 %v2958, %v2975
    %v3027 = vmul.f32 %v2959, %v2975
    %v3028 = vmul.f32 %v2960, %v2975
    %v3029 = vmul.f32 %v2961, %v2975
    %v3030 = vmul.f32 %v2962, %v2975
    %v3031 = vmul.f32 %v2963, %v2975
    %v3032 = vmul.f32 %v2964, %v2975
    %v3033 = vmul.f32 %v2965, %v2975
    %v3034 = vmul.f32 %v2966, %v2975
    %v3035 = vmul.f32 %v2967, %v2975
    %v3036 = vmul.f32 %v2968, %v2975
    %v3037 = vmul.f32 %v2969, %v2975
    %v3038 = vmul.f32 %v2970, %v2975
    %v3039 = vmul.f32 %v2971, %v2975
    %v3040 = vlaneseq
    %v3041 = vshrl.u32 %v3040, 7
    %v3042 = vsub.s32 5, %v3041
    %v3043 = vrot.slane %v22, %v3042
    %v3044 = vadd.f32 %v2976, %v3043
    %v3045 = vadd.f32 %v2977, %v3043
    %v3046 = vadd.f32 %v2978, %v3043
    %v3047 = vadd.f32 %v2979, %v3043
    %v3048 = vadd.f32 %v2980, %v3043
    %v3049 = vadd.f32 %v2981, %v3043
    %v3050 = vadd.f32 %v2982, %v3043
    %v3051 = vadd.f32 %v2983, %v3043
    %v3052 = vadd.f32 %v2984, %v3043
    %v3053 = vadd.f32 %v2985, %v3043
    %v3054 = vadd.f32 %v2986, %v3043
    %v3055 = vadd.f32 %v2987, %v3043
    %v3056 = vadd.f32 %v2988, %v3043
    %v3057 = vadd.f32 %v2989, %v3043
    %v3058 = vadd.f32 %v2990, %v3043
    %v3059 = vadd.f32 %v2991, %v3043
    %v3060 = vadd.f32 %v2992, %v3043
    %v3061 = vadd.f32 %v2993, %v3043
    %v3062 = vadd.f32 %v2994, %v3043
    %v3063 = vadd.f32 %v2995, %v3043
    %v3064 = vadd.f32 %v2996, %v3043
    %v3065 = vadd.f32 %v2997, %v3043
    %v3066 = vadd.f32 %v2998, %v3043
    %v3067 = vadd.f32 %v2999, %v3043
    %v3068 = vadd.f32 %v3000, %v3043
    %v3069 = vadd.f32 %v3001, %v3043
    %v3070 = vadd.f32 %v3002, %v3043
    %v3071 = vadd.f32 %v3003, %v3043
    %v3072 = vadd.f32 %v3004, %v3043
    %v3073 = vadd.f32 %v3005, %v3043
    %v3074 = vadd.f32 %v3006, %v3043
    %v3075 = vadd.f32 %v3007, %v3043
    %v3076 = vadd.f32 %v3008, %v3043
    %v3077 = vadd.f32 %v3009, %v3043
    %v3078 = vadd.f32 %v3010, %v3043
    %v3079 = vadd.f32 %v3011, %v3043
    %v3080 = vadd.f32 %v3012, %v3043
    %v3081 = vadd.f32 %v3013, %v3043
    %v3082 = vadd.f32 %v3014, %v3043
    %v3083 = vadd.f32 %v3015, %v3043
    %v3084 = vadd.f32 %v3016, %v3043
    %v3085 = vadd.f32 %v3017, %v3043
    %v3086 = vadd.f32 %v3018, %v3043
    %v3087 = vadd.f32 %v3019, %v3043
    %v3088 = vadd.f32 %v3020, %v3043
    %v3089 = vadd.f32 %v3021, %v3043
    %v3090 = vadd.f32 %v3022, %v3043
    %v3091 = vadd.f32 %v3023, %v3043
    %v3092 = vadd.f32 %v3024, %v3043
    %v3093 = vadd.f32 %v3025, %v3043
    %v3094 = vadd.f32 %v3026, %v3043
    %v3095 = vadd.f32 %v3027, %v3043
    %v3096 = vadd.f32 %v3028, %v3043
    %v3097 = vadd.f32 %v3029, %v3043
    %v3098 = vadd.f32 %v3030, %v3043
    %v3099 = vadd.f32 %v3031, %v3043
    %v3100 = vadd.f32 %v3032, %v3043
    %v3101 = vadd.f32 %v3033, %v3043
    %v3102 = vadd.f32 %v3034, %v3043
    %v3103 = vadd.f32 %v3035, %v3043
    %v3104 = vadd.f32 %v3036, %v3043
    %v3105 = vadd.f32 %v3037, %v3043
    %v3106 = vadd.f32 %v3038, %v3043
    %v3107 = vadd.f32 %v3039, %v3043
    %v3108 = vmax.f32 %v3044, 0.0
    %v3109 = vmax.f32 %v3045, 0.0
    %v3110 = vmax.f32 %v3046, 0.0
    %v3111 = vmax.f32 %v3047, 0.0
    %v3112 = vmax.f32 %v3048, 0.0
    %v3113 = vmax.f32 %v3049, 0.0
    %v3114 = vmax.f32 %v3050, 0.0
    %v3115 = vmax.f32 %v3051, 0.0
    %v3116 = vmax.f32 %v3052, 0.0
    %v3117 = vmax.f32 %v3053, 0.0
    %v3118 = vmax.f32 %v3054, 0.0
    %v3119 = vmax.f32 %v3055, 0.0
    %v3120 = vmax.f32 %v3056, 0.0
    %v3121 = vmax.f32 %v3057, 0.0
    %v3122 = vmax.f32 %v3058, 0.0
    %v3123 = vmax.f32 %v3059, 0.0
    %v3124 = vmax.f32 %v3060, 0.0
    %v3125 = vmax.f32 %v3061, 0.0
    %v3126 = vmax.f32 %v3062, 0.0
    %v3127 = vmax.f32 %v3063, 0.0
    %v3128 = vmax.f32 %v3064, 0.0
    %v3129 = vmax.f32 %v3065, 0.0
    %v3130 = vmax.f32 %v3066, 0.0
    %v3131 = vmax.f32 %v3067, 0.0
    %v3132 = vmax.f32 %v3068, 0.0
    %v3133 = vmax.f32 %v3069, 0.0
    %v3134 = vmax.f32 %v3070, 0.0
    %v3135 = vmax.f32 %v3071, 0.0
    %v3136 = vmax.f32 %v3072, 0.0
    %v3137 = vmax.f32 %v3073, 0.0
    %v3138 = vmax.f32 %v3074, 0.0
    %v3139 = vmax.f32 %v3075, 0.0
    %v3140 = vmax.f32 %v3076, 0.0
    %v3141 = vmax.f32 %v3077, 0.0
    %v3142 = vmax.f32 %v3078, 0.0
    %v3143 = vmax.f32 %v3079, 0.0
    %v3144 = vmax.f32 %v3080, 0.0
    %v3145 = vmax.f32 %v3081, 0.0
    %v3146 = vmax.f32 %v3082, 0.0
    %v3147 = vmax.f32 %v3083, 0.0
    %v3148 = vmax.f32 %v3084, 0.0
    %v3149 = vmax.f32 %v3085, 0.0
    %v3150 = vmax.f32 %v3086, 0.0
    %v3151 = vmax.f32 %v3087, 0.0
    %v3152 = vmax.f32 %v3088, 0.0
    %v3153 = vmax.f32 %v3089, 0.0
    %v3154 = vmax.f32 %v3090, 0.0
    %v3155 = vmax.f32 %v3091, 0.0
    %v3156 = vmax.f32 %v3092, 0.0
    %v3157 = vmax.f32 %v3093, 0.0
    %v3158 = vmax.f32 %v3094, 0.0
    %v3159 = vmax.f32 %v3095, 0.0
    %v3160 = vmax.f32 %v3096, 0.0
    %v3161 = vmax.f32 %v3097, 0.0
    %v3162 = vmax.f32 %v3098, 0.0
    %v3163 = vmax.f32 %v3099, 0.0
    %v3164 = vmax.f32 %v3100, 0.0
    %v3165 = vmax.f32 %v3101, 0.0
    %v3166 = vmax.f32 %v3102, 0.0
    %v3167 = vmax.f32 %v3103, 0.0
    %v3168 = vmax.f32 %v3104, 0.0
    %v3169 = vmax.f32 %v3105, 0.0
    %v3170 = vmax.f32 %v3106, 0.0
    %v3171 = vmax.f32 %v3107, 0.0
    %v3172 = vpack.c.bf16 %v3109, %v3108
    %v3173 = vpack.c.bf16 %v3111, %v3110
    %v3174 = vpack.c.bf16 %v3113, %v3112
    %v3175 = vpack.c.bf16 %v3115, %v3114
    %v3176 = vpack.c.bf16 %v3117, %v3116
    %v3177 = vpack.c.bf16 %v3119, %v3118
    %v3178 = vpack.c.bf16 %v3121, %v3120
    %v3179 = vpack.c.bf16 %v3123, %v3122
    %v3180 = vpack.c.bf16 %v3125, %v3124
    %v3181 = vpack.c.bf16 %v3127, %v3126
    %v3182 = vpack.c.bf16 %v3129, %v3128
    %v3183 = vpack.c.bf16 %v3131, %v3130
    %v3184 = vpack.c.bf16 %v3133, %v3132
    %v3185 = vpack.c.bf16 %v3135, %v3134
    %v3186 = vpack.c.bf16 %v3137, %v3136
    %v3187 = vpack.c.bf16 %v3139, %v3138
    %v3188 = vpack.c.bf16 %v3141, %v3140
    %v3189 = vpack.c.bf16 %v3143, %v3142
    %v3190 = vpack.c.bf16 %v3145, %v3144
    %v3191 = vpack.c.bf16 %v3147, %v3146
    %v3192 = vpack.c.bf16 %v3149, %v3148
    %v3193 = vpack.c.bf16 %v3151, %v3150
    %v3194 = vpack.c.bf16 %v3153, %v3152
    %v3195 = vpack.c.bf16 %v3155, %v3154
    %v3196 = vpack.c.bf16 %v3157, %v3156
    %v3197 = vpack.c.bf16 %v3159, %v3158
    %v3198 = vpack.c.bf16 %v3161, %v3160
    %v3199 = vpack.c.bf16 %v3163, %v3162
    %v3200 = vpack.c.bf16 %v3165, %v3164
    %v3201 = vpack.c.bf16 %v3167, %v3166
    %v3202 = vpack.c.bf16 %v3169, %v3168
    %v3203 = vpack.c.bf16 %v3171, %v3170
    %v3204 = vld [vmem:[%s3] sm:$0xf]
    %v3205 = vld [vmem:[%s3 + $0x4] sm:$0xf]
    %v3206 = vld [vmem:[%s3 + $0x8] sm:$0xf]
    %v3207 = vld [vmem:[%s3 + $0xc] sm:$0xf]
    %v3208 = vld [vmem:[%s3 + $0x10] sm:$0xf]
    %v3209 = vld [vmem:[%s3 + $0x14] sm:$0xf]
    %v3210 = vld [vmem:[%s3 + $0x18] sm:$0xf]
    %v3211 = vld [vmem:[%s3 + $0x1c] sm:$0xf]
    %v3212 = vlaneseq
    %v3213 = vshrl.u32 %v3212, 7
    %v3214 = vsub.s32 6, %v3213
    %v3215 = vrot.slane %v22, %v3214
    %v3224 = vunpack.c.l.b16 %v3204
    %v3225 = vunpack.c.l.b16 %v3205
    %v3226 = vunpack.c.l.b16 %v3206
    %v3227 = vunpack.c.l.b16 %v3207
    %v3228 = vunpack.c.l.b16 %v3208
    %v3229 = vunpack.c.l.b16 %v3209
    %v3230 = vunpack.c.l.b16 %v3210
    %v3231 = vunpack.c.l.b16 %v3211
    %v3232 = vpack.c.b16 %v3225, %v3224
    %v3233 = vpack.c.b16 %v3227, %v3226
    %v3234 = vpack.c.b16 %v3229, %v3228
    %v3235 = vpack.c.b16 %v3231, %v3230
    %v3241 = vsel %vm653, %v3172, 0
    %v3244 = vsel %vm653, %v3173, 0
    %v3247 = vsel %vm653, %v3174, 0
    %v3250 = vsel %vm653, %v3175, 0
    %v3253 = vsel %vm653, %v3176, 0
    %v3256 = vsel %vm653, %v3177, 0
    %v3259 = vsel %vm653, %v3178, 0
    %v3262 = vsel %vm653, %v3179, 0
    %v3265 = vsel %vm653, %v3180, 0
    %v3268 = vsel %vm653, %v3181, 0
    %v3271 = vsel %vm653, %v3182, 0
    %v3274 = vsel %vm653, %v3183, 0
    %v3277 = vsel %vm653, %v3184, 0
    %v3280 = vsel %vm653, %v3185, 0
    %v3283 = vsel %vm653, %v3186, 0
    %v3286 = vsel %vm653, %v3187, 0
    %v3289 = vsel %vm653, %v3188, 0
    %v3292 = vsel %vm653, %v3189, 0
    %v3295 = vsel %vm653, %v3190, 0
    %v3298 = vsel %vm653, %v3191, 0
    %v3301 = vsel %vm653, %v3192, 0
    %v3304 = vsel %vm653, %v3193, 0
    %v3307 = vsel %vm653, %v3194, 0
    %v3310 = vsel %vm653, %v3195, 0
    %v3313 = vsel %vm653, %v3196, 0
    %v3316 = vsel %vm653, %v3197, 0
    %v3319 = vsel %vm653, %v3198, 0
    %v3322 = vsel %vm653, %v3199, 0
    %v3325 = vsel %vm653, %v3200, 0
    %v3328 = vsel %vm653, %v3201, 0
    %v3331 = vsel %vm653, %v3202, 0
    %v3334 = vsel %vm653, %v3203, 0
    %3336 = vmatprep.subr.bf16.mxu0 0
    %3337 = vmatpush1.bf16.msra.mxu0 %v3232
    %3338 = vmatprep.subr.bf16.mxu0 0
    %3339 = vmatpush1.bf16.msra.mxu0 %v3233
    %3340 = vmatprep.subr.bf16.mxu0 0
    %3341 = vmatpush1.bf16.msra.mxu0 %v3234
    %3342 = vmatprep.subr.bf16.mxu0 0
    %3343 = vmatpush1.bf16.msra.mxu0 %v3235
    %3344 = vmatprep.subr.bf16.mxu0 0
    %3345 = vmatpush1.bf16.msra.mxu0 0
    %3346 = vmatprep.subr.bf16.mxu0 0
    %3347 = vmatpush1.bf16.msra.mxu0 0
    %3348 = vmatprep.subr.bf16.mxu0 0
    %3349 = vmatpush1.bf16.msra.mxu0 0
    %3350 = vmatprep.subr.bf16.mxu0 0
    %3351 = vmatpush1.bf16.msra.mxu0 0
    %3352 = vmatprep.subr.bf16.mxu0 0
    %3353 = vmatpush1.bf16.msra.mxu0 0
    %3354 = vmatprep.subr.bf16.mxu0 0
    %3355 = vmatpush1.bf16.msra.mxu0 0
    %3356 = vmatprep.subr.bf16.mxu0 0
    %3357 = vmatpush1.bf16.msra.mxu0 0
    %3358 = vmatprep.subr.bf16.mxu0 0
    %3359 = vmatpush1.bf16.msra.mxu0 0
    %3360 = vmatprep.subr.bf16.mxu0 0
    %3361 = vmatpush1.bf16.msra.mxu0 0
    %3362 = vmatprep.subr.bf16.mxu0 0
    %3363 = vmatpush1.bf16.msra.mxu0 0
    %3364 = vmatprep.subr.bf16.mxu0 0
    %3365 = vmatpush1.bf16.msra.mxu0 0
    %3366 = vmatprep.subr.bf16.mxu0 0
    %3367 = vmatpush1.bf16.msra.mxu0 0
    %3368 = vmatprep.mubr.bf16.mxu0 0
    %3369 = vmatmul.mubr.bf16.gmra.mrb[0].mxu0 %v3241
    %v3370 = vpop.f32.mrb[0].mxu0
    %v3371 = vadd.f32 %v3215, %v3370
    %v3372 = vpop.f32.mrb[0].mxu0
    %v3373 = vpop.f32.mrb[0].mxu0
    %v3374 = vadd.f32 %v3215, %v3373
    %v3375 = vpop.f32.mrb[0].mxu0
    %3376 = vmatprep.mubr.bf16.mxu0 0
    %3377 = vmatmul.mubr.bf16.gmra.mrb[0].mxu0 %v3244
    %v3378 = vpop.f32.mrb[0].mxu0
    %v3379 = vadd.f32 %v3215, %v3378
    %v3380 = vpop.f32.mrb[0].mxu0
    %v3381 = vpop.f32.mrb[0].mxu0
    %v3382 = vadd.f32 %v3215, %v3381
    %v3383 = vpop.f32.mrb[0].mxu0
    %3384 = vmatprep.mubr.bf16.mxu0 0
    %3385 = vmatmul.mubr.bf16.gmra.mrb[0].mxu0 %v3247
    %v3386 = vpop.f32.mrb[0].mxu0
    %v3387 = vadd.f32 %v3215, %v3386
    %v3388 = vpop.f32.mrb[0].mxu0
    %v3389 = vpop.f32.mrb[0].mxu0
    %v3390 = vadd.f32 %v3215, %v3389
    %v3391 = vpop.f32.mrb[0].mxu0
    %3392 = vmatprep.mubr.bf16.mxu0 0
    %3393 = vmatmul.mubr.bf16.gmra.mrb[0].mxu0 %v3250
    %v3394 = vpop.f32.mrb[0].mxu0
    %v3395 = vadd.f32 %v3215, %v3394
    %v3396 = vpop.f32.mrb[0].mxu0
    %v3397 = vpop.f32.mrb[0].mxu0
    %v3398 = vadd.f32 %v3215, %v3397
    %v3399 = vpop.f32.mrb[0].mxu0
    %3400 = vmatprep.mubr.bf16.mxu0 0
    %3401 = vmatmul.mubr.bf16.gmra.mrb[0].mxu0 %v3253
    %v3402 = vpop.f32.mrb[0].mxu0
    %v3403 = vadd.f32 %v3215, %v3402
    %v3404 = vpop.f32.mrb[0].mxu0
    %v3405 = vpop.f32.mrb[0].mxu0
    %v3406 = vadd.f32 %v3215, %v3405
    %v3407 = vpop.f32.mrb[0].mxu0
    %3408 = vmatprep.mubr.bf16.mxu0 0
    %3409 = vmatmul.mubr.bf16.gmra.mrb[0].mxu0 %v3256
    %v3410 = vpop.f32.mrb[0].mxu0
    %v3411 = vadd.f32 %v3215, %v3410
    %v3412 = vpop.f32.mrb[0].mxu0
    %v3413 = vpop.f32.mrb[0].mxu0
    %v3414 = vadd.f32 %v3215, %v3413
    %v3415 = vpop.f32.mrb[0].mxu0
    %3416 = vmatprep.mubr.bf16.mxu0 0
    %3417 = vmatmul.mubr.bf16.gmra.mrb[0].mxu0 %v3259
    %v3418 = vpop.f32.mrb[0].mxu0
    %v3419 = vadd.f32 %v3215, %v3418
    %v3420 = vpop.f32.mrb[0].mxu0
    %v3421 = vpop.f32.mrb[0].mxu0
    %v3422 = vadd.f32 %v3215, %v3421
    %v3423 = vpop.f32.mrb[0].mxu0
    %3424 = vmatprep.mubr.bf16.mxu0 0
    %3425 = vmatmul.mubr.bf16.gmra.mrb[0].mxu0 %v3262
    %v3426 = vpop.f32.mrb[0].mxu0
    %v3427 = vadd.f32 %v3215, %v3426
    %v3428 = vpop.f32.mrb[0].mxu0
    %v3429 = vpop.f32.mrb[0].mxu0
    %v3430 = vadd.f32 %v3215, %v3429
    %v3431 = vpop.f32.mrb[0].mxu0
    %3432 = vmatprep.mubr.bf16.mxu0 0
    %3433 = vmatmul.mubr.bf16.gmra.mrb[0].mxu0 %v3265
    %v3434 = vpop.f32.mrb[0].mxu0
    %v3435 = vadd.f32 %v3215, %v3434
    %v3436 = vpop.f32.mrb[0].mxu0
    %v3437 = vpop.f32.mrb[0].mxu0
    %v3438 = vadd.f32 %v3215, %v3437
    %v3439 = vpop.f32.mrb[0].mxu0
    %3440 = vmatprep.mubr.bf16.mxu0 0
    %3441 = vmatmul.mubr.bf16.gmra.mrb[0].mxu0 %v3268
    %v3442 = vpop.f32.mrb[0].mxu0
    %v3443 = vadd.f32 %v3215, %v3442
    %v3444 = vpop.f32.mrb[0].mxu0
    %v3445 = vpop.f32.mrb[0].mxu0
    %v3446 = vadd.f32 %v3215, %v3445
    %v3447 = vpop.f32.mrb[0].mxu0
    %3448 = vmatprep.mubr.bf16.mxu0 0
    %3449 = vmatmul.mubr.bf16.gmra.mrb[0].mxu0 %v3271
    %v3450 = vpop.f32.mrb[0].mxu0
    %v3451 = vadd.f32 %v3215, %v3450
    %v3452 = vpop.f32.mrb[0].mxu0
    %v3453 = vpop.f32.mrb[0].mxu0
    %v3454 = vadd.f32 %v3215, %v3453
    %v3455 = vpop.f32.mrb[0].mxu0
    %3456 = vmatprep.mubr.bf16.mxu0 0
    %3457 = vmatmul.mubr.bf16.gmra.mrb[0].mxu0 %v3274
    %v3458 = vpop.f32.mrb[0].mxu0
    %v3459 = vadd.f32 %v3215, %v3458
    %v3460 = vpop.f32.mrb[0].mxu0
    %v3461 = vpop.f32.mrb[0].mxu0
    %v3462 = vadd.f32 %v3215, %v3461
    %v3463 = vpop.f32.mrb[0].mxu0
    %3464 = vmatprep.mubr.bf16.mxu0 0
    %3465 = vmatmul.mubr.bf16.gmra.mrb[0].mxu0 %v3277
    %v3466 = vpop.f32.mrb[0].mxu0
    %v3467 = vadd.f32 %v3215, %v3466
    %v3468 = vpop.f32.mrb[0].mxu0
    %v3469 = vpop.f32.mrb[0].mxu0
    %v3470 = vadd.f32 %v3215, %v3469
    %v3471 = vpop.f32.mrb[0].mxu0
    %3472 = vmatprep.mubr.bf16.mxu0 0
    %3473 = vmatmul.mubr.bf16.gmra.mrb[0].mxu0 %v3280
    %v3474 = vpop.f32.mrb[0].mxu0
    %v3475 = vadd.f32 %v3215, %v3474
    %v3476 = vpop.f32.mrb[0].mxu0
    %v3477 = vpop.f32.mrb[0].mxu0
    %v3478 = vadd.f32 %v3215, %v3477
    %v3479 = vpop.f32.mrb[0].mxu0
    %3480 = vmatprep.mubr.bf16.mxu0 0
    %3481 = vmatmul.mubr.bf16.gmra.mrb[0].mxu0 %v3283
    %v3482 = vpop.f32.mrb[0].mxu0
    %v3483 = vadd.f32 %v3215, %v3482
    %v3484 = vpop.f32.mrb[0].mxu0
    %v3485 = vpop.f32.mrb[0].mxu0
    %v3486 = vadd.f32 %v3215, %v3485
    %v3487 = vpop.f32.mrb[0].mxu0
    %3488 = vmatprep.mubr.bf16.mxu0 0
    %3489 = vmatmul.mubr.bf16.gmra.mrb[0].mxu0 %v3286
    %v3490 = vpop.f32.mrb[0].mxu0
    %v3491 = vadd.f32 %v3215, %v3490
    %v3492 = vpop.f32.mrb[0].mxu0
    %v3493 = vpop.f32.mrb[0].mxu0
    %v3494 = vadd.f32 %v3215, %v3493
    %v3495 = vpop.f32.mrb[0].mxu0
    %3496 = vmatprep.mubr.bf16.mxu0 0
    %3497 = vmatmul.mubr.bf16.gmra.mrb[0].mxu0 %v3289
    %v3498 = vpop.f32.mrb[0].mxu0
    %v3499 = vadd.f32 %v3215, %v3498
    %v3500 = vpop.f32.mrb[0].mxu0
    %v3501 = vpop.f32.mrb[0].mxu0
    %v3502 = vadd.f32 %v3215, %v3501
    %v3503 = vpop.f32.mrb[0].mxu0
    %3504 = vmatprep.mubr.bf16.mxu0 0
    %3505 = vmatmul.mubr.bf16.gmra.mrb[0].mxu0 %v3292
    %v3506 = vpop.f32.mrb[0].mxu0
    %v3507 = vadd.f32 %v3215, %v3506
    %v3508 = vpop.f32.mrb[0].mxu0
    %v3509 = vpop.f32.mrb[0].mxu0
    %v3510 = vadd.f32 %v3215, %v3509
    %v3511 = vpop.f32.mrb[0].mxu0
    %3512 = vmatprep.mubr.bf16.mxu0 0
    %3513 = vmatmul.mubr.bf16.gmra.mrb[0].mxu0 %v3295
    %v3514 = vpop.f32.mrb[0].mxu0
    %v3515 = vadd.f32 %v3215, %v3514
    %v3516 = vpop.f32.mrb[0].mxu0
    %v3517 = vpop.f32.mrb[0].mxu0
    %v3518 = vadd.f32 %v3215, %v3517
    %v3519 = vpop.f32.mrb[0].mxu0
    %3520 = vmatprep.mubr.bf16.mxu0 0
    %3521 = vmatmul.mubr.bf16.gmra.mrb[0].mxu0 %v3298
    %v3522 = vpop.f32.mrb[0].mxu0
    %v3523 = vadd.f32 %v3215, %v3522
    %v3524 = vpop.f32.mrb[0].mxu0
    %v3525 = vpop.f32.mrb[0].mxu0
    %v3526 = vadd.f32 %v3215, %v3525
    %v3527 = vpop.f32.mrb[0].mxu0
    %3528 = vmatprep.mubr.bf16.mxu0 0
    %3529 = vmatmul.mubr.bf16.gmra.mrb[0].mxu0 %v3301
    %v3530 = vpop.f32.mrb[0].mxu0
    %v3531 = vadd.f32 %v3215, %v3530
    %v3532 = vpop.f32.mrb[0].mxu0
    %v3533 = vpop.f32.mrb[0].mxu0
    %v3534 = vadd.f32 %v3215, %v3533
    %v3535 = vpop.f32.mrb[0].mxu0
    %3536 = vmatprep.mubr.bf16.mxu0 0
    %3537 = vmatmul.mubr.bf16.gmra.mrb[0].mxu0 %v3304
    %v3538 = vpop.f32.mrb[0].mxu0
    %v3539 = vadd.f32 %v3215, %v3538
    %v3540 = vpop.f32.mrb[0].mxu0
    %v3541 = vpop.f32.mrb[0].mxu0
    %v3542 = vadd.f32 %v3215, %v3541
    %v3543 = vpop.f32.mrb[0].mxu0
    %3544 = vmatprep.mubr.bf16.mxu0 0
    %3545 = vmatmul.mubr.bf16.gmra.mrb[0].mxu0 %v3307
    %v3546 = vpop.f32.mrb[0].mxu0
    %v3547 = vadd.f32 %v3215, %v3546
    %v3548 = vpop.f32.mrb[0].mxu0
    %v3549 = vpop.f32.mrb[0].mxu0
    %v3550 = vadd.f32 %v3215, %v3549
    %v3551 = vpop.f32.mrb[0].mxu0
    %3552 = vmatprep.mubr.bf16.mxu0 0
    %3553 = vmatmul.mubr.bf16.gmra.mrb[0].mxu0 %v3310
    %v3554 = vpop.f32.mrb[0].mxu0
    %v3555 = vadd.f32 %v3215, %v3554
    %v3556 = vpop.f32.mrb[0].mxu0
    %v3557 = vpop.f32.mrb[0].mxu0
    %v3558 = vadd.f32 %v3215, %v3557
    %v3559 = vpop.f32.mrb[0].mxu0
    %3560 = vmatprep.mubr.bf16.mxu0 0
    %3561 = vmatmul.mubr.bf16.gmra.mrb[0].mxu0 %v3313
    %v3562 = vpop.f32.mrb[0].mxu0
    %v3563 = vadd.f32 %v3215, %v3562
    %v3564 = vpop.f32.mrb[0].mxu0
    %v3565 = vpop.f32.mrb[0].mxu0
    %v3566 = vadd.f32 %v3215, %v3565
    %v3567 = vpop.f32.mrb[0].mxu0
    %3568 = vmatprep.mubr.bf16.mxu0 0
    %3569 = vmatmul.mubr.bf16.gmra.mrb[0].mxu0 %v3316
    %v3570 = vpop.f32.mrb[0].mxu0
    %v3571 = vadd.f32 %v3215, %v3570
    %v3572 = vpop.f32.mrb[0].mxu0
    %v3573 = vpop.f32.mrb[0].mxu0
    %v3574 = vadd.f32 %v3215, %v3573
    %v3575 = vpop.f32.mrb[0].mxu0
    %3576 = vmatprep.mubr.bf16.mxu0 0
    %3577 = vmatmul.mubr.bf16.gmra.mrb[0].mxu0 %v3319
    %v3578 = vpop.f32.mrb[0].mxu0
    %v3579 = vadd.f32 %v3215, %v3578
    %v3580 = vpop.f32.mrb[0].mxu0
    %v3581 = vpop.f32.mrb[0].mxu0
    %v3582 = vadd.f32 %v3215, %v3581
    %v3583 = vpop.f32.mrb[0].mxu0
    %3584 = vmatprep.mubr.bf16.mxu0 0
    %3585 = vmatmul.mubr.bf16.gmra.mrb[0].mxu0 %v3322
    %v3586 = vpop.f32.mrb[0].mxu0
    %v3587 = vadd.f32 %v3215, %v3586
    %v3588 = vpop.f32.mrb[0].mxu0
    %v3589 = vpop.f32.mrb[0].mxu0
    %v3590 = vadd.f32 %v3215, %v3589
    %v3591 = vpop.f32.mrb[0].mxu0
    %3592 = vmatprep.mubr.bf16.mxu0 0
    %3593 = vmatmul.mubr.bf16.gmra.mrb[0].mxu0 %v3325
    %v3594 = vpop.f32.mrb[0].mxu0
    %v3595 = vadd.f32 %v3215, %v3594
    %v3596 = vpop.f32.mrb[0].mxu0
    %v3597 = vpop.f32.mrb[0].mxu0
    %v3598 = vadd.f32 %v3215, %v3597
    %v3599 = vpop.f32.mrb[0].mxu0
    %3600 = vmatprep.mubr.bf16.mxu0 0
    %3601 = vmatmul.mubr.bf16.gmra.mrb[0].mxu0 %v3328
    %v3602 = vpop.f32.mrb[0].mxu0
    %v3603 = vadd.f32 %v3215, %v3602
    %v3604 = vpop.f32.mrb[0].mxu0
    %v3605 = vpop.f32.mrb[0].mxu0
    %v3606 = vadd.f32 %v3215, %v3605
    %v3607 = vpop.f32.mrb[0].mxu0
    %3608 = vmatprep.mubr.bf16.mxu0 0
    %3609 = vmatmul.mubr.bf16.gmra.mrb[0].mxu0 %v3331
    %v3610 = vpop.f32.mrb[0].mxu0
    %v3611 = vadd.f32 %v3215, %v3610
    %v3612 = vpop.f32.mrb[0].mxu0
    %v3613 = vpop.f32.mrb[0].mxu0
    %v3614 = vadd.f32 %v3215, %v3613
    %v3615 = vpop.f32.mrb[0].mxu0
    %3616 = vmatprep.mubr.bf16.mxu0 0
    %3617 = vmatmul.mubr.bf16.gmra.mrb[0].mxu0 %v3334
    %v3618 = vpop.f32.mrb[0].mxu0
    %v3619 = vadd.f32 %v3215, %v3618
    %v3620 = vpop.f32.mrb[0].mxu0
    %v3621 = vpop.f32.mrb[0].mxu0
    %v3622 = vadd.f32 %v3215, %v3621
    %v3623 = vpop.f32.mrb[0].mxu0
    %3624 = vdwg.mxu0
    %v3625 = vxor.u32 %v3371, 2147483648
    %v3626 = vxor.u32 %v3374, 2147483648
    %v3627 = vxor.u32 %v3379, 2147483648
    %v3628 = vxor.u32 %v3382, 2147483648
    %v3629 = vxor.u32 %v3387, 2147483648
    %v3630 = vxor.u32 %v3390, 2147483648
    %v3631 = vxor.u32 %v3395, 2147483648
    %v3632 = vxor.u32 %v3398, 2147483648
    %v3633 = vxor.u32 %v3403, 2147483648
    %v3634 = vxor.u32 %v3406, 2147483648
    %v3635 = vxor.u32 %v3411, 2147483648
    %v3636 = vxor.u32 %v3414, 2147483648
    %v3637 = vxor.u32 %v3419, 2147483648
    %v3638 = vxor.u32 %v3422, 2147483648
    %v3639 = vxor.u32 %v3427, 2147483648
    %v3640 = vxor.u32 %v3430, 2147483648
    %v3641 = vxor.u32 %v3435, 2147483648
    %v3642 = vxor.u32 %v3438, 2147483648
    %v3643 = vxor.u32 %v3443, 2147483648
    %v3644 = vxor.u32 %v3446, 2147483648
    %v3645 = vxor.u32 %v3451, 2147483648
    %v3646 = vxor.u32 %v3454, 2147483648
    %v3647 = vxor.u32 %v3459, 2147483648
    %v3648 = vxor.u32 %v3462, 2147483648
    %v3649 = vxor.u32 %v3467, 2147483648
    %v3650 = vxor.u32 %v3470, 2147483648
    %v3651 = vxor.u32 %v3475, 2147483648
    %v3652 = vxor.u32 %v3478, 2147483648
    %v3653 = vxor.u32 %v3483, 2147483648
    %v3654 = vxor.u32 %v3486, 2147483648
    %v3655 = vxor.u32 %v3491, 2147483648
    %v3656 = vxor.u32 %v3494, 2147483648
    %v3657 = vxor.u32 %v3499, 2147483648
    %v3658 = vxor.u32 %v3502, 2147483648
    %v3659 = vxor.u32 %v3507, 2147483648
    %v3660 = vxor.u32 %v3510, 2147483648
    %v3661 = vxor.u32 %v3515, 2147483648
    %v3662 = vxor.u32 %v3518, 2147483648
    %v3663 = vxor.u32 %v3523, 2147483648
    %v3664 = vxor.u32 %v3526, 2147483648
    %v3665 = vxor.u32 %v3531, 2147483648
    %v3666 = vxor.u32 %v3534, 2147483648
    %v3667 = vxor.u32 %v3539, 2147483648
    %v3668 = vxor.u32 %v3542, 2147483648
    %v3669 = vxor.u32 %v3547, 2147483648
    %v3670 = vxor.u32 %v3550, 2147483648
    %v3671 = vxor.u32 %v3555, 2147483648
    %v3672 = vxor.u32 %v3558, 2147483648
    %v3673 = vxor.u32 %v3563, 2147483648
    %v3674 = vxor.u32 %v3566, 2147483648
    %v3675 = vxor.u32 %v3571, 2147483648
    %v3676 = vxor.u32 %v3574, 2147483648
    %v3677 = vxor.u32 %v3579, 2147483648
    %v3678 = vxor.u32 %v3582, 2147483648
    %v3679 = vxor.u32 %v3587, 2147483648
    %v3680 = vxor.u32 %v3590, 2147483648
    %v3681 = vxor.u32 %v3595, 2147483648
    %v3682 = vxor.u32 %v3598, 2147483648
    %v3683 = vxor.u32 %v3603, 2147483648
    %v3684 = vxor.u32 %v3606, 2147483648
    %v3685 = vxor.u32 %v3611, 2147483648
    %v3686 = vxor.u32 %v3614, 2147483648
    %v3687 = vxor.u32 %v3619, 2147483648
    %v3688 = vxor.u32 %v3622, 2147483648
    %v3689 = vmul.f32 %v3625, 1.442695
    %v3690 = vpow.pop %v3689
    %v3691 = vmul.f32 %v3626, 1.442695
    %v3692 = vpow.pop %v3691
    %v3693 = vmul.f32 %v3627, 1.442695
    %v3694 = vpow.pop %v3693
    %v3695 = vmul.f32 %v3628, 1.442695
    %v3696 = vpow.pop %v3695
    %v3697 = vmul.f32 %v3629, 1.442695
    %v3698 = vpow.pop %v3697
    %v3699 = vmul.f32 %v3630, 1.442695
    %v3700 = vpow.pop %v3699
    %v3701 = vmul.f32 %v3631, 1.442695
    %v3702 = vpow.pop %v3701
    %v3703 = vmul.f32 %v3632, 1.442695
    %v3704 = vpow.pop %v3703
    %v3705 = vmul.f32 %v3633, 1.442695
    %v3706 = vpow.pop %v3705
    %v3707 = vmul.f32 %v3634, 1.442695
    %v3708 = vpow.pop %v3707
    %v3709 = vmul.f32 %v3635, 1.442695
    %v3710 = vpow.pop %v3709
    %v3711 = vmul.f32 %v3636, 1.442695
    %v3712 = vpow.pop %v3711
    %v3713 = vmul.f32 %v3637, 1.442695
    %v3714 = vpow.pop %v3713
    %v3715 = vmul.f32 %v3638, 1.442695
    %v3716 = vpow.pop %v3715
    %v3717 = vmul.f32 %v3639, 1.442695
    %v3718 = vpow.pop %v3717
    %v3719 = vmul.f32 %v3640, 1.442695
    %v3720 = vpow.pop %v3719
    %v3721 = vmul.f32 %v3641, 1.442695
    %v3722 = vpow.pop %v3721
    %v3723 = vmul.f32 %v3642, 1.442695
    %v3724 = vpow.pop %v3723
    %v3725 = vmul.f32 %v3643, 1.442695
    %v3726 = vpow.pop %v3725
    %v3727 = vmul.f32 %v3644, 1.442695
    %v3728 = vpow.pop %v3727
    %v3729 = vmul.f32 %v3645, 1.442695
    %v3730 = vpow.pop %v3729
    %v3731 = vmul.f32 %v3646, 1.442695
    %v3732 = vpow.pop %v3731
    %v3733 = vmul.f32 %v3647, 1.442695
    %v3734 = vpow.pop %v3733
    %v3735 = vmul.f32 %v3648, 1.442695
    %v3736 = vpow.pop %v3735
    %v3737 = vmul.f32 %v3649, 1.442695
    %v3738 = vpow.pop %v3737
    %v3739 = vmul.f32 %v3650, 1.442695
    %v3740 = vpow.pop %v3739
    %v3741 = vmul.f32 %v3651, 1.442695
    %v3742 = vpow.pop %v3741
    %v3743 = vmul.f32 %v3652, 1.442695
    %v3744 = vpow.pop %v3743
    %v3745 = vmul.f32 %v3653, 1.442695
    %v3746 = vpow.pop %v3745
    %v3747 = vmul.f32 %v3654, 1.442695
    %v3748 = vpow.pop %v3747
    %v3749 = vmul.f32 %v3655, 1.442695
    %v3750 = vpow.pop %v3749
    %v3751 = vmul.f32 %v3656, 1.442695
    %v3752 = vpow.pop %v3751
    %v3753 = vmul.f32 %v3657, 1.442695
    %v3754 = vpow.pop %v3753
    %v3755 = vmul.f32 %v3658, 1.442695
    %v3756 = vpow.pop %v3755
    %v3757 = vmul.f32 %v3659, 1.442695
    %v3758 = vpow.pop %v3757
    %v3759 = vmul.f32 %v3660, 1.442695
    %v3760 = vpow.pop %v3759
    %v3761 = vmul.f32 %v3661, 1.442695
    %v3762 = vpow.pop %v3761
    %v3763 = vmul.f32 %v3662, 1.442695
    %v3764 = vpow.pop %v3763
    %v3765 = vmul.f32 %v3663, 1.442695
    %v3766 = vpow.pop %v3765
    %v3767 = vmul.f32 %v3664, 1.442695
    %v3768 = vpow.pop %v3767
    %v3769 = vmul.f32 %v3665, 1.442695
    %v3770 = vpow.pop %v3769
    %v3771 = vmul.f32 %v3666, 1.442695
    %v3772 = vpow.pop %v3771
    %v3773 = vmul.f32 %v3667, 1.442695
    %v3774 = vpow.pop %v3773
    %v3775 = vmul.f32 %v3668, 1.442695
    %v3776 = vpow.pop %v3775
    %v3777 = vmul.f32 %v3669, 1.442695
    %v3778 = vpow.pop %v3777
    %v3779 = vmul.f32 %v3670, 1.442695
    %v3780 = vpow.pop %v3779
    %v3781 = vmul.f32 %v3671, 1.442695
    %v3782 = vpow.pop %v3781
    %v3783 = vmul.f32 %v3672, 1.442695
    %v3784 = vpow.pop %v3783
    %v3785 = vmul.f32 %v3673, 1.442695
    %v3786 = vpow.pop %v3785
    %v3787 = vmul.f32 %v3674, 1.442695
    %v3788 = vpow.pop %v3787
    %v3789 = vmul.f32 %v3675, 1.442695
    %v3790 = vpow.pop %v3789
    %v3791 = vmul.f32 %v3676, 1.442695
    %v3792 = vpow.pop %v3791
    %v3793 = vmul.f32 %v3677, 1.442695
    %v3794 = vpow.pop %v3793
    %v3795 = vmul.f32 %v3678, 1.442695
    %v3796 = vpow.pop %v3795
    %v3797 = vmul.f32 %v3679, 1.442695
    %v3798 = vpow.pop %v3797
    %v3799 = vmul.f32 %v3680, 1.442695
    %v3800 = vpow.pop %v3799
    %v3801 = vmul.f32 %v3681, 1.442695
    %v3802 = vpow.pop %v3801
    %v3803 = vmul.f32 %v3682, 1.442695
    %v3804 = vpow.pop %v3803
    %v3805 = vmul.f32 %v3683, 1.442695
    %v3806 = vpow.pop %v3805
    %v3807 = vmul.f32 %v3684, 1.442695
    %v3808 = vpow.pop %v3807
    %v3809 = vmul.f32 %v3685, 1.442695
    %v3810 = vpow.pop %v3809
    %v3811 = vmul.f32 %v3686, 1.442695
    %v3812 = vpow.pop %v3811
    %v3813 = vmul.f32 %v3687, 1.442695
    %v3814 = vpow.pop %v3813
    %v3815 = vmul.f32 %v3688, 1.442695
    %v3816 = vpow.pop %v3815
    %v3817 = vadd.f32 %v3690, 1.0
    %v3818 = vadd.f32 %v3692, 1.0
    %v3819 = vadd.f32 %v3694, 1.0
    %v3820 = vadd.f32 %v3696, 1.0
    %v3821 = vadd.f32 %v3698, 1.0
    %v3822 = vadd.f32 %v3700, 1.0
    %v3823 = vadd.f32 %v3702, 1.0
    %v3824 = vadd.f32 %v3704, 1.0
    %v3825 = vadd.f32 %v3706, 1.0
    %v3826 = vadd.f32 %v3708, 1.0
    %v3827 = vadd.f32 %v3710, 1.0
    %v3828 = vadd.f32 %v3712, 1.0
    %v3829 = vadd.f32 %v3714, 1.0
    %v3830 = vadd.f32 %v3716, 1.0
    %v3831 = vadd.f32 %v3718, 1.0
    %v3832 = vadd.f32 %v3720, 1.0
    %v3833 = vadd.f32 %v3722, 1.0
    %v3834 = vadd.f32 %v3724, 1.0
    %v3835 = vadd.f32 %v3726, 1.0
    %v3836 = vadd.f32 %v3728, 1.0
    %v3837 = vadd.f32 %v3730, 1.0
    %v3838 = vadd.f32 %v3732, 1.0
    %v3839 = vadd.f32 %v3734, 1.0
    %v3840 = vadd.f32 %v3736, 1.0
    %v3841 = vadd.f32 %v3738, 1.0
    %v3842 = vadd.f32 %v3740, 1.0
    %v3843 = vadd.f32 %v3742, 1.0
    %v3844 = vadd.f32 %v3744, 1.0
    %v3845 = vadd.f32 %v3746, 1.0
    %v3846 = vadd.f32 %v3748, 1.0
    %v3847 = vadd.f32 %v3750, 1.0
    %v3848 = vadd.f32 %v3752, 1.0
    %v3849 = vadd.f32 %v3754, 1.0
    %v3850 = vadd.f32 %v3756, 1.0
    %v3851 = vadd.f32 %v3758, 1.0
    %v3852 = vadd.f32 %v3760, 1.0
    %v3853 = vadd.f32 %v3762, 1.0
    %v3854 = vadd.f32 %v3764, 1.0
    %v3855 = vadd.f32 %v3766, 1.0
    %v3856 = vadd.f32 %v3768, 1.0
    %v3857 = vadd.f32 %v3770, 1.0
    %v3858 = vadd.f32 %v3772, 1.0
    %v3859 = vadd.f32 %v3774, 1.0
    %v3860 = vadd.f32 %v3776, 1.0
    %v3861 = vadd.f32 %v3778, 1.0
    %v3862 = vadd.f32 %v3780, 1.0
    %v3863 = vadd.f32 %v3782, 1.0
    %v3864 = vadd.f32 %v3784, 1.0
    %v3865 = vadd.f32 %v3786, 1.0
    %v3866 = vadd.f32 %v3788, 1.0
    %v3867 = vadd.f32 %v3790, 1.0
    %v3868 = vadd.f32 %v3792, 1.0
    %v3869 = vadd.f32 %v3794, 1.0
    %v3870 = vadd.f32 %v3796, 1.0
    %v3871 = vadd.f32 %v3798, 1.0
    %v3872 = vadd.f32 %v3800, 1.0
    %v3873 = vadd.f32 %v3802, 1.0
    %v3874 = vadd.f32 %v3804, 1.0
    %v3875 = vadd.f32 %v3806, 1.0
    %v3876 = vadd.f32 %v3808, 1.0
    %v3877 = vadd.f32 %v3810, 1.0
    %v3878 = vadd.f32 %v3812, 1.0
    %v3879 = vadd.f32 %v3814, 1.0
    %v3880 = vadd.f32 %v3816, 1.0
    %v3881 = vrcp.pop %v3817
    %v3882 = vmul.f32 1.0, %v3881
    %v3883 = vrcp.pop %v3818
    %v3884 = vmul.f32 1.0, %v3883
    %v3885 = vrcp.pop %v3819
    %v3886 = vmul.f32 1.0, %v3885
    %v3887 = vrcp.pop %v3820
    %v3888 = vmul.f32 1.0, %v3887
    %v3889 = vrcp.pop %v3821
    %v3890 = vmul.f32 1.0, %v3889
    %v3891 = vrcp.pop %v3822
    %v3892 = vmul.f32 1.0, %v3891
    %v3893 = vrcp.pop %v3823
    %v3894 = vmul.f32 1.0, %v3893
    %v3895 = vrcp.pop %v3824
    %v3896 = vmul.f32 1.0, %v3895
    %v3897 = vrcp.pop %v3825
    %v3898 = vmul.f32 1.0, %v3897
    %v3899 = vrcp.pop %v3826
    %v3900 = vmul.f32 1.0, %v3899
    %v3901 = vrcp.pop %v3827
    %v3902 = vmul.f32 1.0, %v3901
    %v3903 = vrcp.pop %v3828
    %v3904 = vmul.f32 1.0, %v3903
    %v3905 = vrcp.pop %v3829
    %v3906 = vmul.f32 1.0, %v3905
    %v3907 = vrcp.pop %v3830
    %v3908 = vmul.f32 1.0, %v3907
    %v3909 = vrcp.pop %v3831
    %v3910 = vmul.f32 1.0, %v3909
    %v3911 = vrcp.pop %v3832
    %v3912 = vmul.f32 1.0, %v3911
    %v3913 = vrcp.pop %v3833
    %v3914 = vmul.f32 1.0, %v3913
    %v3915 = vrcp.pop %v3834
    %v3916 = vmul.f32 1.0, %v3915
    %v3917 = vrcp.pop %v3835
    %v3918 = vmul.f32 1.0, %v3917
    %v3919 = vrcp.pop %v3836
    %v3920 = vmul.f32 1.0, %v3919
    %v3921 = vrcp.pop %v3837
    %v3922 = vmul.f32 1.0, %v3921
    %v3923 = vrcp.pop %v3838
    %v3924 = vmul.f32 1.0, %v3923
    %v3925 = vrcp.pop %v3839
    %v3926 = vmul.f32 1.0, %v3925
    %v3927 = vrcp.pop %v3840
    %v3928 = vmul.f32 1.0, %v3927
    %v3929 = vrcp.pop %v3841
    %v3930 = vmul.f32 1.0, %v3929
    %v3931 = vrcp.pop %v3842
    %v3932 = vmul.f32 1.0, %v3931
    %v3933 = vrcp.pop %v3843
    %v3934 = vmul.f32 1.0, %v3933
    %v3935 = vrcp.pop %v3844
    %v3936 = vmul.f32 1.0, %v3935
    %v3937 = vrcp.pop %v3845
    %v3938 = vmul.f32 1.0, %v3937
    %v3939 = vrcp.pop %v3846
    %v3940 = vmul.f32 1.0, %v3939
    %v3941 = vrcp.pop %v3847
    %v3942 = vmul.f32 1.0, %v3941
    %v3943 = vrcp.pop %v3848
    %v3944 = vmul.f32 1.0, %v3943
    %v3945 = vrcp.pop %v3849
    %v3946 = vmul.f32 1.0, %v3945
    %v3947 = vrcp.pop %v3850
    %v3948 = vmul.f32 1.0, %v3947
    %v3949 = vrcp.pop %v3851
    %v3950 = vmul.f32 1.0, %v3949
    %v3951 = vrcp.pop %v3852
    %v3952 = vmul.f32 1.0, %v3951
    %v3953 = vrcp.pop %v3853
    %v3954 = vmul.f32 1.0, %v3953
    %v3955 = vrcp.pop %v3854
    %v3956 = vmul.f32 1.0, %v3955
    %v3957 = vrcp.pop %v3855
    %v3958 = vmul.f32 1.0, %v3957
    %v3959 = vrcp.pop %v3856
    %v3960 = vmul.f32 1.0, %v3959
    %v3961 = vrcp.pop %v3857
    %v3962 = vmul.f32 1.0, %v3961
    %v3963 = vrcp.pop %v3858
    %v3964 = vmul.f32 1.0, %v3963
    %v3965 = vrcp.pop %v3859
    %v3966 = vmul.f32 1.0, %v3965
    %v3967 = vrcp.pop %v3860
    %v3968 = vmul.f32 1.0, %v3967
    %v3969 = vrcp.pop %v3861
    %v3970 = vmul.f32 1.0, %v3969
    %v3971 = vrcp.pop %v3862
    %v3972 = vmul.f32 1.0, %v3971
    %v3973 = vrcp.pop %v3863
    %v3974 = vmul.f32 1.0, %v3973
    %v3975 = vrcp.pop %v3864
    %v3976 = vmul.f32 1.0, %v3975
    %v3977 = vrcp.pop %v3865
    %v3978 = vmul.f32 1.0, %v3977
    %v3979 = vrcp.pop %v3866
    %v3980 = vmul.f32 1.0, %v3979
    %v3981 = vrcp.pop %v3867
    %v3982 = vmul.f32 1.0, %v3981
    %v3983 = vrcp.pop %v3868
    %v3984 = vmul.f32 1.0, %v3983
    %v3985 = vrcp.pop %v3869
    %v3986 = vmul.f32 1.0, %v3985
    %v3987 = vrcp.pop %v3870
    %v3988 = vmul.f32 1.0, %v3987
    %v3989 = vrcp.pop %v3871
    %v3990 = vmul.f32 1.0, %v3989
    %v3991 = vrcp.pop %v3872
    %v3992 = vmul.f32 1.0, %v3991
    %v3993 = vrcp.pop %v3873
    %v3994 = vmul.f32 1.0, %v3993
    %v3995 = vrcp.pop %v3874
    %v3996 = vmul.f32 1.0, %v3995
    %v3997 = vrcp.pop %v3875
    %v3998 = vmul.f32 1.0, %v3997
    %v3999 = vrcp.pop %v3876
    %v4000 = vmul.f32 1.0, %v3999
    %v4001 = vrcp.pop %v3877
    %v4002 = vmul.f32 1.0, %v4001
    %v4003 = vrcp.pop %v3878
    %v4004 = vmul.f32 1.0, %v4003
    %v4005 = vrcp.pop %v3879
    %v4006 = vmul.f32 1.0, %v4005
    %v4007 = vrcp.pop %v3880
    %v4008 = vmul.f32 1.0, %v4007
    %4009 = vst [vmem:[#allocation2] sm:$0xff] %v3882
    %4010 = vst [vmem:[#allocation2 + $0x8] sm:$0xff] %v3884
    %4011 = vst [vmem:[#allocation2 + $0x10] sm:$0xff] %v3886
    %4012 = vst [vmem:[#allocation2 + $0x18] sm:$0xff] %v3888
    %4013 = vst [vmem:[#allocation2 + $0x20] sm:$0xff] %v3890
    %4014 = vst [vmem:[#allocation2 + $0x28] sm:$0xff] %v3892
    %4015 = vst [vmem:[#allocation2 + $0x30] sm:$0xff] %v3894
    %4016 = vst [vmem:[#allocation2 + $0x38] sm:$0xff] %v3896
    %4017 = vst [vmem:[#allocation2 + $0x40] sm:$0xff] %v3898
    %4018 = vst [vmem:[#allocation2 + $0x48] sm:$0xff] %v3900
    %4019 = vst [vmem:[#allocation2 + $0x50] sm:$0xff] %v3902
    %4020 = vst [vmem:[#allocation2 + $0x58] sm:$0xff] %v3904
    %4021 = vst [vmem:[#allocation2 + $0x60] sm:$0xff] %v3906
    %4022 = vst [vmem:[#allocation2 + $0x68] sm:$0xff] %v3908
    %4023 = vst [vmem:[#allocation2 + $0x70] sm:$0xff] %v3910
    %4024 = vst [vmem:[#allocation2 + $0x78] sm:$0xff] %v3912
    %4025 = vst [vmem:[#allocation2 + $0x80] sm:$0xff] %v3914
    %4026 = vst [vmem:[#allocation2 + $0x88] sm:$0xff] %v3916
    %4027 = vst [vmem:[#allocation2 + $0x90] sm:$0xff] %v3918
    %4028 = vst [vmem:[#allocation2 + $0x98] sm:$0xff] %v3920
    %4029 = vst [vmem:[#allocation2 + $0xa0] sm:$0xff] %v3922
    %4030 = vst [vmem:[#allocation2 + $0xa8] sm:$0xff] %v3924
    %4031 = vst [vmem:[#allocation2 + $0xb0] sm:$0xff] %v3926
    %4032 = vst [vmem:[#allocation2 + $0xb8] sm:$0xff] %v3928
    %4033 = vst [vmem:[#allocation2 + $0xc0] sm:$0xff] %v3930
    %4034 = vst [vmem:[#allocation2 + $0xc8] sm:$0xff] %v3932
    %4035 = vst [vmem:[#allocation2 + $0xd0] sm:$0xff] %v3934
    %4036 = vst [vmem:[#allocation2 + $0xd8] sm:$0xff] %v3936
    %4037 = vst [vmem:[#allocation2 + $0xe0] sm:$0xff] %v3938
    %4038 = vst [vmem:[#allocation2 + $0xe8] sm:$0xff] %v3940
    %4039 = vst [vmem:[#allocation2 + $0xf0] sm:$0xff] %v3942
    %4040 = vst [vmem:[#allocation2 + $0xf8] sm:$0xff] %v3944
    %4041 = vst [vmem:[#allocation2 + $0x100] sm:$0xff] %v3946
    %4042 = vst [vmem:[#allocation2 + $0x108] sm:$0xff] %v3948
    %4043 = vst [vmem:[#allocation2 + $0x110] sm:$0xff] %v3950
    %4044 = vst [vmem:[#allocation2 + $0x118] sm:$0xff] %v3952
    %4045 = vst [vmem:[#allocation2 + $0x120] sm:$0xff] %v3954
    %4046 = vst [vmem:[#allocation2 + $0x128] sm:$0xff] %v3956
    %4047 = vst [vmem:[#allocation2 + $0x130] sm:$0xff] %v3958
    %4048 = vst [vmem:[#allocation2 + $0x138] sm:$0xff] %v3960
    %4049 = vst [vmem:[#allocation2 + $0x140] sm:$0xff] %v3962
    %4050 = vst [vmem:[#allocation2 + $0x148] sm:$0xff] %v3964
    %4051 = vst [vmem:[#allocation2 + $0x150] sm:$0xff] %v3966
    %4052 = vst [vmem:[#allocation2 + $0x158] sm:$0xff] %v3968
    %4053 = vst [vmem:[#allocation2 + $0x160] sm:$0xff] %v3970
    %4054 = vst [vmem:[#allocation2 + $0x168] sm:$0xff] %v3972
    %4055 = vst [vmem:[#allocation2 + $0x170] sm:$0xff] %v3974
    %4056 = vst [vmem:[#allocation2 + $0x178] sm:$0xff] %v3976
    %4057 = vst [vmem:[#allocation2 + $0x180] sm:$0xff] %v3978
    %4058 = vst [vmem:[#allocation2 + $0x188] sm:$0xff] %v3980
    %4059 = vst [vmem:[#allocation2 + $0x190] sm:$0xff] %v3982
    %4060 = vst [vmem:[#allocation2 + $0x198] sm:$0xff] %v3984
    %4061 = vst [vmem:[#allocation2 + $0x1a0] sm:$0xff] %v3986
    %4062 = vst [vmem:[#allocation2 + $0x1a8] sm:$0xff] %v3988
    %4063 = vst [vmem:[#allocation2 + $0x1b0] sm:$0xff] %v3990
    %4064 = vst [vmem:[#allocation2 + $0x1b8] sm:$0xff] %v3992
    %4065 = vst [vmem:[#allocation2 + $0x1c0] sm:$0xff] %v3994
    %4066 = vst [vmem:[#allocation2 + $0x1c8] sm:$0xff] %v3996
    %4067 = vst [vmem:[#allocation2 + $0x1d0] sm:$0xff] %v3998
    %4068 = vst [vmem:[#allocation2 + $0x1d8] sm:$0xff] %v4000
    %4069 = vst [vmem:[#allocation2 + $0x1e0] sm:$0xff] %v4002
    %4070 = vst [vmem:[#allocation2 + $0x1e8] sm:$0xff] %v4004
    %4071 = vst [vmem:[#allocation2 + $0x1f0] sm:$0xff] %v4006
    %4072 = vst [vmem:[#allocation2 + $0x1f8] sm:$0xff] %v4008
    // Predicated region
    $region22: #{tpu_custom_call.1} parent=1 // pred_check
      _
    $region23: #{tpu_custom_call.1} parent=1 // pred_check_branch
      %4074 = sbr.rel (0) target = $region25
    $region24: #{tpu_custom_call.1} parent=1 // pred_region
      %s4076 = ssub.s32 8192, 8192
      %4077 = vsyncadd [#allocation3], %s4076
      %s4078 = sshll.u32 [#allocation2], 4
      %s4079 = int_to_ptr.vmem [resolvable:$true] %s4078
      %4084 = dma.vmem_to_hbm [thread:$0]  %s4079, 8192, %s5, [#allocation3], 128, 128, 8
    $region25: #{tpu_custom_call.1} parent=1 // pred_fallthru
      _
    // Predicated region
    $region26: #{tpu_custom_call.1} parent=1 // pred_check
      _
    $region27: #{tpu_custom_call.1} parent=1 // pred_check_branch
      %4086 = sbr.rel (0) target = $region29
    $region28: #{tpu_custom_call.1} parent=1 // pred_region
      %4087 = dma.done [#allocation3], 8192
    $region29: #{tpu_custom_call.1} parent=1 // pred_fallthru
      _
    %4088 = vsyncpa [#allocation3], 1

</llo_original>
